<compile_context>
chip_gen: v6e
topology: v6e:2x2x1
jax: 0.10.0
libtpu: 0.0.40
codegen_flags: <defaults>
</compile_context>

<pallas_src>
import functools
import math

import numpy as np

import jax
import jax.numpy as jnp
from jax.experimental import pallas as pl
from jax.experimental.pallas import tpu as pltpu


EPS = 1e-8  # assumed MultichannelLayerNorm eps


# ----------------------------- fused Pallas kernel ---------------------------

def _frame_decoder_kernel(lo, hi, frac, eps,
                          x_ref, s_ref, g_ref, bt_ref,
                          w1_ref, b1_ref, w2_ref, b2_ref,
                          wid_ref, bid_ref, o_ref):
    # Per-batch blocks (pixel-major NHWC inside the kernel):
    #   x_ref : (1, Hin, W, Cin)        s_ref : (1, Hup, W, Co)
    #   g_ref / bt_ref : (Hup, C)       (C = Cin + Co)
    #   w1_ref: (9*C, Co) bf16          w2_ref: (9*Co, Co) bf16
    #   wid_ref: (C, Co)  bf16          b*: (1, Co) f32
    #   o_ref : (1, Co, Hup*W)   lane-dense channel-major output
    _, hin, wd, cin = x_ref.shape
    _, hup, _, co = s_ref.shape

    x = x_ref[0].astype(jnp.float32)          # (Hin, W, Cin)
    s = s_ref[0].astype(jnp.float32)          # (Hup, W, Co)

    # --- bilinear x2 upsample along H (align_corners=True): static 2-tap rows ---
    rows = []
    for u in range(hup):
        f = frac[u]
        rows.append(x[lo[u]:lo[u] + 1] * (1.0 - f) + x[hi[u]:hi[u] + 1] * f)
    up = jnp.concatenate(rows, axis=0)        # (Hup, W, Cin)

    # --- channel concat (lane axis) ---
    cat = jnp.concatenate([up, s], axis=-1)   # (Hup, W, C)

    # --- MultichannelLayerNorm: normalize over H per (w, c); affine per (h, c) ---
    mean = jnp.mean(cat, axis=0, keepdims=True)
    var = jnp.mean(jnp.square(cat - mean), axis=0, keepdims=True)
    nrm = (cat - mean) * jax.lax.rsqrt(var + eps)
    nrm = nrm * g_ref[...][:, None, :] + bt_ref[...][:, None, :]

    # --- helpers: in-kernel zero padding, im2col, bf16 MXU matmul (f32 acc) ---
    def _pad1_hw(t):
        h, w, c = t.shape
        zr = jnp.zeros((1, w, c), t.dtype)
        t = jnp.concatenate([zr, t, zr], axis=0)
        zc = jnp.zeros((h + 2, 1, c), t.dtype)
        return jnp.concatenate([zc, t, zc], axis=1)

    def _im2col3x3(t):
        h, w, c = t.shape
        tp = _pad1_hw(t)
        taps = [tp[dy:dy + h, dx:dx + w, :] for dy in range(3) for dx in range(3)]
        return jnp.concatenate(taps, axis=-1).reshape(h * w, 9 * c)

    def _mm(a, w_val):
        return jnp.dot(a.astype(jnp.bfloat16), w_val,
                       preferred_element_type=jnp.float32)

    # --- conv1 3x3 (C -> Co) as one im2col matmul, fused SquaredReLU ---
    a1 = _mm(_im2col3x3(nrm), w1_ref[...]) + b1_ref[...]        # (Hup*W, Co)
    a1 = jnp.square(jnp.maximum(a1, 0.0))

    # --- conv2 3x3 (Co -> Co) ---
    h2 = _mm(_im2col3x3(a1.reshape(hup, wd, co)), w2_ref[...]) + b2_ref[...]

    # --- identity 1x1 conv on the (pre-norm) concatenated input + residual add ---
    cfull = cin + co
    ident = _mm(cat.reshape(hup * wd, cfull), wid_ref[...]) + bid_ref[...]
    out = ident + h2                          # (Hup*W, Co); dropout == identity (eval)

    # --- store lane-dense, channel-major (Co, Hup*W) ---
    o_ref[0] = jnp.transpose(out, (1, 0)).astype(o_ref.dtype)


# ----------------------------- wrapper ----------------------------------------

def frame_decoder_forward(x, skip, params, *, eps=EPS):
    """x: (B, Cin, Hin, W) NCHW; skip: (B, Co, 2*Hin, W) NCHW. Returns NCHW."""
    B, Cin, Hin, Wd = x.shape
    Bs, Co, Hup, Ws = skip.shape
    assert Bs == B and Ws == Wd and Hup == 2 * Hin
    C = Cin + Co
    HW = Hup * Wd

    # static bilinear taps along H (align_corners=True), computed at trace time
    src = np.arange(Hup, dtype=np.float64) * (Hin - 1) / (Hup - 1)
    lo = np.clip(np.floor(src).astype(np.int64), 0, Hin - 1)
    hi = np.minimum(lo + 1, Hin - 1)
    frac = (src - lo).astype(np.float64)

    # host-side layout prep (once per call, tiny): NCHW -> NHWC inputs,
    # weights repacked for im2col and cast to bf16 for the MXU.
    x_hwc = jnp.transpose(x, (0, 2, 3, 1))                                   # (B,Hin,W,Cin)
    s_hwc = jnp.transpose(skip, (0, 2, 3, 1))                                # (B,Hup,W,Co)
    g_t = jnp.transpose(params['gamma'], (1, 0)).astype(jnp.float32)         # (Hup, C)
    bt_t = jnp.transpose(params['beta'], (1, 0)).astype(jnp.float32)
    w1 = jnp.transpose(params['w1'], (2, 3, 1, 0)).reshape(9 * C, Co).astype(jnp.bfloat16)
    w2 = jnp.transpose(params['w2'], (2, 3, 1, 0)).reshape(9 * Co, Co).astype(jnp.bfloat16)
    wid = jnp.transpose(params['wid'][:, :, 0, 0], (1, 0)).astype(jnp.bfloat16)   # (C, Co)
    b1 = params['b1'].reshape(1, Co).astype(jnp.float32)
    b2 = params['b2'].reshape(1, Co).astype(jnp.float32)
    bid = params['bid'].reshape(1, Co).astype(jnp.float32)

    kern = functools.partial(
        _frame_decoder_kernel,
        tuple(int(v) for v in lo), tuple(int(v) for v in hi),
        tuple(float(v) for v in frac), float(eps))

    out = pl.pallas_call(
        kern,
        grid=(B,),
        in_specs=[
            pl.BlockSpec((1, Hin, Wd, Cin), lambda i: (i, 0, 0, 0)),
            pl.BlockSpec((1, Hup, Wd, Co), lambda i: (i, 0, 0, 0)),
            pl.BlockSpec((Hup, C), lambda i: (0, 0)),
            pl.BlockSpec((Hup, C), lambda i: (0, 0)),
            pl.BlockSpec((9 * C, Co), lambda i: (0, 0)),
            pl.BlockSpec((1, Co), lambda i: (0, 0)),
            pl.BlockSpec((9 * Co, Co), lambda i: (0, 0)),
            pl.BlockSpec((1, Co), lambda i: (0, 0)),
            pl.BlockSpec((C, Co), lambda i: (0, 0)),
            pl.BlockSpec((1, Co), lambda i: (0, 0)),
        ],
        out_specs=pl.BlockSpec((1, Co, HW), lambda i: (i, 0, 0)),
        out_shape=jax.ShapeDtypeStruct((B, Co, HW), jnp.float32),
        compiler_params=pltpu.CompilerParams(dimension_semantics=("parallel",)),
    )(x_hwc, s_hwc, g_t, bt_t, w1, b1, w2, b2, wid, bid)

    return out.reshape(B, Co, Hup, Wd)        # free contiguous reshape to NCHW


# ----------------------------- parameters -------------------------------------

def init_params(key, in_channels, out_channels, features):
    C, Co = in_channels + out_channels, out_channels
    ks = jax.random.split(key, 8)

    def conv_w(k, co, ci, kh, kw):
        bound = 1.0 / math.sqrt(ci * kh * kw)
        return jax.random.uniform(k, (co, ci, kh, kw), jnp.float32, -bound, bound)

    def conv_b(k, co, fan_in):
        bound = 1.0 / math.sqrt(fan_in)
        return jax.random.uniform(k, (co,), jnp.float32, -bound, bound)

    return {
        # MultichannelLayerNorm affine: PyTorch shape (C, 1, features) -> stored (C, features)
        'gamma': 1.0 + 0.1 * jax.random.normal(ks[0], (C, features), jnp.float32),
        'beta': 0.1 * jax.random.normal(ks[1], (C, features), jnp.float32),
        'w1': conv_w(ks[2], Co, C, 3, 3), 'b1': conv_b(ks[3], Co, 9 * C),
        'w2': conv_w(ks[4], Co, Co, 3, 3), 'b2': conv_b(ks[5], Co, 9 * Co),
        'wid': conv_w(ks[6], Co, C, 1, 1), 'bid': conv_b(ks[7], Co, C),
    }


# ----------------------------- pure-JAX reference -----------------------------

def _reference_forward(x, skip, params, *, eps=EPS):
    B, Cin, Hin, Wd = x.shape
    _, Co, Hup, _ = skip.shape
    src = np.arange(Hup, dtype=np.float64) * (Hin - 1) / (Hup - 1)
    lo = np.clip(np.floor(src).astype(np.int32), 0, Hin - 1)
    hi = np.minimum(lo + 1, Hin - 1)
    frac = jnp.asarray((src - lo).astype(np.float32))

    up = (x[:, :, lo, :] * (1.0 - frac)[None, None, :, None]
          + x[:, :, hi, :] * frac[None, None, :, None])
    cat = jnp.concatenate([up, skip], axis=1)                       # (B, C, Hup, W)

    mean = jnp.mean(cat, axis=2, keepdims=True)
    var = jnp.mean(jnp.square(cat - mean), axis=2, keepdims=True)
    nrm = (cat - mean) * jax.lax.rsqrt(var + eps)
    nrm = nrm * params['gamma'][None, :, :, None] + params['beta'][None, :, :, None]

    def conv3x3(t, w, b):
        y = jax.lax.conv_general_dilated(
            t, w, window_strides=(1, 1), padding='SAME',
            dimension_numbers=('NCHW', 'OIHW', 'NCHW'),
            precision=jax.lax.Precision.HIGHEST)
        return y + b[None, :, None, None]

    a = conv3x3(nrm, params['w1'], params['b1'])
    a = jnp.square(jnp.maximum(a, 0.0))
    h2 = conv3x3(a, params['w2'], params['b2'])
    ident = jnp.einsum('oc,bchw->bohw', params['wid'][:, :, 0, 0], cat,
                       precision=jax.lax.Precision.HIGHEST)
    ident = ident + params['bid'][None, :, None, None]
    return ident + h2


# ----------------------------- main --------------------------------------------

if __name__ == "__main__":
    key = jax.random.PRNGKey(0)
    k_x, k_s, k_p = jax.random.split(key, 3)

    B, Cin, Co = 2, 4, 8
    Hin, Wd = 8, 24
    Hup = 2 * Hin                       # == `features` of the ResBlock norm
    x = jax.random.normal(k_x, (B, Cin, Hin, Wd), jnp.float32)
    skip = jax.random.normal(k_s, (B, Co, Hup, Wd), jnp.float32)
    params = init_params(k_p, Cin, Co, Hup)

    fwd = jax.jit(frame_decoder_forward)
    out = fwd(x, skip, params)
    out = jax.block_until_ready(out)

    ref = jax.block_until_ready(_reference_forward(x, skip, params))

    assert out.shape == (B, Co, Hup, Wd)
    assert bool(jnp.all(jnp.isfinite(out)))
    max_err = float(jnp.max(jnp.abs(out - ref)))
    mean_err = float(jnp.mean(jnp.abs(out - ref)))
    # bf16 MXU inputs (f32 accumulation) vs f32 reference -> small numeric slack
    assert max_err < 1e-1 and mean_err < 1.5e-2, (max_err, mean_err)
    print("KERNEL_OK")
</pallas_src>

<mosaic_0001>
module attributes {stable_mosaic.version = 11 : i64} {
  func.func @_frame_decoder_kernel(%arg0: i32, %arg1: memref<1x8x24x4xf32, #tpu.memory_space<vmem>>, %arg2: memref<1x16x24x8xf32, #tpu.memory_space<vmem>>, %arg3: memref<16x12xf32, #tpu.memory_space<vmem>>, %arg4: memref<16x12xf32, #tpu.memory_space<vmem>>, %arg5: memref<108x8xbf16, #tpu.memory_space<vmem>>, %arg6: memref<1x8xf32, #tpu.memory_space<vmem>>, %arg7: memref<72x8xbf16, #tpu.memory_space<vmem>>, %arg8: memref<1x8xf32, #tpu.memory_space<vmem>>, %arg9: memref<12x8xbf16, #tpu.memory_space<vmem>>, %arg10: memref<1x8xf32, #tpu.memory_space<vmem>>, %arg11: memref<1x8x384xf32, #tpu.memory_space<vmem>>) attributes {dimension_semantics = [#tpu.dimension_semantics<parallel>], iteration_bounds = array<i64: 2>, scalar_prefetch = 0 : i64, scratch_operands = 0 : i64, tpu.core_type = #tpu.core_type<tc>, window_params = [{transform_indices = @transform_0, window_bounds = array<i64: 1, 8, 24, 4>}, {transform_indices = @transform_1, window_bounds = array<i64: 1, 16, 24, 8>}, {pipeline_mode = #tpu.pipeline_mode<synchronous>, transform_indices = @transform_2, window_bounds = array<i64: 16, 12>}, {pipeline_mode = #tpu.pipeline_mode<synchronous>, transform_indices = @transform_3, window_bounds = array<i64: 16, 12>}, {pipeline_mode = #tpu.pipeline_mode<synchronous>, transform_indices = @transform_4, window_bounds = array<i64: 108, 8>}, {pipeline_mode = #tpu.pipeline_mode<synchronous>, transform_indices = @transform_5, window_bounds = array<i64: 1, 8>}, {pipeline_mode = #tpu.pipeline_mode<synchronous>, transform_indices = @transform_6, window_bounds = array<i64: 72, 8>}, {pipeline_mode = #tpu.pipeline_mode<synchronous>, transform_indices = @transform_7, window_bounds = array<i64: 1, 8>}, {pipeline_mode = #tpu.pipeline_mode<synchronous>, transform_indices = @transform_8, window_bounds = array<i64: 12, 8>}, {pipeline_mode = #tpu.pipeline_mode<synchronous>, transform_indices = @transform_9, window_bounds = array<i64: 1, 8>}, {transform_indices = @transform_10, window_bounds = array<i64: 1, 8, 384>}]} {
    %c0 = arith.constant 0 : index
    %c0_0 = arith.constant 0 : index
    %c0_1 = arith.constant 0 : index
    %c0_2 = arith.constant 0 : index
    %0 = vector.load %arg1[%c0, %c0_0, %c0_1, %c0_2] : memref<1x8x24x4xf32, #tpu.memory_space<vmem>>, vector<1x8x24x4xf32>
    %1 = vector.shape_cast %0 : vector<1x8x24x4xf32> to vector<8x24x4xf32>
    %c0_3 = arith.constant 0 : index
    %c0_4 = arith.constant 0 : index
    %c0_5 = arith.constant 0 : index
    %c0_6 = arith.constant 0 : index
    %2 = vector.load %arg2[%c0_3, %c0_4, %c0_5, %c0_6] : memref<1x16x24x8xf32, #tpu.memory_space<vmem>>, vector<1x16x24x8xf32>
    %3 = vector.shape_cast %2 : vector<1x16x24x8xf32> to vector<16x24x8xf32>
    %4 = vector.extract_strided_slice %1 {offsets = [0, 0, 0], sizes = [1, 24, 4], strides = [1, 1, 1]} : vector<8x24x4xf32> to vector<1x24x4xf32>
    %cst = arith.constant 1.000000e+00 : f32
    %5 = vector.broadcast %cst : f32 to vector<1x24x4xf32>
    %6 = arith.mulf %4, %5 : vector<1x24x4xf32>
    %7 = vector.extract_strided_slice %1 {offsets = [1, 0, 0], sizes = [1, 24, 4], strides = [1, 1, 1]} : vector<8x24x4xf32> to vector<1x24x4xf32>
    %cst_7 = arith.constant 0.000000e+00 : f32
    %8 = vector.broadcast %cst_7 : f32 to vector<1x24x4xf32>
    %9 = arith.mulf %7, %8 : vector<1x24x4xf32>
    %10 = arith.addf %6, %9 : vector<1x24x4xf32>
    %11 = vector.extract_strided_slice %1 {offsets = [0, 0, 0], sizes = [1, 24, 4], strides = [1, 1, 1]} : vector<8x24x4xf32> to vector<1x24x4xf32>
    %cst_8 = arith.constant 0.533333361 : f32
    %12 = vector.broadcast %cst_8 : f32 to vector<1x24x4xf32>
    %13 = arith.mulf %11, %12 : vector<1x24x4xf32>
    %14 = vector.extract_strided_slice %1 {offsets = [1, 0, 0], sizes = [1, 24, 4], strides = [1, 1, 1]} : vector<8x24x4xf32> to vector<1x24x4xf32>
    %cst_9 = arith.constant 0.466666669 : f32
    %15 = vector.broadcast %cst_9 : f32 to vector<1x24x4xf32>
    %16 = arith.mulf %14, %15 : vector<1x24x4xf32>
    %17 = arith.addf %13, %16 : vector<1x24x4xf32>
    %18 = vector.extract_strided_slice %1 {offsets = [0, 0, 0], sizes = [1, 24, 4], strides = [1, 1, 1]} : vector<8x24x4xf32> to vector<1x24x4xf32>
    %cst_10 = arith.constant 0.0666666701 : f32
    %19 = vector.broadcast %cst_10 : f32 to vector<1x24x4xf32>
    %20 = arith.mulf %18, %19 : vector<1x24x4xf32>
    %21 = vector.extract_strided_slice %1 {offsets = [1, 0, 0], sizes = [1, 24, 4], strides = [1, 1, 1]} : vector<8x24x4xf32> to vector<1x24x4xf32>
    %cst_11 = arith.constant 0.933333337 : f32
    %22 = vector.broadcast %cst_11 : f32 to vector<1x24x4xf32>
    %23 = arith.mulf %21, %22 : vector<1x24x4xf32>
    %24 = arith.addf %20, %23 : vector<1x24x4xf32>
    %25 = vector.extract_strided_slice %1 {offsets = [1, 0, 0], sizes = [1, 24, 4], strides = [1, 1, 1]} : vector<8x24x4xf32> to vector<1x24x4xf32>
    %cst_12 = arith.constant 6.000000e-01 : f32
    %26 = vector.broadcast %cst_12 : f32 to vector<1x24x4xf32>
    %27 = arith.mulf %25, %26 : vector<1x24x4xf32>
    %28 = vector.extract_strided_slice %1 {offsets = [2, 0, 0], sizes = [1, 24, 4], strides = [1, 1, 1]} : vector<8x24x4xf32> to vector<1x24x4xf32>
    %cst_13 = arith.constant 4.000000e-01 : f32
    %29 = vector.broadcast %cst_13 : f32 to vector<1x24x4xf32>
    %30 = arith.mulf %28, %29 : vector<1x24x4xf32>
    %31 = arith.addf %27, %30 : vector<1x24x4xf32>
    %32 = vector.extract_strided_slice %1 {offsets = [1, 0, 0], sizes = [1, 24, 4], strides = [1, 1, 1]} : vector<8x24x4xf32> to vector<1x24x4xf32>
    %cst_14 = arith.constant 0.13333334 : f32
    %33 = vector.broadcast %cst_14 : f32 to vector<1x24x4xf32>
    %34 = arith.mulf %32, %33 : vector<1x24x4xf32>
    %35 = vector.extract_strided_slice %1 {offsets = [2, 0, 0], sizes = [1, 24, 4], strides = [1, 1, 1]} : vector<8x24x4xf32> to vector<1x24x4xf32>
    %cst_15 = arith.constant 0.866666674 : f32
    %36 = vector.broadcast %cst_15 : f32 to vector<1x24x4xf32>
    %37 = arith.mulf %35, %36 : vector<1x24x4xf32>
    %38 = arith.addf %34, %37 : vector<1x24x4xf32>
    %39 = vector.extract_strided_slice %1 {offsets = [2, 0, 0], sizes = [1, 24, 4], strides = [1, 1, 1]} : vector<8x24x4xf32> to vector<1x24x4xf32>
    %cst_16 = arith.constant 0.666666686 : f32
    %40 = vector.broadcast %cst_16 : f32 to vector<1x24x4xf32>
    %41 = arith.mulf %39, %40 : vector<1x24x4xf32>
    %42 = vector.extract_strided_slice %1 {offsets = [3, 0, 0], sizes = [1, 24, 4], strides = [1, 1, 1]} : vector<8x24x4xf32> to vector<1x24x4xf32>
    %cst_17 = arith.constant 0.333333343 : f32
    %43 = vector.broadcast %cst_17 : f32 to vector<1x24x4xf32>
    %44 = arith.mulf %42, %43 : vector<1x24x4xf32>
    %45 = arith.addf %41, %44 : vector<1x24x4xf32>
    %46 = vector.extract_strided_slice %1 {offsets = [2, 0, 0], sizes = [1, 24, 4], strides = [1, 1, 1]} : vector<8x24x4xf32> to vector<1x24x4xf32>
    %cst_18 = arith.constant 2.000000e-01 : f32
    %47 = vector.broadcast %cst_18 : f32 to vector<1x24x4xf32>
    %48 = arith.mulf %46, %47 : vector<1x24x4xf32>
    %49 = vector.extract_strided_slice %1 {offsets = [3, 0, 0], sizes = [1, 24, 4], strides = [1, 1, 1]} : vector<8x24x4xf32> to vector<1x24x4xf32>
    %cst_19 = arith.constant 8.000000e-01 : f32
    %50 = vector.broadcast %cst_19 : f32 to vector<1x24x4xf32>
    %51 = arith.mulf %49, %50 : vector<1x24x4xf32>
    %52 = arith.addf %48, %51 : vector<1x24x4xf32>
    %53 = vector.extract_strided_slice %1 {offsets = [3, 0, 0], sizes = [1, 24, 4], strides = [1, 1, 1]} : vector<8x24x4xf32> to vector<1x24x4xf32>
    %cst_20 = arith.constant 0.733333349 : f32
    %54 = vector.broadcast %cst_20 : f32 to vector<1x24x4xf32>
    %55 = arith.mulf %53, %54 : vector<1x24x4xf32>
    %56 = vector.extract_strided_slice %1 {offsets = [4, 0, 0], sizes = [1, 24, 4], strides = [1, 1, 1]} : vector<8x24x4xf32> to vector<1x24x4xf32>
    %cst_21 = arith.constant 0.266666681 : f32
    %57 = vector.broadcast %cst_21 : f32 to vector<1x24x4xf32>
    %58 = arith.mulf %56, %57 : vector<1x24x4xf32>
    %59 = arith.addf %55, %58 : vector<1x24x4xf32>
    %60 = vector.extract_strided_slice %1 {offsets = [3, 0, 0], sizes = [1, 24, 4], strides = [1, 1, 1]} : vector<8x24x4xf32> to vector<1x24x4xf32>
    %cst_22 = arith.constant 0.266666681 : f32
    %61 = vector.broadcast %cst_22 : f32 to vector<1x24x4xf32>
    %62 = arith.mulf %60, %61 : vector<1x24x4xf32>
    %63 = vector.extract_strided_slice %1 {offsets = [4, 0, 0], sizes = [1, 24, 4], strides = [1, 1, 1]} : vector<8x24x4xf32> to vector<1x24x4xf32>
    %cst_23 = arith.constant 0.733333349 : f32
    %64 = vector.broadcast %cst_23 : f32 to vector<1x24x4xf32>
    %65 = arith.mulf %63, %64 : vector<1x24x4xf32>
    %66 = arith.addf %62, %65 : vector<1x24x4xf32>
    %67 = vector.extract_strided_slice %1 {offsets = [4, 0, 0], sizes = [1, 24, 4], strides = [1, 1, 1]} : vector<8x24x4xf32> to vector<1x24x4xf32>
    %cst_24 = arith.constant 8.000000e-01 : f32
    %68 = vector.broadcast %cst_24 : f32 to vector<1x24x4xf32>
    %69 = arith.mulf %67, %68 : vector<1x24x4xf32>
    %70 = vector.extract_strided_slice %1 {offsets = [5, 0, 0], sizes = [1, 24, 4], strides = [1, 1, 1]} : vector<8x24x4xf32> to vector<1x24x4xf32>
    %cst_25 = arith.constant 2.000000e-01 : f32
    %71 = vector.broadcast %cst_25 : f32 to vector<1x24x4xf32>
    %72 = arith.mulf %70, %71 : vector<1x24x4xf32>
    %73 = arith.addf %69, %72 : vector<1x24x4xf32>
    %74 = vector.extract_strided_slice %1 {offsets = [4, 0, 0], sizes = [1, 24, 4], strides = [1, 1, 1]} : vector<8x24x4xf32> to vector<1x24x4xf32>
    %cst_26 = arith.constant 0.333333343 : f32
    %75 = vector.broadcast %cst_26 : f32 to vector<1x24x4xf32>
    %76 = arith.mulf %74, %75 : vector<1x24x4xf32>
    %77 = vector.extract_strided_slice %1 {offsets = [5, 0, 0], sizes = [1, 24, 4], strides = [1, 1, 1]} : vector<8x24x4xf32> to vector<1x24x4xf32>
    %cst_27 = arith.constant 0.666666686 : f32
    %78 = vector.broadcast %cst_27 : f32 to vector<1x24x4xf32>
    %79 = arith.mulf %77, %78 : vector<1x24x4xf32>
    %80 = arith.addf %76, %79 : vector<1x24x4xf32>
    %81 = vector.extract_strided_slice %1 {offsets = [5, 0, 0], sizes = [1, 24, 4], strides = [1, 1, 1]} : vector<8x24x4xf32> to vector<1x24x4xf32>
    %cst_28 = arith.constant 0.866666674 : f32
    %82 = vector.broadcast %cst_28 : f32 to vector<1x24x4xf32>
    %83 = arith.mulf %81, %82 : vector<1x24x4xf32>
    %84 = vector.extract_strided_slice %1 {offsets = [6, 0, 0], sizes = [1, 24, 4], strides = [1, 1, 1]} : vector<8x24x4xf32> to vector<1x24x4xf32>
    %cst_29 = arith.constant 0.13333334 : f32
    %85 = vector.broadcast %cst_29 : f32 to vector<1x24x4xf32>
    %86 = arith.mulf %84, %85 : vector<1x24x4xf32>
    %87 = arith.addf %83, %86 : vector<1x24x4xf32>
    %88 = vector.extract_strided_slice %1 {offsets = [5, 0, 0], sizes = [1, 24, 4], strides = [1, 1, 1]} : vector<8x24x4xf32> to vector<1x24x4xf32>
    %cst_30 = arith.constant 4.000000e-01 : f32
    %89 = vector.broadcast %cst_30 : f32 to vector<1x24x4xf32>
    %90 = arith.mulf %88, %89 : vector<1x24x4xf32>
    %91 = vector.extract_strided_slice %1 {offsets = [6, 0, 0], sizes = [1, 24, 4], strides = [1, 1, 1]} : vector<8x24x4xf32> to vector<1x24x4xf32>
    %cst_31 = arith.constant 6.000000e-01 : f32
    %92 = vector.broadcast %cst_31 : f32 to vector<1x24x4xf32>
    %93 = arith.mulf %91, %92 : vector<1x24x4xf32>
    %94 = arith.addf %90, %93 : vector<1x24x4xf32>
    %95 = vector.extract_strided_slice %1 {offsets = [6, 0, 0], sizes = [1, 24, 4], strides = [1, 1, 1]} : vector<8x24x4xf32> to vector<1x24x4xf32>
    %cst_32 = arith.constant 0.933333337 : f32
    %96 = vector.broadcast %cst_32 : f32 to vector<1x24x4xf32>
    %97 = arith.mulf %95, %96 : vector<1x24x4xf32>
    %98 = vector.extract_strided_slice %1 {offsets = [7, 0, 0], sizes = [1, 24, 4], strides = [1, 1, 1]} : vector<8x24x4xf32> to vector<1x24x4xf32>
    %cst_33 = arith.constant 0.0666666701 : f32
    %99 = vector.broadcast %cst_33 : f32 to vector<1x24x4xf32>
    %100 = arith.mulf %98, %99 : vector<1x24x4xf32>
    %101 = arith.addf %97, %100 : vector<1x24x4xf32>
    %102 = vector.extract_strided_slice %1 {offsets = [6, 0, 0], sizes = [1, 24, 4], strides = [1, 1, 1]} : vector<8x24x4xf32> to vector<1x24x4xf32>
    %cst_34 = arith.constant 0.466666669 : f32
    %103 = vector.broadcast %cst_34 : f32 to vector<1x24x4xf32>
    %104 = arith.mulf %102, %103 : vector<1x24x4xf32>
    %105 = vector.extract_strided_slice %1 {offsets = [7, 0, 0], sizes = [1, 24, 4], strides = [1, 1, 1]} : vector<8x24x4xf32> to vector<1x24x4xf32>
    %cst_35 = arith.constant 0.533333361 : f32
    %106 = vector.broadcast %cst_35 : f32 to vector<1x24x4xf32>
    %107 = arith.mulf %105, %106 : vector<1x24x4xf32>
    %108 = arith.addf %104, %107 : vector<1x24x4xf32>
    %109 = vector.extract_strided_slice %1 {offsets = [7, 0, 0], sizes = [1, 24, 4], strides = [1, 1, 1]} : vector<8x24x4xf32> to vector<1x24x4xf32>
    %cst_36 = arith.constant 1.000000e+00 : f32
    %110 = vector.broadcast %cst_36 : f32 to vector<1x24x4xf32>
    %111 = arith.mulf %109, %110 : vector<1x24x4xf32>
    %112 = vector.extract_strided_slice %1 {offsets = [7, 0, 0], sizes = [1, 24, 4], strides = [1, 1, 1]} : vector<8x24x4xf32> to vector<1x24x4xf32>
    %cst_37 = arith.constant 0.000000e+00 : f32
    %113 = vector.broadcast %cst_37 : f32 to vector<1x24x4xf32>
    %114 = arith.mulf %112, %113 : vector<1x24x4xf32>
    %115 = arith.addf %111, %114 : vector<1x24x4xf32>
    %116 = tpu.concatenate %10, %17, %24, %31, %38, %45, %52, %59, %66, %73, %80, %87, %94, %101, %108, %115 in 0 : vector<1x24x4xf32>, vector<1x24x4xf32>, vector<1x24x4xf32>, vector<1x24x4xf32>, vector<1x24x4xf32>, vector<1x24x4xf32>, vector<1x24x4xf32>, vector<1x24x4xf32>, vector<1x24x4xf32>, vector<1x24x4xf32>, vector<1x24x4xf32>, vector<1x24x4xf32>, vector<1x24x4xf32>, vector<1x24x4xf32>, vector<1x24x4xf32>, vector<1x24x4xf32> -> vector<16x24x4xf32>
    %117 = tpu.concatenate %116, %3 in 2 : vector<16x24x4xf32>, vector<16x24x8xf32> -> vector<16x24x12xf32>
    %cst_38 = arith.constant dense<0.000000e+00> : vector<24x12xf32>
    %118 = vector.multi_reduction <add>, %117, %cst_38 [0] : vector<16x24x12xf32> to vector<24x12xf32>
    %119 = vector.shape_cast %118 : vector<24x12xf32> to vector<1x24x12xf32>
    %cst_39 = arith.constant 1.600000e+01 : f32
    %120 = vector.broadcast %cst_39 : f32 to vector<1x24x12xf32>
    %121 = arith.divf %119, %120 : vector<1x24x12xf32>
    %122 = vector.broadcast %121 : vector<1x24x12xf32> to vector<16x24x12xf32>
    %123 = arith.subf %117, %122 : vector<16x24x12xf32>
    %124 = arith.mulf %123, %123 : vector<16x24x12xf32>
    %cst_40 = arith.constant dense<0.000000e+00> : vector<24x12xf32>
    %125 = vector.multi_reduction <add>, %124, %cst_40 [0] : vector<16x24x12xf32> to vector<24x12xf32>
    %126 = vector.shape_cast %125 : vector<24x12xf32> to vector<1x24x12xf32>
    %cst_41 = arith.constant 1.600000e+01 : f32
    %127 = vector.broadcast %cst_41 : f32 to vector<1x24x12xf32>
    %128 = arith.divf %126, %127 : vector<1x24x12xf32>
    %129 = vector.broadcast %121 : vector<1x24x12xf32> to vector<16x24x12xf32>
    %130 = arith.subf %117, %129 : vector<16x24x12xf32>
    %cst_42 = arith.constant 9.99999993E-9 : f32
    %131 = vector.broadcast %cst_42 : f32 to vector<1x24x12xf32>
    %132 = arith.addf %128, %131 : vector<1x24x12xf32>
    %133 = math.rsqrt %132 : vector<1x24x12xf32>
    %134 = vector.broadcast %133 : vector<1x24x12xf32> to vector<16x24x12xf32>
    %135 = arith.mulf %130, %134 : vector<16x24x12xf32>
    %c0_43 = arith.constant 0 : index
    %c0_44 = arith.constant 0 : index
    %136 = vector.load %arg3[%c0_43, %c0_44] : memref<16x12xf32, #tpu.memory_space<vmem>>, vector<16x12xf32>
    %137 = vector.shape_cast %136 : vector<16x12xf32> to vector<16x1x12xf32>
    %138 = vector.broadcast %137 : vector<16x1x12xf32> to vector<16x24x12xf32>
    %139 = arith.mulf %135, %138 : vector<16x24x12xf32>
    %c0_45 = arith.constant 0 : index
    %c0_46 = arith.constant 0 : index
    %140 = vector.load %arg4[%c0_45, %c0_46] : memref<16x12xf32, #tpu.memory_space<vmem>>, vector<16x12xf32>
    %141 = vector.shape_cast %140 : vector<16x12xf32> to vector<16x1x12xf32>
    %142 = vector.broadcast %141 : vector<16x1x12xf32> to vector<16x24x12xf32>
    %143 = arith.addf %139, %142 : vector<16x24x12xf32>
    %cst_47 = arith.constant 0.000000e+00 : f32
    %144 = vector.broadcast %cst_47 : f32 to vector<1x24x12xf32>
    %145 = tpu.concatenate %144, %143, %144 in 0 : vector<1x24x12xf32>, vector<16x24x12xf32>, vector<1x24x12xf32> -> vector<18x24x12xf32>
    %cst_48 = arith.constant 0.000000e+00 : f32
    %146 = vector.broadcast %cst_48 : f32 to vector<18x1x12xf32>
    %147 = tpu.concatenate %146, %145, %146 in 1 : vector<18x1x12xf32>, vector<18x24x12xf32>, vector<18x1x12xf32> -> vector<18x26x12xf32>
    %148 = vector.extract_strided_slice %147 {offsets = [0, 0, 0], sizes = [16, 24, 12], strides = [1, 1, 1]} : vector<18x26x12xf32> to vector<16x24x12xf32>
    %149 = vector.extract_strided_slice %147 {offsets = [0, 1, 0], sizes = [16, 24, 12], strides = [1, 1, 1]} : vector<18x26x12xf32> to vector<16x24x12xf32>
    %150 = vector.extract_strided_slice %147 {offsets = [0, 2, 0], sizes = [16, 24, 12], strides = [1, 1, 1]} : vector<18x26x12xf32> to vector<16x24x12xf32>
    %151 = vector.extract_strided_slice %147 {offsets = [1, 0, 0], sizes = [16, 24, 12], strides = [1, 1, 1]} : vector<18x26x12xf32> to vector<16x24x12xf32>
    %152 = vector.extract_strided_slice %147 {offsets = [1, 1, 0], sizes = [16, 24, 12], strides = [1, 1, 1]} : vector<18x26x12xf32> to vector<16x24x12xf32>
    %153 = vector.extract_strided_slice %147 {offsets = [1, 2, 0], sizes = [16, 24, 12], strides = [1, 1, 1]} : vector<18x26x12xf32> to vector<16x24x12xf32>
    %154 = vector.extract_strided_slice %147 {offsets = [2, 0, 0], sizes = [16, 24, 12], strides = [1, 1, 1]} : vector<18x26x12xf32> to vector<16x24x12xf32>
    %155 = vector.extract_strided_slice %147 {offsets = [2, 1, 0], sizes = [16, 24, 12], strides = [1, 1, 1]} : vector<18x26x12xf32> to vector<16x24x12xf32>
    %156 = vector.extract_strided_slice %147 {offsets = [2, 2, 0], sizes = [16, 24, 12], strides = [1, 1, 1]} : vector<18x26x12xf32> to vector<16x24x12xf32>
    %157 = tpu.concatenate %148, %149, %150, %151, %152, %153, %154, %155, %156 in 2 : vector<16x24x12xf32>, vector<16x24x12xf32>, vector<16x24x12xf32>, vector<16x24x12xf32>, vector<16x24x12xf32>, vector<16x24x12xf32>, vector<16x24x12xf32>, vector<16x24x12xf32>, vector<16x24x12xf32> -> vector<16x24x108xf32>
    %158 = vector.shape_cast %157 : vector<16x24x108xf32> to vector<384x108xf32>
    %c0_49 = arith.constant 0 : index
    %c0_50 = arith.constant 0 : index
    %159 = vector.load %arg5[%c0_49, %c0_50] : memref<108x8xbf16, #tpu.memory_space<vmem>>, vector<108x8xbf16>
    %160 = arith.truncf %158 : vector<384x108xf32> to vector<384x108xbf16>
    %cst_51 = arith.constant dense<0.000000e+00> : vector<384x8xf32>
    %161 = tpu.matmul %160, %159, %cst_51 {dimension_numbers = #tpu.dot_dimension_numbers<[1], [0], [0], [1], [0, 0, 1, 1], [], []>} : vector<384x108xbf16>, vector<108x8xbf16>, vector<384x8xf32> -> vector<384x8xf32>
    %c0_52 = arith.constant 0 : index
    %c0_53 = arith.constant 0 : index
    %162 = vector.load %arg6[%c0_52, %c0_53] : memref<1x8xf32, #tpu.memory_space<vmem>>, vector<1x8xf32>
    %163 = vector.broadcast %162 : vector<1x8xf32> to vector<384x8xf32>
    %164 = arith.addf %161, %163 : vector<384x8xf32>
    %cst_54 = arith.constant 0.000000e+00 : f32
    %165 = vector.broadcast %cst_54 : f32 to vector<384x8xf32>
    %166 = arith.maximumf %164, %165 : vector<384x8xf32>
    %167 = arith.mulf %166, %166 : vector<384x8xf32>
    %168 = vector.shape_cast %167 : vector<384x8xf32> to vector<16x24x8xf32>
    %cst_55 = arith.constant 0.000000e+00 : f32
    %169 = vector.broadcast %cst_55 : f32 to vector<1x24x8xf32>
    %170 = tpu.concatenate %169, %168, %169 in 0 : vector<1x24x8xf32>, vector<16x24x8xf32>, vector<1x24x8xf32> -> vector<18x24x8xf32>
    %cst_56 = arith.constant 0.000000e+00 : f32
    %171 = vector.broadcast %cst_56 : f32 to vector<18x1x8xf32>
    %172 = tpu.concatenate %171, %170, %171 in 1 : vector<18x1x8xf32>, vector<18x24x8xf32>, vector<18x1x8xf32> -> vector<18x26x8xf32>
    %173 = vector.extract_strided_slice %172 {offsets = [0, 0, 0], sizes = [16, 24, 8], strides = [1, 1, 1]} : vector<18x26x8xf32> to vector<16x24x8xf32>
    %174 = vector.extract_strided_slice %172 {offsets = [0, 1, 0], sizes = [16, 24, 8], strides = [1, 1, 1]} : vector<18x26x8xf32> to vector<16x24x8xf32>
    %175 = vector.extract_strided_slice %172 {offsets = [0, 2, 0], sizes = [16, 24, 8], strides = [1, 1, 1]} : vector<18x26x8xf32> to vector<16x24x8xf32>
    %176 = vector.extract_strided_slice %172 {offsets = [1, 0, 0], sizes = [16, 24, 8], strides = [1, 1, 1]} : vector<18x26x8xf32> to vector<16x24x8xf32>
    %177 = vector.extract_strided_slice %172 {offsets = [1, 1, 0], sizes = [16, 24, 8], strides = [1, 1, 1]} : vector<18x26x8xf32> to vector<16x24x8xf32>
    %178 = vector.extract_strided_slice %172 {offsets = [1, 2, 0], sizes = [16, 24, 8], strides = [1, 1, 1]} : vector<18x26x8xf32> to vector<16x24x8xf32>
    %179 = vector.extract_strided_slice %172 {offsets = [2, 0, 0], sizes = [16, 24, 8], strides = [1, 1, 1]} : vector<18x26x8xf32> to vector<16x24x8xf32>
    %180 = vector.extract_strided_slice %172 {offsets = [2, 1, 0], sizes = [16, 24, 8], strides = [1, 1, 1]} : vector<18x26x8xf32> to vector<16x24x8xf32>
    %181 = vector.extract_strided_slice %172 {offsets = [2, 2, 0], sizes = [16, 24, 8], strides = [1, 1, 1]} : vector<18x26x8xf32> to vector<16x24x8xf32>
    %182 = tpu.concatenate %173, %174, %175, %176, %177, %178, %179, %180, %181 in 2 : vector<16x24x8xf32>, vector<16x24x8xf32>, vector<16x24x8xf32>, vector<16x24x8xf32>, vector<16x24x8xf32>, vector<16x24x8xf32>, vector<16x24x8xf32>, vector<16x24x8xf32>, vector<16x24x8xf32> -> vector<16x24x72xf32>
    %183 = vector.shape_cast %182 : vector<16x24x72xf32> to vector<384x72xf32>
    %c0_57 = arith.constant 0 : index
    %c0_58 = arith.constant 0 : index
    %184 = vector.load %arg7[%c0_57, %c0_58] : memref<72x8xbf16, #tpu.memory_space<vmem>>, vector<72x8xbf16>
    %185 = arith.truncf %183 : vector<384x72xf32> to vector<384x72xbf16>
    %cst_59 = arith.constant dense<0.000000e+00> : vector<384x8xf32>
    %186 = tpu.matmul %185, %184, %cst_59 {dimension_numbers = #tpu.dot_dimension_numbers<[1], [0], [0], [1], [0, 0, 1, 1], [], []>} : vector<384x72xbf16>, vector<72x8xbf16>, vector<384x8xf32> -> vector<384x8xf32>
    %c0_60 = arith.constant 0 : index
    %c0_61 = arith.constant 0 : index
    %187 = vector.load %arg8[%c0_60, %c0_61] : memref<1x8xf32, #tpu.memory_space<vmem>>, vector<1x8xf32>
    %188 = vector.broadcast %187 : vector<1x8xf32> to vector<384x8xf32>
    %189 = arith.addf %186, %188 : vector<384x8xf32>
    %190 = vector.shape_cast %117 : vector<16x24x12xf32> to vector<384x12xf32>
    %c0_62 = arith.constant 0 : index
    %c0_63 = arith.constant 0 : index
    %191 = vector.load %arg9[%c0_62, %c0_63] : memref<12x8xbf16, #tpu.memory_space<vmem>>, vector<12x8xbf16>
    %192 = arith.truncf %190 : vector<384x12xf32> to vector<384x12xbf16>
    %cst_64 = arith.constant dense<0.000000e+00> : vector<384x8xf32>
    %193 = tpu.matmul %192, %191, %cst_64 {dimension_numbers = #tpu.dot_dimension_numbers<[1], [0], [0], [1], [0, 0, 1, 1], [], []>} : vector<384x12xbf16>, vector<12x8xbf16>, vector<384x8xf32> -> vector<384x8xf32>
    %c0_65 = arith.constant 0 : index
    %c0_66 = arith.constant 0 : index
    %194 = vector.load %arg10[%c0_65, %c0_66] : memref<1x8xf32, #tpu.memory_space<vmem>>, vector<1x8xf32>
    %195 = vector.broadcast %194 : vector<1x8xf32> to vector<384x8xf32>
    %196 = arith.addf %193, %195 : vector<384x8xf32>
    %197 = arith.addf %196, %189 : vector<384x8xf32>
    %198 = tpu.transpose %197, [1, 0] : vector<384x8xf32> -> vector<8x384xf32>
    %c0_67 = arith.constant 0 : index
    %c0_68 = arith.constant 0 : index
    %c0_69 = arith.constant 0 : index
    %199 = vector.load %arg11[%c0_67, %c0_68, %c0_69] : memref<1x8x384xf32, #tpu.memory_space<vmem>>, vector<1x8x384xf32>
    %200 = vector.shape_cast %199 : vector<1x8x384xf32> to vector<8x384xf32>
    %201 = vector.shape_cast %198 : vector<8x384xf32> to vector<1x8x384xf32>
    tpu.vector_store %arg11[%c0_67, %c0_68, %c0_69], %201 {strides = array<i32>} : memref<1x8x384xf32, #tpu.memory_space<vmem>>, vector<1x8x384xf32>,
    return
  }
  func.func @transform_0(%arg0: i32) -> (i32, i32, i32, i32) {
    %c0_i32 = arith.constant 0 : i32
    %c0_i32_0 = arith.constant 0 : i32
    %c0_i32_1 = arith.constant 0 : i32
    %c0_i32_2 = arith.constant 0 : i32
    return %arg0, %c0_i32, %c0_i32_0, %c0_i32_1 : i32, i32, i32, i32
  }
  func.func @transform_1(%arg0: i32) -> (i32, i32, i32, i32) {
    %c0_i32 = arith.constant 0 : i32
    %c0_i32_0 = arith.constant 0 : i32
    %c0_i32_1 = arith.constant 0 : i32
    %c0_i32_2 = arith.constant 0 : i32
    return %arg0, %c0_i32, %c0_i32_0, %c0_i32_1 : i32, i32, i32, i32
  }
  func.func @transform_2(%arg0: i32) -> (i32, i32) {
    %c0_i32 = arith.constant 0 : i32
    %c0_i32_0 = arith.constant 0 : i32
    %c0_i32_1 = arith.constant 0 : i32
    return %c0_i32, %c0_i32_0 : i32, i32
  }
  func.func @transform_3(%arg0: i32) -> (i32, i32) {
    %c0_i32 = arith.constant 0 : i32
    %c0_i32_0 = arith.constant 0 : i32
    %c0_i32_1 = arith.constant 0 : i32
    return %c0_i32, %c0_i32_0 : i32, i32
  }
  func.func @transform_4(%arg0: i32) -> (i32, i32) {
    %c0_i32 = arith.constant 0 : i32
    %c0_i32_0 = arith.constant 0 : i32
    %c0_i32_1 = arith.constant 0 : i32
    return %c0_i32, %c0_i32_0 : i32, i32
  }
  func.func @transform_5(%arg0: i32) -> (i32, i32) {
    %c0_i32 = arith.constant 0 : i32
    %c0_i32_0 = arith.constant 0 : i32
    %c0_i32_1 = arith.constant 0 : i32
    return %c0_i32, %c0_i32_0 : i32, i32
  }
  func.func @transform_6(%arg0: i32) -> (i32, i32) {
    %c0_i32 = arith.constant 0 : i32
    %c0_i32_0 = arith.constant 0 : i32
    %c0_i32_1 = arith.constant 0 : i32
    return %c0_i32, %c0_i32_0 : i32, i32
  }
  func.func @transform_7(%arg0: i32) -> (i32, i32) {
    %c0_i32 = arith.constant 0 : i32
    %c0_i32_0 = arith.constant 0 : i32
    %c0_i32_1 = arith.constant 0 : i32
    return %c0_i32, %c0_i32_0 : i32, i32
  }
  func.func @transform_8(%arg0: i32) -> (i32, i32) {
    %c0_i32 = arith.constant 0 : i32
    %c0_i32_0 = arith.constant 0 : i32
    %c0_i32_1 = arith.constant 0 : i32
    return %c0_i32, %c0_i32_0 : i32, i32
  }
  func.func @transform_9(%arg0: i32) -> (i32, i32) {
    %c0_i32 = arith.constant 0 : i32
    %c0_i32_0 = arith.constant 0 : i32
    %c0_i32_1 = arith.constant 0 : i32
    return %c0_i32, %c0_i32_0 : i32, i32
  }
  func.func @transform_10(%arg0: i32) -> (i32, i32, i32) {
    %c0_i32 = arith.constant 0 : i32
    %c0_i32_0 = arith.constant 0 : i32
    %c0_i32_1 = arith.constant 0 : i32
    return %arg0, %c0_i32, %c0_i32_0 : i32, i32, i32
  }
}

</mosaic_0001>

<llo_original>
// kernel: frame_decoder_forward.1
$region0: #{frame_decoder_forward.1}
  #allocation0 [shape = 'u32[]', space=smem, size = 0x4, offset = 0x4, fixed_abs, tag = 'smem constant byte address 0x4 - core index']
  #allocation1 [shape = 'u32[144,128]{1,0:T(1,128)}', space=vmem, size = 0x12000, scoped, tag = 'internal scratch']
  %s0 = inlined_call_operand.vmem [shape: f32[2,8,24,4], index: 0, kind: input, shape index: {}]
  %s1 = inlined_call_operand.vmem [shape: f32[2,16,24,8], index: 1, kind: input, shape index: {}]
  %s2 = inlined_call_operand.vmem [shape: f32[16,12], index: 2, kind: input, shape index: {}]
  %s3 = inlined_call_operand.vmem [shape: f32[16,12], index: 3, kind: input, shape index: {}]
  %s4 = inlined_call_operand.vmem [shape: bf16[108,8], index: 4, kind: input, shape index: {}]
  %s5 = inlined_call_operand.vmem [shape: f32[1,8], index: 5, kind: input, shape index: {}]
  %s6 = inlined_call_operand.vmem [shape: bf16[72,8], index: 6, kind: input, shape index: {}]
  %s7 = inlined_call_operand.vmem [shape: f32[1,8], index: 7, kind: input, shape index: {}]
  %s8 = inlined_call_operand.vmem [shape: bf16[12,8], index: 8, kind: input, shape index: {}]
  %s9 = inlined_call_operand.vmem [shape: f32[1,8], index: 9, kind: input, shape index: {}]
  %s10 = inlined_call_operand.vmem [shape: f32[2,8,384], index: 10, kind: output, shape index: {}]
  %s11 = sld [smem:[#allocation0]]
  $region73: #{frame_decoder_forward.1} parent=0
    _
  %s13 = ssub.s32 1, %s11
  %s14 = scalar_select 0, %s13, %s11
  loop: start=0, step=1, limit=4
  $region2: #{frame_decoder_forward.1} parent=0 // loop_pre_header
    _
  $region3: #{frame_decoder_forward.1} parent=0 // loop_header
    %s16 = sphi 0, %s20
    %p17 = scmp.ge.s32.totalorder %s16, 4
    %s26 = sphi 0, %s28
    %s29 = sphi 0, %s26
    %s30 = sphi 0, %s29
    %s46 = sphi 0, %s30
    %s52 = sphi 0, %s54
    %s55 = sphi 0, %s52
    %s56 = sphi 0, %s55
    %s72 = sphi 0, %s56
    %s76 = sphi 0, %s76
    %s78 = sphi 0, %s76
    %s79 = sphi 0, %s78
    %s93 = sphi 0, %s79
    %s97 = sphi 0, %s97
    %s99 = sphi 0, %s97
    %s100 = sphi 0, %s99
    %s114 = sphi 0, %s100
    %s118 = sphi 0, %s118
    %s120 = sphi 0, %s118
    %s121 = sphi 0, %s120
    %s135 = sphi 0, %s121
    %s139 = sphi 0, %s139
    %s141 = sphi 0, %s139
    %s142 = sphi 0, %s141
    %s156 = sphi 0, %s142
    %s160 = sphi 0, %s160
    %s162 = sphi 0, %s160
    %s163 = sphi 0, %s162
    %s177 = sphi 0, %s163
    %s181 = sphi 0, %s181
    %s183 = sphi 0, %s181
    %s184 = sphi 0, %s183
    %s198 = sphi 0, %s184
    %s202 = sphi 0, %s202
    %s204 = sphi 0, %s202
    %s205 = sphi 0, %s204
    %s219 = sphi 0, %s205
    %s223 = sphi 0, %s223
    %s225 = sphi 0, %s223
    %s226 = sphi 0, %s225
    %s240 = sphi 0, %s226
    %s246 = sphi 0, %s248
    %s249 = sphi 0, %s246
    %s250 = sphi 0, %s249
    %s266 = sphi 0, %s250
  $region4: #{frame_decoder_forward.1} parent=0 // loop_header_branch
    %19 = sbr.rel (%p17) target = $region8
  $region5: #{frame_decoder_forward.1} parent=0 // loop_body
    %s21 = ssub.s32 %s16, 1
    %s22 = ssub.s32 %s16, 2
    %s23 = sadd.s32 %s16, 1
    %s24 = ssub.s32 %s16, %s23
    %p25 = scmp.eq.s32.totalorder %s24, 0
    %s27 = sadd.s32 %s26, 1
    %s28 = scalar_select %p25, %s26, %s27
    %p31 = pneg %p25
    %p32 = scmp.eq.s32.totalorder %s16, 1
    %p33 = por %p31, %p32
    %p34 = scmp.ne.s32.totalorder %s26, %s29
    %p35 = scmp.eq.s32.totalorder %s16, 0
    %p36 = por %p34, %p35
    %p37 = scmp.ne.s32.totalorder %s26, %s29
    %p38 = scmp.eq.s32.totalorder %s21, 1
    %p39 = por %p37, %p38
    %p40 = scmp.ne.s32.totalorder %s29, %s30
    %p41 = scmp.eq.s32.totalorder %s21, 0
    %p42 = por %p40, %p41
    %p43 = scmp.ne.s32.totalorder %s29, %s30
    %p44 = scmp.eq.s32.totalorder %s22, 1
    %p45 = por %p43, %p44
    %p47 = scmp.ne.s32.totalorder %s30, %s46
    %p48 = scmp.eq.s32.totalorder %s22, 0
    %p49 = por %p47, %p48
    %s50 = ssub.s32 %s16, %s23
    %p51 = scmp.eq.s32.totalorder %s50, 0
    %s53 = sadd.s32 %s52, 1
    %s54 = scalar_select %p51, %s52, %s53
    %p57 = pneg %p51
    %p58 = scmp.eq.s32.totalorder %s16, 1
    %p59 = por %p57, %p58
    %p60 = scmp.ne.s32.totalorder %s52, %s55
    %p61 = scmp.eq.s32.totalorder %s16, 0
    %p62 = por %p60, %p61
    %p63 = scmp.ne.s32.totalorder %s52, %s55
    %p64 = scmp.eq.s32.totalorder %s21, 1
    %p65 = por %p63, %p64
    %p66 = scmp.ne.s32.totalorder %s55, %s56
    %p67 = scmp.eq.s32.totalorder %s21, 0
    %p68 = por %p66, %p67
    %p69 = scmp.ne.s32.totalorder %s55, %s56
    %p70 = scmp.eq.s32.totalorder %s22, 1
    %p71 = por %p69, %p70
    %p73 = scmp.ne.s32.totalorder %s56, %s72
    %p74 = scmp.eq.s32.totalorder %s22, 0
    %p75 = por %p73, %p74
    %s77 = sadd.s32 %s76, 1
    %p80 = scmp.eq.s32.totalorder %s16, 1
    %p81 = scmp.ne.s32.totalorder %s76, %s78
    %p82 = scmp.eq.s32.totalorder %s16, 0
    %p83 = por %p81, %p82
    %p84 = scmp.ne.s32.totalorder %s76, %s78
    %p85 = scmp.eq.s32.totalorder %s21, 1
    %p86 = por %p84, %p85
    %p87 = scmp.ne.s32.totalorder %s78, %s79
    %p88 = scmp.eq.s32.totalorder %s21, 0
    %p89 = por %p87, %p88
    %p90 = scmp.ne.s32.totalorder %s78, %s79
    %p91 = scmp.eq.s32.totalorder %s22, 1
    %p92 = por %p90, %p91
    %p94 = scmp.ne.s32.totalorder %s79, %s93
    %p95 = scmp.eq.s32.totalorder %s22, 0
    %p96 = por %p94, %p95
    %s98 = sadd.s32 %s97, 1
    %p101 = scmp.eq.s32.totalorder %s16, 1
    %p102 = scmp.ne.s32.totalorder %s97, %s99
    %p103 = scmp.eq.s32.totalorder %s16, 0
    %p104 = por %p102, %p103
    %p105 = scmp.ne.s32.totalorder %s97, %s99
    %p106 = scmp.eq.s32.totalorder %s21, 1
    %p107 = por %p105, %p106
    %p108 = scmp.ne.s32.totalorder %s99, %s100
    %p109 = scmp.eq.s32.totalorder %s21, 0
    %p110 = por %p108, %p109
    %p111 = scmp.ne.s32.totalorder %s99, %s100
    %p112 = scmp.eq.s32.totalorder %s22, 1
    %p113 = por %p111, %p112
    %p115 = scmp.ne.s32.totalorder %s100, %s114
    %p116 = scmp.eq.s32.totalorder %s22, 0
    %p117 = por %p115, %p116
    %s119 = sadd.s32 %s118, 1
    %p122 = scmp.eq.s32.totalorder %s16, 1
    %p123 = scmp.ne.s32.totalorder %s118, %s120
    %p124 = scmp.eq.s32.totalorder %s16, 0
    %p125 = por %p123, %p124
    %p126 = scmp.ne.s32.totalorder %s118, %s120
    %p127 = scmp.eq.s32.totalorder %s21, 1
    %p128 = por %p126, %p127
    %p129 = scmp.ne.s32.totalorder %s120, %s121
    %p130 = scmp.eq.s32.totalorder %s21, 0
    %p131 = por %p129, %p130
    %p132 = scmp.ne.s32.totalorder %s120, %s121
    %p133 = scmp.eq.s32.totalorder %s22, 1
    %p134 = por %p132, %p133
    %p136 = scmp.ne.s32.totalorder %s121, %s135
    %p137 = scmp.eq.s32.totalorder %s22, 0
    %p138 = por %p136, %p137
    %s140 = sadd.s32 %s139, 1
    %p143 = scmp.eq.s32.totalorder %s16, 1
    %p144 = scmp.ne.s32.totalorder %s139, %s141
    %p145 = scmp.eq.s32.totalorder %s16, 0
    %p146 = por %p144, %p145
    %p147 = scmp.ne.s32.totalorder %s139, %s141
    %p148 = scmp.eq.s32.totalorder %s21, 1
    %p149 = por %p147, %p148
    %p150 = scmp.ne.s32.totalorder %s141, %s142
    %p151 = scmp.eq.s32.totalorder %s21, 0
    %p152 = por %p150, %p151
    %p153 = scmp.ne.s32.totalorder %s141, %s142
    %p154 = scmp.eq.s32.totalorder %s22, 1
    %p155 = por %p153, %p154
    %p157 = scmp.ne.s32.totalorder %s142, %s156
    %p158 = scmp.eq.s32.totalorder %s22, 0
    %p159 = por %p157, %p158
    %s161 = sadd.s32 %s160, 1
    %p164 = scmp.eq.s32.totalorder %s16, 1
    %p165 = scmp.ne.s32.totalorder %s160, %s162
    %p166 = scmp.eq.s32.totalorder %s16, 0
    %p167 = por %p165, %p166
    %p168 = scmp.ne.s32.totalorder %s160, %s162
    %p169 = scmp.eq.s32.totalorder %s21, 1
    %p170 = por %p168, %p169
    %p171 = scmp.ne.s32.totalorder %s162, %s163
    %p172 = scmp.eq.s32.totalorder %s21, 0
    %p173 = por %p171, %p172
    %p174 = scmp.ne.s32.totalorder %s162, %s163
    %p175 = scmp.eq.s32.totalorder %s22, 1
    %p176 = por %p174, %p175
    %p178 = scmp.ne.s32.totalorder %s163, %s177
    %p179 = scmp.eq.s32.totalorder %s22, 0
    %p180 = por %p178, %p179
    %s182 = sadd.s32 %s181, 1
    %p185 = scmp.eq.s32.totalorder %s16, 1
    %p186 = scmp.ne.s32.totalorder %s181, %s183
    %p187 = scmp.eq.s32.totalorder %s16, 0
    %p188 = por %p186, %p187
    %p189 = scmp.ne.s32.totalorder %s181, %s183
    %p190 = scmp.eq.s32.totalorder %s21, 1
    %p191 = por %p189, %p190
    %p192 = scmp.ne.s32.totalorder %s183, %s184
    %p193 = scmp.eq.s32.totalorder %s21, 0
    %p194 = por %p192, %p193
    %p195 = scmp.ne.s32.totalorder %s183, %s184
    %p196 = scmp.eq.s32.totalorder %s22, 1
    %p197 = por %p195, %p196
    %p199 = scmp.ne.s32.totalorder %s184, %s198
    %p200 = scmp.eq.s32.totalorder %s22, 0
    %p201 = por %p199, %p200
    %s203 = sadd.s32 %s202, 1
    %p206 = scmp.eq.s32.totalorder %s16, 1
    %p207 = scmp.ne.s32.totalorder %s202, %s204
    %p208 = scmp.eq.s32.totalorder %s16, 0
    %p209 = por %p207, %p208
    %p210 = scmp.ne.s32.totalorder %s202, %s204
    %p211 = scmp.eq.s32.totalorder %s21, 1
    %p212 = por %p210, %p211
    %p213 = scmp.ne.s32.totalorder %s204, %s205
    %p214 = scmp.eq.s32.totalorder %s21, 0
    %p215 = por %p213, %p214
    %p216 = scmp.ne.s32.totalorder %s204, %s205
    %p217 = scmp.eq.s32.totalorder %s22, 1
    %p218 = por %p216, %p217
    %p220 = scmp.ne.s32.totalorder %s205, %s219
    %p221 = scmp.eq.s32.totalorder %s22, 0
    %p222 = por %p220, %p221
    %s224 = sadd.s32 %s223, 1
    %p227 = scmp.eq.s32.totalorder %s16, 1
    %p228 = scmp.ne.s32.totalorder %s223, %s225
    %p229 = scmp.eq.s32.totalorder %s16, 0
    %p230 = por %p228, %p229
    %p231 = scmp.ne.s32.totalorder %s223, %s225
    %p232 = scmp.eq.s32.totalorder %s21, 1
    %p233 = por %p231, %p232
    %p234 = scmp.ne.s32.totalorder %s225, %s226
    %p235 = scmp.eq.s32.totalorder %s21, 0
    %p236 = por %p234, %p235
    %p237 = scmp.ne.s32.totalorder %s225, %s226
    %p238 = scmp.eq.s32.totalorder %s22, 1
    %p239 = por %p237, %p238
    %p241 = scmp.ne.s32.totalorder %s226, %s240
    %p242 = scmp.eq.s32.totalorder %s22, 0
    %p243 = por %p241, %p242
    %s244 = ssub.s32 %s16, %s23
    %p245 = scmp.eq.s32.totalorder %s244, 0
    %s247 = sadd.s32 %s246, 1
    %s248 = scalar_select %p245, %s246, %s247
    %p251 = pneg %p245
    %p252 = scmp.eq.s32.totalorder %s16, 1
    %p253 = por %p251, %p252
    %p254 = scmp.ne.s32.totalorder %s246, %s249
    %p255 = scmp.eq.s32.totalorder %s16, 0
    %p256 = por %p254, %p255
    %p257 = scmp.ne.s32.totalorder %s246, %s249
    %p258 = scmp.eq.s32.totalorder %s21, 1
    %p259 = por %p257, %p258
    %p260 = scmp.ne.s32.totalorder %s249, %s250
    %p261 = scmp.eq.s32.totalorder %s21, 0
    %p262 = por %p260, %p261
    %p263 = scmp.ne.s32.totalorder %s249, %s250
    %p264 = scmp.eq.s32.totalorder %s22, 1
    %p265 = por %p263, %p264
    %p267 = scmp.ne.s32.totalorder %s250, %s266
    %p268 = scmp.eq.s32.totalorder %s22, 0
    %p269 = por %p267, %p268
    %p270 = scmp.le.s32.totalorder 1, %s16
    %p271 = scmp.lt.s32.totalorder %s16, 3
    %p272 = pnand %p270, %p271
    %p273 = pneg %p272
    // Predicated region
    $region9: #{frame_decoder_forward.1} parent=5 // pred_check
      _
    $region10: #{frame_decoder_forward.1} parent=5 // pred_check_branch
      %275 = sbr.rel (%p272) target = $region12
    $region11: #{frame_decoder_forward.1} parent=5 // pred_region
      %s276 = ssub.s32 %s16, 1
      // Predicated region
      $region13: #{frame_decoder_forward.1} parent=11 // pred_check
        %p277 = pneg %p89
      $region14: #{frame_decoder_forward.1} parent=11 // pred_check_branch
        %279 = sbr.rel (%p277) target = $region16
      $region15: #{frame_decoder_forward.1} parent=11 // pred_region
        _
      $region16: #{frame_decoder_forward.1} parent=11 // pred_fallthru
        _
      // Predicated region
      $region17: #{frame_decoder_forward.1} parent=11 // pred_check
        %p280 = pneg %p110
      $region18: #{frame_decoder_forward.1} parent=11 // pred_check_branch
        %282 = sbr.rel (%p280) target = $region20
      $region19: #{frame_decoder_forward.1} parent=11 // pred_region
        _
      $region20: #{frame_decoder_forward.1} parent=11 // pred_fallthru
        _
      // Predicated region
      $region21: #{frame_decoder_forward.1} parent=11 // pred_check
        %p283 = pneg %p131
      $region22: #{frame_decoder_forward.1} parent=11 // pred_check_branch
        %285 = sbr.rel (%p283) target = $region24
      $region23: #{frame_decoder_forward.1} parent=11 // pred_region
        _
      $region24: #{frame_decoder_forward.1} parent=11 // pred_fallthru
        _
      // Predicated region
      $region25: #{frame_decoder_forward.1} parent=11 // pred_check
        %p286 = pneg %p152
      $region26: #{frame_decoder_forward.1} parent=11 // pred_check_branch
        %288 = sbr.rel (%p286) target = $region28
      $region27: #{frame_decoder_forward.1} parent=11 // pred_region
        _
      $region28: #{frame_decoder_forward.1} parent=11 // pred_fallthru
        _
      // Predicated region
      $region29: #{frame_decoder_forward.1} parent=11 // pred_check
        %p289 = pneg %p173
      $region30: #{frame_decoder_forward.1} parent=11 // pred_check_branch
        %291 = sbr.rel (%p289) target = $region32
      $region31: #{frame_decoder_forward.1} parent=11 // pred_region
        _
      $region32: #{frame_decoder_forward.1} parent=11 // pred_fallthru
        _
      // Predicated region
      $region33: #{frame_decoder_forward.1} parent=11 // pred_check
        %p292 = pneg %p194
      $region34: #{frame_decoder_forward.1} parent=11 // pred_check_branch
        %294 = sbr.rel (%p292) target = $region36
      $region35: #{frame_decoder_forward.1} parent=11 // pred_region
        _
      $region36: #{frame_decoder_forward.1} parent=11 // pred_fallthru
        _
      // Predicated region
      $region37: #{frame_decoder_forward.1} parent=11 // pred_check
        %p295 = pneg %p215
      $region38: #{frame_decoder_forward.1} parent=11 // pred_check_branch
        %297 = sbr.rel (%p295) target = $region40
      $region39: #{frame_decoder_forward.1} parent=11 // pred_region
        _
      $region40: #{frame_decoder_forward.1} parent=11 // pred_fallthru
        _
      // Predicated region
      $region41: #{frame_decoder_forward.1} parent=11 // pred_check
        %p298 = pneg %p236
      $region42: #{frame_decoder_forward.1} parent=11 // pred_check_branch
        %300 = sbr.rel (%p298) target = $region44
      $region43: #{frame_decoder_forward.1} parent=11 // pred_region
        _
      $region44: #{frame_decoder_forward.1} parent=11 // pred_fallthru
        _
    $region12: #{frame_decoder_forward.1} parent=5 // pred_fallthru
      _
    %p301 = scmp.lt.s32.totalorder %s16, 2
    // Predicated region
    $region45: #{frame_decoder_forward.1} parent=5 // pred_check
      %p302 = pneg %p301
    $region46: #{frame_decoder_forward.1} parent=5 // pred_check_branch
      %304 = sbr.rel (%p302) target = $region48
    $region47: #{frame_decoder_forward.1} parent=5 // pred_region
      // Predicated region
      $region49: #{frame_decoder_forward.1} parent=47 // pred_check
        %p305 = pneg %p36
      $region50: #{frame_decoder_forward.1} parent=47 // pred_check_branch
        %307 = sbr.rel (%p305) target = $region52
      $region51: #{frame_decoder_forward.1} parent=47 // pred_region
        %p308 = scmp.lt.s32.totalorder %s16, 1
        %s309 = scalar_select %p308, %s16, 1
        %s310 = smul.addr %s309, 24
        %s311 = smul.addr %s310, 8
        %s312 = scalar_lea.vmem %s0, %s311
      $region52: #{frame_decoder_forward.1} parent=47 // pred_fallthru
        _
      // Predicated region
      $region53: #{frame_decoder_forward.1} parent=47 // pred_check
        %p313 = pneg %p62
      $region54: #{frame_decoder_forward.1} parent=47 // pred_check_branch
        %315 = sbr.rel (%p313) target = $region56
      $region55: #{frame_decoder_forward.1} parent=47 // pred_region
        %p316 = scmp.lt.s32.totalorder %s16, 1
        %s317 = scalar_select %p316, %s16, 1
        %s318 = smul.addr %s317, 48
        %s319 = smul.addr %s318, 8
        %s320 = scalar_lea.vmem %s1, %s319
      $region56: #{frame_decoder_forward.1} parent=47 // pred_fallthru
        _
    $region48: #{frame_decoder_forward.1} parent=5 // pred_fallthru
      _
    %p321 = scmp.le.s32.totalorder 1, %s16
    %p322 = scmp.lt.s32.totalorder %s16, 3
    %p323 = pnand %p321, %p322
    %p324 = pneg %p323
    // Predicated region
    $region57: #{frame_decoder_forward.1} parent=5 // pred_check
      _
    $region58: #{frame_decoder_forward.1} parent=5 // pred_check_branch
      %326 = sbr.rel (%p323) target = $region60
    $region59: #{frame_decoder_forward.1} parent=5 // pred_region
      %s327 = ssub.s32 %s16, 1
      %p328 = scmp.lt.s32.totalorder %s21, 1
      %s329 = scalar_select %p328, %s21, 1
      %s330 = smul.addr %s329, 24
      %s331 = smul.addr %s330, 8
      %s332 = scalar_lea.vmem %s0, %s331
      %p333 = pneg %p42
      %p334 = pneg %p39
      %p335 = scmp.lt.s32.totalorder %s21, 1
      %s336 = scalar_select %p335, %s21, 1
      %s337 = smul.addr %s336, 48
      %s338 = smul.addr %s337, 8
      %s339 = scalar_lea.vmem %s1, %s338
      %p340 = pneg %p68
      %p341 = pneg %p65
      %p342 = pneg %p89
      %p343 = pneg %p86
      %p344 = pneg %p110
      %p345 = pneg %p107
      %p346 = pneg %p131
      %p347 = pneg %p128
      %p348 = pneg %p152
      %p349 = pneg %p149
      %p350 = pneg %p173
      %p351 = pneg %p170
      %p352 = pneg %p194
      %p353 = pneg %p191
      %p354 = pneg %p215
      %p355 = pneg %p212
      %p356 = pneg %p236
      %p357 = pneg %p233
      %p358 = pneg %p262
      %p359 = pneg %p259
      %p360 = scmp.lt.s32.totalorder %s21, 1
      %s361 = scalar_select %p360, %s21, 1
      %s362 = smul.addr %s361, 3
      %s363 = smul.addr %s362, 8
      %s364 = scalar_lea.vmem %s10, %s363
      %p365 = scmp.lt.s32.totalorder %s21, 1
      %s366 = scalar_select %p365, %s21, 1
      %s367 = smul.addr %s366, 24
      %s368 = smul.addr %s367, 8
      %s369 = scalar_lea.vmem %s0, %s368
      %p370 = scmp.lt.s32.totalorder %s21, 1
      %s371 = scalar_select %p370, %s21, 1
      %s372 = smul.addr %s371, 48
      %s373 = smul.addr %s372, 8
      %s374 = scalar_lea.vmem %s1, %s373
      %p375 = scmp.lt.s32.totalorder %s21, 1
      %s376 = scalar_select %p375, %s21, 1
      %s377 = smul.addr %s376, 3
      %s378 = smul.addr %s377, 8
      %s379 = scalar_lea.vmem %s10, %s378
      %v381 = vld [vmem:[%s369] sm:$0xff]
      %v382 = vld [vmem:[%s369 + $0x8] sm:$0xff]
      %v383 = vld [vmem:[%s369 + $0x10] sm:$0xff]
      %v384 = vld [vmem:[%s369 + $0x18] sm:$0xff]
      %v385 = vld [vmem:[%s369 + $0x20] sm:$0xff]
      %v386 = vld [vmem:[%s369 + $0x28] sm:$0xff]
      %v387 = vld [vmem:[%s369 + $0x30] sm:$0xff]
      %v388 = vld [vmem:[%s369 + $0x38] sm:$0xff]
      %v389 = vld [vmem:[%s369 + $0x40] sm:$0xff]
      %v390 = vld [vmem:[%s369 + $0x48] sm:$0xff]
      %v391 = vld [vmem:[%s369 + $0x50] sm:$0xff]
      %v392 = vld [vmem:[%s369 + $0x58] sm:$0xff]
      %v393 = vld [vmem:[%s369 + $0x60] sm:$0xff]
      %v394 = vld [vmem:[%s369 + $0x68] sm:$0xff]
      %v395 = vld [vmem:[%s369 + $0x70] sm:$0xff]
      %v396 = vld [vmem:[%s369 + $0x78] sm:$0xff]
      %v397 = vld [vmem:[%s369 + $0x80] sm:$0xff]
      %v398 = vld [vmem:[%s369 + $0x88] sm:$0xff]
      %v399 = vld [vmem:[%s369 + $0x90] sm:$0xff]
      %v400 = vld [vmem:[%s369 + $0x98] sm:$0xff]
      %v401 = vld [vmem:[%s369 + $0xa0] sm:$0xff]
      %v402 = vld [vmem:[%s369 + $0xa8] sm:$0xff]
      %v403 = vld [vmem:[%s369 + $0xb0] sm:$0xff]
      %v404 = vld [vmem:[%s369 + $0xb8] sm:$0xff]
      %v405 = vld [vmem:[%s374] sm:$0xff]
      %v406 = vld [vmem:[%s374 + $0x8] sm:$0xff]
      %v407 = vld [vmem:[%s374 + $0x10] sm:$0xff]
      %v408 = vld [vmem:[%s374 + $0x18] sm:$0xff]
      %v409 = vld [vmem:[%s374 + $0x20] sm:$0xff]
      %v410 = vld [vmem:[%s374 + $0x28] sm:$0xff]
      %v411 = vld [vmem:[%s374 + $0x30] sm:$0xff]
      %v412 = vld [vmem:[%s374 + $0x38] sm:$0xff]
      %v413 = vld [vmem:[%s374 + $0x40] sm:$0xff]
      %v414 = vld [vmem:[%s374 + $0x48] sm:$0xff]
      %v415 = vld [vmem:[%s374 + $0x50] sm:$0xff]
      %v416 = vld [vmem:[%s374 + $0x58] sm:$0xff]
      %v417 = vld [vmem:[%s374 + $0x60] sm:$0xff]
      %v418 = vld [vmem:[%s374 + $0x68] sm:$0xff]
      %v419 = vld [vmem:[%s374 + $0x70] sm:$0xff]
      %v420 = vld [vmem:[%s374 + $0x78] sm:$0xff]
      %v421 = vld [vmem:[%s374 + $0x80] sm:$0xff]
      %v422 = vld [vmem:[%s374 + $0x88] sm:$0xff]
      %v423 = vld [vmem:[%s374 + $0x90] sm:$0xff]
      %v424 = vld [vmem:[%s374 + $0x98] sm:$0xff]
      %v425 = vld [vmem:[%s374 + $0xa0] sm:$0xff]
      %v426 = vld [vmem:[%s374 + $0xa8] sm:$0xff]
      %v427 = vld [vmem:[%s374 + $0xb0] sm:$0xff]
      %v428 = vld [vmem:[%s374 + $0xb8] sm:$0xff]
      %v429 = vld [vmem:[%s374 + $0xc0] sm:$0xff]
      %v430 = vld [vmem:[%s374 + $0xc8] sm:$0xff]
      %v431 = vld [vmem:[%s374 + $0xd0] sm:$0xff]
      %v432 = vld [vmem:[%s374 + $0xd8] sm:$0xff]
      %v433 = vld [vmem:[%s374 + $0xe0] sm:$0xff]
      %v434 = vld [vmem:[%s374 + $0xe8] sm:$0xff]
      %v435 = vld [vmem:[%s374 + $0xf0] sm:$0xff]
      %v436 = vld [vmem:[%s374 + $0xf8] sm:$0xff]
      %v437 = vld [vmem:[%s374 + $0x100] sm:$0xff]
      %v438 = vld [vmem:[%s374 + $0x108] sm:$0xff]
      %v439 = vld [vmem:[%s374 + $0x110] sm:$0xff]
      %v440 = vld [vmem:[%s374 + $0x118] sm:$0xff]
      %v441 = vld [vmem:[%s374 + $0x120] sm:$0xff]
      %v442 = vld [vmem:[%s374 + $0x128] sm:$0xff]
      %v443 = vld [vmem:[%s374 + $0x130] sm:$0xff]
      %v444 = vld [vmem:[%s374 + $0x138] sm:$0xff]
      %v445 = vld [vmem:[%s374 + $0x140] sm:$0xff]
      %v446 = vld [vmem:[%s374 + $0x148] sm:$0xff]
      %v447 = vld [vmem:[%s374 + $0x150] sm:$0xff]
      %v448 = vld [vmem:[%s374 + $0x158] sm:$0xff]
      %v449 = vld [vmem:[%s374 + $0x160] sm:$0xff]
      %v450 = vld [vmem:[%s374 + $0x168] sm:$0xff]
      %v451 = vld [vmem:[%s374 + $0x170] sm:$0xff]
      %v452 = vld [vmem:[%s374 + $0x178] sm:$0xff]
      %v453 = vmul.f32 %v384, 0.0
      %v454 = vmul.f32 %v385, 0.0
      %v455 = vmul.f32 %v386, 0.0
      %v456 = vadd.f32 %v381, %v453
      %v457 = vadd.f32 %v382, %v454
      %v458 = vadd.f32 %v383, %v455
      %v459 = vmul.f32 %v381, 0.53333336
      %v460 = vmul.f32 %v382, 0.53333336
      %v461 = vmul.f32 %v383, 0.53333336
      %v462 = vmul.f32 %v384, 0.46666667
      %v463 = vmul.f32 %v385, 0.46666667
      %v464 = vmul.f32 %v386, 0.46666667
      %v465 = vadd.f32 %v459, %v462
      %v466 = vadd.f32 %v460, %v463
      %v467 = vadd.f32 %v461, %v464
      %v468 = vmul.f32 %v381, 0.06666667
      %v469 = vmul.f32 %v382, 0.06666667
      %v470 = vmul.f32 %v383, 0.06666667
      %v471 = vmul.f32 %v384, 0.93333334
      %v472 = vmul.f32 %v385, 0.93333334
      %v473 = vmul.f32 %v386, 0.93333334
      %v474 = vadd.f32 %v468, %v471
      %v475 = vadd.f32 %v469, %v472
      %v476 = vadd.f32 %v470, %v473
      %v477 = vmul.f32 %v384, 0.6
      %v478 = vmul.f32 %v385, 0.6
      %v479 = vmul.f32 %v386, 0.6
      %v480 = vmul.f32 %v387, 0.4
      %v481 = vmul.f32 %v388, 0.4
      %v482 = vmul.f32 %v389, 0.4
      %v483 = vadd.f32 %v477, %v480
      %v484 = vadd.f32 %v478, %v481
      %v485 = vadd.f32 %v479, %v482
      %v486 = vmul.f32 %v384, 0.13333334
      %v487 = vmul.f32 %v385, 0.13333334
      %v488 = vmul.f32 %v386, 0.13333334
      %v489 = vmul.f32 %v387, 0.8666667
      %v490 = vmul.f32 %v388, 0.8666667
      %v491 = vmul.f32 %v389, 0.8666667
      %v492 = vadd.f32 %v486, %v489
      %v493 = vadd.f32 %v487, %v490
      %v494 = vadd.f32 %v488, %v491
      %v495 = vmul.f32 %v387, 0.6666667
      %v496 = vmul.f32 %v388, 0.6666667
      %v497 = vmul.f32 %v389, 0.6666667
      %v498 = vmul.f32 %v390, 0.33333334
      %v499 = vmul.f32 %v391, 0.33333334
      %v500 = vmul.f32 %v392, 0.33333334
      %v501 = vadd.f32 %v495, %v498
      %v502 = vadd.f32 %v496, %v499
      %v503 = vadd.f32 %v497, %v500
      %v504 = vmul.f32 %v387, 0.2
      %v505 = vmul.f32 %v388, 0.2
      %v506 = vmul.f32 %v389, 0.2
      %v507 = vmul.f32 %v390, 0.8
      %v508 = vmul.f32 %v391, 0.8
      %v509 = vmul.f32 %v392, 0.8
      %v510 = vadd.f32 %v504, %v507
      %v511 = vadd.f32 %v505, %v508
      %v512 = vadd.f32 %v506, %v509
      %v513 = vmul.f32 %v390, 0.73333335
      %v514 = vmul.f32 %v391, 0.73333335
      %v515 = vmul.f32 %v392, 0.73333335
      %v516 = vmul.f32 %v393, 0.26666668
      %v517 = vmul.f32 %v394, 0.26666668
      %v518 = vmul.f32 %v395, 0.26666668
      %v519 = vadd.f32 %v513, %v516
      %v520 = vadd.f32 %v514, %v517
      %v521 = vadd.f32 %v515, %v518
      %v522 = vmul.f32 %v390, 0.26666668
      %v523 = vmul.f32 %v391, 0.26666668
      %v524 = vmul.f32 %v392, 0.26666668
      %v525 = vmul.f32 %v393, 0.73333335
      %v526 = vmul.f32 %v394, 0.73333335
      %v527 = vmul.f32 %v395, 0.73333335
      %v528 = vadd.f32 %v522, %v525
      %v529 = vadd.f32 %v523, %v526
      %v530 = vadd.f32 %v524, %v527
      %v531 = vmul.f32 %v393, 0.8
      %v532 = vmul.f32 %v394, 0.8
      %v533 = vmul.f32 %v395, 0.8
      %v534 = vmul.f32 %v396, 0.2
      %v535 = vmul.f32 %v397, 0.2
      %v536 = vmul.f32 %v398, 0.2
      %v537 = vadd.f32 %v531, %v534
      %v538 = vadd.f32 %v532, %v535
      %v539 = vadd.f32 %v533, %v536
      %v540 = vmul.f32 %v393, 0.33333334
      %v541 = vmul.f32 %v394, 0.33333334
      %v542 = vmul.f32 %v395, 0.33333334
      %v543 = vmul.f32 %v396, 0.6666667
      %v544 = vmul.f32 %v397, 0.6666667
      %v545 = vmul.f32 %v398, 0.6666667
      %v546 = vadd.f32 %v540, %v543
      %v547 = vadd.f32 %v541, %v544
      %v548 = vadd.f32 %v542, %v545
      %v549 = vmul.f32 %v396, 0.8666667
      %v550 = vmul.f32 %v397, 0.8666667
      %v551 = vmul.f32 %v398, 0.8666667
      %v552 = vmul.f32 %v399, 0.13333334
      %v553 = vmul.f32 %v400, 0.13333334
      %v554 = vmul.f32 %v401, 0.13333334
      %v555 = vadd.f32 %v549, %v552
      %v556 = vadd.f32 %v550, %v553
      %v557 = vadd.f32 %v551, %v554
      %v558 = vmul.f32 %v396, 0.4
      %v559 = vmul.f32 %v397, 0.4
      %v560 = vmul.f32 %v398, 0.4
      %v561 = vmul.f32 %v399, 0.6
      %v562 = vmul.f32 %v400, 0.6
      %v563 = vmul.f32 %v401, 0.6
      %v564 = vadd.f32 %v558, %v561
      %v565 = vadd.f32 %v559, %v562
      %v566 = vadd.f32 %v560, %v563
      %v567 = vmul.f32 %v399, 0.93333334
      %v568 = vmul.f32 %v400, 0.93333334
      %v569 = vmul.f32 %v401, 0.93333334
      %v570 = vmul.f32 %v402, 0.06666667
      %v571 = vmul.f32 %v403, 0.06666667
      %v572 = vmul.f32 %v404, 0.06666667
      %v573 = vadd.f32 %v567, %v570
      %v574 = vadd.f32 %v568, %v571
      %v575 = vadd.f32 %v569, %v572
      %v576 = vmul.f32 %v399, 0.46666667
      %v577 = vmul.f32 %v400, 0.46666667
      %v578 = vmul.f32 %v401, 0.46666667
      %v579 = vmul.f32 %v402, 0.53333336
      %v580 = vmul.f32 %v403, 0.53333336
      %v581 = vmul.f32 %v404, 0.53333336
      %v582 = vadd.f32 %v576, %v579
      %v583 = vadd.f32 %v577, %v580
      %v584 = vadd.f32 %v578, %v581
      %v585 = vmul.f32 %v402, 0.0
      %v586 = vmul.f32 %v403, 0.0
      %v587 = vmul.f32 %v404, 0.0
      %v588 = vadd.f32 %v402, %v585
      %v589 = vadd.f32 %v403, %v586
      %v590 = vadd.f32 %v404, %v587
      %639 = vrot.lane.b32.xlu0 %v405, 4
      %v640 = vpop.permute.xlu0 %639
      %641 = vrot.lane.b32.xlu0 %v406, 4
      %v642 = vpop.permute.xlu0 %641
      %643 = vrot.lane.b32.xlu0 %v407, 4
      %v644 = vpop.permute.xlu0 %643
      %645 = vrot.lane.b32.xlu0 %v408, 4
      %v646 = vpop.permute.xlu0 %645
      %647 = vrot.lane.b32.xlu0 %v409, 4
      %v648 = vpop.permute.xlu0 %647
      %649 = vrot.lane.b32.xlu0 %v410, 4
      %v650 = vpop.permute.xlu0 %649
      %651 = vrot.lane.b32.xlu0 %v411, 4
      %v652 = vpop.permute.xlu0 %651
      %653 = vrot.lane.b32.xlu0 %v412, 4
      %v654 = vpop.permute.xlu0 %653
      %655 = vrot.lane.b32.xlu0 %v413, 4
      %v656 = vpop.permute.xlu0 %655
      %657 = vrot.lane.b32.xlu0 %v414, 4
      %v658 = vpop.permute.xlu0 %657
      %659 = vrot.lane.b32.xlu0 %v415, 4
      %v660 = vpop.permute.xlu0 %659
      %661 = vrot.lane.b32.xlu0 %v416, 4
      %v662 = vpop.permute.xlu0 %661
      %663 = vrot.lane.b32.xlu0 %v417, 4
      %v664 = vpop.permute.xlu0 %663
      %665 = vrot.lane.b32.xlu0 %v418, 4
      %v666 = vpop.permute.xlu0 %665
      %667 = vrot.lane.b32.xlu0 %v419, 4
      %v668 = vpop.permute.xlu0 %667
      %669 = vrot.lane.b32.xlu0 %v420, 4
      %v670 = vpop.permute.xlu0 %669
      %671 = vrot.lane.b32.xlu0 %v421, 4
      %v672 = vpop.permute.xlu0 %671
      %673 = vrot.lane.b32.xlu0 %v422, 4
      %v674 = vpop.permute.xlu0 %673
      %675 = vrot.lane.b32.xlu0 %v423, 4
      %v676 = vpop.permute.xlu0 %675
      %677 = vrot.lane.b32.xlu0 %v424, 4
      %v678 = vpop.permute.xlu0 %677
      %679 = vrot.lane.b32.xlu0 %v425, 4
      %v680 = vpop.permute.xlu0 %679
      %681 = vrot.lane.b32.xlu0 %v426, 4
      %v682 = vpop.permute.xlu0 %681
      %683 = vrot.lane.b32.xlu0 %v427, 4
      %v684 = vpop.permute.xlu0 %683
      %685 = vrot.lane.b32.xlu0 %v428, 4
      %v686 = vpop.permute.xlu0 %685
      %687 = vrot.lane.b32.xlu0 %v429, 4
      %v688 = vpop.permute.xlu0 %687
      %689 = vrot.lane.b32.xlu0 %v430, 4
      %v690 = vpop.permute.xlu0 %689
      %691 = vrot.lane.b32.xlu0 %v431, 4
      %v692 = vpop.permute.xlu0 %691
      %693 = vrot.lane.b32.xlu0 %v432, 4
      %v694 = vpop.permute.xlu0 %693
      %695 = vrot.lane.b32.xlu0 %v433, 4
      %v696 = vpop.permute.xlu0 %695
      %697 = vrot.lane.b32.xlu0 %v434, 4
      %v698 = vpop.permute.xlu0 %697
      %699 = vrot.lane.b32.xlu0 %v435, 4
      %v700 = vpop.permute.xlu0 %699
      %701 = vrot.lane.b32.xlu0 %v436, 4
      %v702 = vpop.permute.xlu0 %701
      %703 = vrot.lane.b32.xlu0 %v437, 4
      %v704 = vpop.permute.xlu0 %703
      %705 = vrot.lane.b32.xlu0 %v438, 4
      %v706 = vpop.permute.xlu0 %705
      %707 = vrot.lane.b32.xlu0 %v439, 4
      %v708 = vpop.permute.xlu0 %707
      %709 = vrot.lane.b32.xlu0 %v440, 4
      %v710 = vpop.permute.xlu0 %709
      %711 = vrot.lane.b32.xlu0 %v441, 4
      %v712 = vpop.permute.xlu0 %711
      %713 = vrot.lane.b32.xlu0 %v442, 4
      %v714 = vpop.permute.xlu0 %713
      %715 = vrot.lane.b32.xlu0 %v443, 4
      %v716 = vpop.permute.xlu0 %715
      %717 = vrot.lane.b32.xlu0 %v444, 4
      %v718 = vpop.permute.xlu0 %717
      %719 = vrot.lane.b32.xlu0 %v445, 4
      %v720 = vpop.permute.xlu0 %719
      %721 = vrot.lane.b32.xlu0 %v446, 4
      %v722 = vpop.permute.xlu0 %721
      %723 = vrot.lane.b32.xlu0 %v447, 4
      %v724 = vpop.permute.xlu0 %723
      %725 = vrot.lane.b32.xlu0 %v448, 4
      %v726 = vpop.permute.xlu0 %725
      %727 = vrot.lane.b32.xlu0 %v449, 4
      %v728 = vpop.permute.xlu0 %727
      %729 = vrot.lane.b32.xlu0 %v450, 4
      %v730 = vpop.permute.xlu0 %729
      %731 = vrot.lane.b32.xlu0 %v451, 4
      %v732 = vpop.permute.xlu0 %731
      %733 = vrot.lane.b32.xlu0 %v452, 4
      %v734 = vpop.permute.xlu0 %733
      %vm783 = vcmask 31744
      %v784 = vsel %vm783, %v456, %v640
      %v785 = vsel %vm783, %v457, %v642
      %v786 = vsel %vm783, %v458, %v644
      %v787 = vsel %vm783, %v465, %v646
      %v788 = vsel %vm783, %v466, %v648
      %v789 = vsel %vm783, %v467, %v650
      %v790 = vsel %vm783, %v474, %v652
      %v791 = vsel %vm783, %v475, %v654
      %v792 = vsel %vm783, %v476, %v656
      %v793 = vsel %vm783, %v483, %v658
      %v794 = vsel %vm783, %v484, %v660
      %v795 = vsel %vm783, %v485, %v662
      %v796 = vsel %vm783, %v492, %v664
      %v797 = vsel %vm783, %v493, %v666
      %v798 = vsel %vm783, %v494, %v668
      %v799 = vsel %vm783, %v501, %v670
      %v800 = vsel %vm783, %v502, %v672
      %v801 = vsel %vm783, %v503, %v674
      %v802 = vsel %vm783, %v510, %v676
      %v803 = vsel %vm783, %v511, %v678
      %v804 = vsel %vm783, %v512, %v680
      %v805 = vsel %vm783, %v519, %v682
      %v806 = vsel %vm783, %v520, %v684
      %v807 = vsel %vm783, %v521, %v686
      %v808 = vsel %vm783, %v528, %v688
      %v809 = vsel %vm783, %v529, %v690
      %v810 = vsel %vm783, %v530, %v692
      %v811 = vsel %vm783, %v537, %v694
      %v812 = vsel %vm783, %v538, %v696
      %v813 = vsel %vm783, %v539, %v698
      %v814 = vsel %vm783, %v546, %v700
      %v815 = vsel %vm783, %v547, %v702
      %v816 = vsel %vm783, %v548, %v704
      %v817 = vsel %vm783, %v555, %v706
      %v818 = vsel %vm783, %v556, %v708
      %v819 = vsel %vm783, %v557, %v710
      %v820 = vsel %vm783, %v564, %v712
      %v821 = vsel %vm783, %v565, %v714
      %v822 = vsel %vm783, %v566, %v716
      %v823 = vsel %vm783, %v573, %v718
      %v824 = vsel %vm783, %v574, %v720
      %v825 = vsel %vm783, %v575, %v722
      %v826 = vsel %vm783, %v582, %v724
      %v827 = vsel %vm783, %v583, %v726
      %v828 = vsel %vm783, %v584, %v728
      %v829 = vsel %vm783, %v588, %v730
      %v830 = vsel %vm783, %v589, %v732
      %v831 = vsel %vm783, %v590, %v734
      %vm832 = vcmask 97280
      %v833 = vsel %vm832, %v784, 0.0
      %v834 = vsel %vm832, %v787, 0.0
      %v835 = vadd.f32 %v833, %v834
      %v836 = vsel %vm832, %v790, 0.0
      %v837 = vadd.f32 %v835, %v836
      %v838 = vsel %vm832, %v793, 0.0
      %v839 = vadd.f32 %v837, %v838
      %v840 = vsel %vm832, %v796, 0.0
      %v841 = vadd.f32 %v839, %v840
      %v842 = vsel %vm832, %v799, 0.0
      %v843 = vadd.f32 %v841, %v842
      %v844 = vsel %vm832, %v802, 0.0
      %v845 = vadd.f32 %v843, %v844
      %v846 = vsel %vm832, %v805, 0.0
      %v847 = vadd.f32 %v845, %v846
      %v848 = vsel %vm832, %v808, 0.0
      %v849 = vadd.f32 %v847, %v848
      %v850 = vsel %vm832, %v811, 0.0
      %v851 = vadd.f32 %v849, %v850
      %v852 = vsel %vm832, %v814, 0.0
      %v853 = vadd.f32 %v851, %v852
      %v854 = vsel %vm832, %v817, 0.0
      %v855 = vadd.f32 %v853, %v854
      %v856 = vsel %vm832, %v820, 0.0
      %v857 = vadd.f32 %v855, %v856
      %v858 = vsel %vm832, %v823, 0.0
      %v859 = vadd.f32 %v857, %v858
      %v860 = vsel %vm832, %v826, 0.0
      %v861 = vadd.f32 %v859, %v860
      %v862 = vsel %vm832, %v829, 0.0
      %v863 = vadd.f32 %v861, %v862
      %v864 = vsel %vm832, %v785, 0.0
      %v865 = vsel %vm832, %v788, 0.0
      %v866 = vadd.f32 %v864, %v865
      %v867 = vsel %vm832, %v791, 0.0
      %v868 = vadd.f32 %v866, %v867
      %v869 = vsel %vm832, %v794, 0.0
      %v870 = vadd.f32 %v868, %v869
      %v871 = vsel %vm832, %v797, 0.0
      %v872 = vadd.f32 %v870, %v871
      %v873 = vsel %vm832, %v800, 0.0
      %v874 = vadd.f32 %v872, %v873
      %v875 = vsel %vm832, %v803, 0.0
      %v876 = vadd.f32 %v874, %v875
      %v877 = vsel %vm832, %v806, 0.0
      %v878 = vadd.f32 %v876, %v877
      %v879 = vsel %vm832, %v809, 0.0
      %v880 = vadd.f32 %v878, %v879
      %v881 = vsel %vm832, %v812, 0.0
      %v882 = vadd.f32 %v880, %v881
      %v883 = vsel %vm832, %v815, 0.0
      %v884 = vadd.f32 %v882, %v883
      %v885 = vsel %vm832, %v818, 0.0
      %v886 = vadd.f32 %v884, %v885
      %v887 = vsel %vm832, %v821, 0.0
      %v888 = vadd.f32 %v886, %v887
      %v889 = vsel %vm832, %v824, 0.0
      %v890 = vadd.f32 %v888, %v889
      %v891 = vsel %vm832, %v827, 0.0
      %v892 = vadd.f32 %v890, %v891
      %v893 = vsel %vm832, %v830, 0.0
      %v894 = vadd.f32 %v892, %v893
      %v895 = vsel %vm832, %v786, 0.0
      %v896 = vsel %vm832, %v789, 0.0
      %v897 = vadd.f32 %v895, %v896
      %v898 = vsel %vm832, %v792, 0.0
      %v899 = vadd.f32 %v897, %v898
      %v900 = vsel %vm832, %v795, 0.0
      %v901 = vadd.f32 %v899, %v900
      %v902 = vsel %vm832, %v798, 0.0
      %v903 = vadd.f32 %v901, %v902
      %v904 = vsel %vm832, %v801, 0.0
      %v905 = vadd.f32 %v903, %v904
      %v906 = vsel %vm832, %v804, 0.0
      %v907 = vadd.f32 %v905, %v906
      %v908 = vsel %vm832, %v807, 0.0
      %v909 = vadd.f32 %v907, %v908
      %v910 = vsel %vm832, %v810, 0.0
      %v911 = vadd.f32 %v909, %v910
      %v912 = vsel %vm832, %v813, 0.0
      %v913 = vadd.f32 %v911, %v912
      %v914 = vsel %vm832, %v816, 0.0
      %v915 = vadd.f32 %v913, %v914
      %v916 = vsel %vm832, %v819, 0.0
      %v917 = vadd.f32 %v915, %v916
      %v918 = vsel %vm832, %v822, 0.0
      %v919 = vadd.f32 %v917, %v918
      %v920 = vsel %vm832, %v825, 0.0
      %v921 = vadd.f32 %v919, %v920
      %v922 = vsel %vm832, %v828, 0.0
      %v923 = vadd.f32 %v921, %v922
      %v924 = vsel %vm832, %v831, 0.0
      %v925 = vadd.f32 %v923, %v924
      %v926 = vrcp.pop 16.0
      %v927 = vmul.f32 %v863, %v926
      %v928 = vmul.f32 %v894, %v926
      %v929 = vmul.f32 %v925, %v926
      %v930 = vsub.f32 %v784, %v927
      %v931 = vsub.f32 %v785, %v928
      %v932 = vsub.f32 %v786, %v929
      %v933 = vsub.f32 %v787, %v927
      %v934 = vsub.f32 %v788, %v928
      %v935 = vsub.f32 %v789, %v929
      %v936 = vsub.f32 %v790, %v927
      %v937 = vsub.f32 %v791, %v928
      %v938 = vsub.f32 %v792, %v929
      %v939 = vsub.f32 %v793, %v927
      %v940 = vsub.f32 %v794, %v928
      %v941 = vsub.f32 %v795, %v929
      %v942 = vsub.f32 %v796, %v927
      %v943 = vsub.f32 %v797, %v928
      %v944 = vsub.f32 %v798, %v929
      %v945 = vsub.f32 %v799, %v927
      %v946 = vsub.f32 %v800, %v928
      %v947 = vsub.f32 %v801, %v929
      %v948 = vsub.f32 %v802, %v927
      %v949 = vsub.f32 %v803, %v928
      %v950 = vsub.f32 %v804, %v929
      %v951 = vsub.f32 %v805, %v927
      %v952 = vsub.f32 %v806, %v928
      %v953 = vsub.f32 %v807, %v929
      %v954 = vsub.f32 %v808, %v927
      %v955 = vsub.f32 %v809, %v928
      %v956 = vsub.f32 %v810, %v929
      %v957 = vsub.f32 %v811, %v927
      %v958 = vsub.f32 %v812, %v928
      %v959 = vsub.f32 %v813, %v929
      %v960 = vsub.f32 %v814, %v927
      %v961 = vsub.f32 %v815, %v928
      %v962 = vsub.f32 %v816, %v929
      %v963 = vsub.f32 %v817, %v927
      %v964 = vsub.f32 %v818, %v928
      %v965 = vsub.f32 %v819, %v929
      %v966 = vsub.f32 %v820, %v927
      %v967 = vsub.f32 %v821, %v928
      %v968 = vsub.f32 %v822, %v929
      %v969 = vsub.f32 %v823, %v927
      %v970 = vsub.f32 %v824, %v928
      %v971 = vsub.f32 %v825, %v929
      %v972 = vsub.f32 %v826, %v927
      %v973 = vsub.f32 %v827, %v928
      %v974 = vsub.f32 %v828, %v929
      %v975 = vsub.f32 %v829, %v927
      %v976 = vsub.f32 %v830, %v928
      %v977 = vsub.f32 %v831, %v929
      %v978 = vmul.f32 %v930, %v930
      %v979 = vmul.f32 %v931, %v931
      %v980 = vmul.f32 %v932, %v932
      %v981 = vmul.f32 %v933, %v933
      %v982 = vmul.f32 %v934, %v934
      %v983 = vmul.f32 %v935, %v935
      %v984 = vmul.f32 %v936, %v936
      %v985 = vmul.f32 %v937, %v937
      %v986 = vmul.f32 %v938, %v938
      %v987 = vmul.f32 %v939, %v939
      %v988 = vmul.f32 %v940, %v940
      %v989 = vmul.f32 %v941, %v941
      %v990 = vmul.f32 %v942, %v942
      %v991 = vmul.f32 %v943, %v943
      %v992 = vmul.f32 %v944, %v944
      %v993 = vmul.f32 %v945, %v945
      %v994 = vmul.f32 %v946, %v946
      %v995 = vmul.f32 %v947, %v947
      %v996 = vmul.f32 %v948, %v948
      %v997 = vmul.f32 %v949, %v949
      %v998 = vmul.f32 %v950, %v950
      %v999 = vmul.f32 %v951, %v951
      %v1000 = vmul.f32 %v952, %v952
      %v1001 = vmul.f32 %v953, %v953
      %v1002 = vmul.f32 %v954, %v954
      %v1003 = vmul.f32 %v955, %v955
      %v1004 = vmul.f32 %v956, %v956
      %v1005 = vmul.f32 %v957, %v957
      %v1006 = vmul.f32 %v958, %v958
      %v1007 = vmul.f32 %v959, %v959
      %v1008 = vmul.f32 %v960, %v960
      %v1009 = vmul.f32 %v961, %v961
      %v1010 = vmul.f32 %v962, %v962
      %v1011 = vmul.f32 %v963, %v963
      %v1012 = vmul.f32 %v964, %v964
      %v1013 = vmul.f32 %v965, %v965
      %v1014 = vmul.f32 %v966, %v966
      %v1015 = vmul.f32 %v967, %v967
      %v1016 = vmul.f32 %v968, %v968
      %v1017 = vmul.f32 %v969, %v969
      %v1018 = vmul.f32 %v970, %v970
      %v1019 = vmul.f32 %v971, %v971
      %v1020 = vmul.f32 %v972, %v972
      %v1021 = vmul.f32 %v973, %v973
      %v1022 = vmul.f32 %v974, %v974
      %v1023 = vmul.f32 %v975, %v975
      %v1024 = vmul.f32 %v976, %v976
      %v1025 = vmul.f32 %v977, %v977
      %v1026 = vsel %vm832, %v978, 0.0
      %v1027 = vsel %vm832, %v981, 0.0
      %v1028 = vadd.f32 %v1026, %v1027
      %v1029 = vsel %vm832, %v984, 0.0
      %v1030 = vadd.f32 %v1028, %v1029
      %v1031 = vsel %vm832, %v987, 0.0
      %v1032 = vadd.f32 %v1030, %v1031
      %v1033 = vsel %vm832, %v990, 0.0
      %v1034 = vadd.f32 %v1032, %v1033
      %v1035 = vsel %vm832, %v993, 0.0
      %v1036 = vadd.f32 %v1034, %v1035
      %v1037 = vsel %vm832, %v996, 0.0
      %v1038 = vadd.f32 %v1036, %v1037
      %v1039 = vsel %vm832, %v999, 0.0
      %v1040 = vadd.f32 %v1038, %v1039
      %v1041 = vsel %vm832, %v1002, 0.0
      %v1042 = vadd.f32 %v1040, %v1041
      %v1043 = vsel %vm832, %v1005, 0.0
      %v1044 = vadd.f32 %v1042, %v1043
      %v1045 = vsel %vm832, %v1008, 0.0
      %v1046 = vadd.f32 %v1044, %v1045
      %v1047 = vsel %vm832, %v1011, 0.0
      %v1048 = vadd.f32 %v1046, %v1047
      %v1049 = vsel %vm832, %v1014, 0.0
      %v1050 = vadd.f32 %v1048, %v1049
      %v1051 = vsel %vm832, %v1017, 0.0
      %v1052 = vadd.f32 %v1050, %v1051
      %v1053 = vsel %vm832, %v1020, 0.0
      %v1054 = vadd.f32 %v1052, %v1053
      %v1055 = vsel %vm832, %v1023, 0.0
      %v1056 = vadd.f32 %v1054, %v1055
      %v1057 = vsel %vm832, %v979, 0.0
      %v1058 = vsel %vm832, %v982, 0.0
      %v1059 = vadd.f32 %v1057, %v1058
      %v1060 = vsel %vm832, %v985, 0.0
      %v1061 = vadd.f32 %v1059, %v1060
      %v1062 = vsel %vm832, %v988, 0.0
      %v1063 = vadd.f32 %v1061, %v1062
      %v1064 = vsel %vm832, %v991, 0.0
      %v1065 = vadd.f32 %v1063, %v1064
      %v1066 = vsel %vm832, %v994, 0.0
      %v1067 = vadd.f32 %v1065, %v1066
      %v1068 = vsel %vm832, %v997, 0.0
      %v1069 = vadd.f32 %v1067, %v1068
      %v1070 = vsel %vm832, %v1000, 0.0
      %v1071 = vadd.f32 %v1069, %v1070
      %v1072 = vsel %vm832, %v1003, 0.0
      %v1073 = vadd.f32 %v1071, %v1072
      %v1074 = vsel %vm832, %v1006, 0.0
      %v1075 = vadd.f32 %v1073, %v1074
      %v1076 = vsel %vm832, %v1009, 0.0
      %v1077 = vadd.f32 %v1075, %v1076
      %v1078 = vsel %vm832, %v1012, 0.0
      %v1079 = vadd.f32 %v1077, %v1078
      %v1080 = vsel %vm832, %v1015, 0.0
      %v1081 = vadd.f32 %v1079, %v1080
      %v1082 = vsel %vm832, %v1018, 0.0
      %v1083 = vadd.f32 %v1081, %v1082
      %v1084 = vsel %vm832, %v1021, 0.0
      %v1085 = vadd.f32 %v1083, %v1084
      %v1086 = vsel %vm832, %v1024, 0.0
      %v1087 = vadd.f32 %v1085, %v1086
      %v1088 = vsel %vm832, %v980, 0.0
      %v1089 = vsel %vm832, %v983, 0.0
      %v1090 = vadd.f32 %v1088, %v1089
      %v1091 = vsel %vm832, %v986, 0.0
      %v1092 = vadd.f32 %v1090, %v1091
      %v1093 = vsel %vm832, %v989, 0.0
      %v1094 = vadd.f32 %v1092, %v1093
      %v1095 = vsel %vm832, %v992, 0.0
      %v1096 = vadd.f32 %v1094, %v1095
      %v1097 = vsel %vm832, %v995, 0.0
      %v1098 = vadd.f32 %v1096, %v1097
      %v1099 = vsel %vm832, %v998, 0.0
      %v1100 = vadd.f32 %v1098, %v1099
      %v1101 = vsel %vm832, %v1001, 0.0
      %v1102 = vadd.f32 %v1100, %v1101
      %v1103 = vsel %vm832, %v1004, 0.0
      %v1104 = vadd.f32 %v1102, %v1103
      %v1105 = vsel %vm832, %v1007, 0.0
      %v1106 = vadd.f32 %v1104, %v1105
      %v1107 = vsel %vm832, %v1010, 0.0
      %v1108 = vadd.f32 %v1106, %v1107
      %v1109 = vsel %vm832, %v1013, 0.0
      %v1110 = vadd.f32 %v1108, %v1109
      %v1111 = vsel %vm832, %v1016, 0.0
      %v1112 = vadd.f32 %v1110, %v1111
      %v1113 = vsel %vm832, %v1019, 0.0
      %v1114 = vadd.f32 %v1112, %v1113
      %v1115 = vsel %vm832, %v1022, 0.0
      %v1116 = vadd.f32 %v1114, %v1115
      %v1117 = vsel %vm832, %v1025, 0.0
      %v1118 = vadd.f32 %v1116, %v1117
      %v1119 = vmul.f32 %v1056, %v926
      %v1120 = vmul.f32 %v1087, %v926
      %v1121 = vmul.f32 %v1118, %v926
      %v1122 = vadd.f32 %v1119, 1e-08
      %v1123 = vadd.f32 %v1120, 1e-08
      %v1124 = vadd.f32 %v1121, 1e-08
      %v1125 = vrsqrt.pop %v1122
      %v1126 = vrsqrt.pop %v1123
      %v1127 = vrsqrt.pop %v1124
      %v1128 = vmul.f32 %v930, %v1125
      %v1129 = vmul.f32 %v931, %v1126
      %v1130 = vmul.f32 %v932, %v1127
      %v1131 = vmul.f32 %v933, %v1125
      %v1132 = vmul.f32 %v934, %v1126
      %v1133 = vmul.f32 %v935, %v1127
      %v1134 = vmul.f32 %v936, %v1125
      %v1135 = vmul.f32 %v937, %v1126
      %v1136 = vmul.f32 %v938, %v1127
      %v1137 = vmul.f32 %v939, %v1125
      %v1138 = vmul.f32 %v940, %v1126
      %v1139 = vmul.f32 %v941, %v1127
      %v1140 = vmul.f32 %v942, %v1125
      %v1141 = vmul.f32 %v943, %v1126
      %v1142 = vmul.f32 %v944, %v1127
      %v1143 = vmul.f32 %v945, %v1125
      %v1144 = vmul.f32 %v946, %v1126
      %v1145 = vmul.f32 %v947, %v1127
      %v1146 = vmul.f32 %v948, %v1125
      %v1147 = vmul.f32 %v949, %v1126
      %v1148 = vmul.f32 %v950, %v1127
      %v1149 = vmul.f32 %v951, %v1125
      %v1150 = vmul.f32 %v952, %v1126
      %v1151 = vmul.f32 %v953, %v1127
      %v1152 = vmul.f32 %v954, %v1125
      %v1153 = vmul.f32 %v955, %v1126
      %v1154 = vmul.f32 %v956, %v1127
      %v1155 = vmul.f32 %v957, %v1125
      %v1156 = vmul.f32 %v958, %v1126
      %v1157 = vmul.f32 %v959, %v1127
      %v1158 = vmul.f32 %v960, %v1125
      %v1159 = vmul.f32 %v961, %v1126
      %v1160 = vmul.f32 %v962, %v1127
      %v1161 = vmul.f32 %v963, %v1125
      %v1162 = vmul.f32 %v964, %v1126
      %v1163 = vmul.f32 %v965, %v1127
      %v1164 = vmul.f32 %v966, %v1125
      %v1165 = vmul.f32 %v967, %v1126
      %v1166 = vmul.f32 %v968, %v1127
      %v1167 = vmul.f32 %v969, %v1125
      %v1168 = vmul.f32 %v970, %v1126
      %v1169 = vmul.f32 %v971, %v1127
      %v1170 = vmul.f32 %v972, %v1125
      %v1171 = vmul.f32 %v973, %v1126
      %v1172 = vmul.f32 %v974, %v1127
      %v1173 = vmul.f32 %v975, %v1125
      %v1174 = vmul.f32 %v976, %v1126
      %v1175 = vmul.f32 %v977, %v1127
      %v1176 = vld [vmem:[%s2] sm:$0xff]
      %v1177 = vld [vmem:[%s2 + $0x8] sm:$0xff]
      %v1180 = vcombine.high %v1176, %v1176
      %v1182 = vunpack.c.l.s4 1966171168
      %v1183 = vunpack.c.0.s8 %v1182
      %v1184 = vlaneseq
      %v1185 = vshrl.u32 %v1184, 7
      %v1186 = vsub.s32 %v1183, %v1185
      %v1187 = vrot.slane %v1176, %v1186
      %v1189 = vunpack.c.l.s4 1966171168
      %v1190 = vunpack.c.0.s8 %v1189
      %v1191 = vlaneseq
      %v1192 = vshrl.u32 %v1191, 7
      %v1193 = vsub.s32 %v1190, %v1192
      %v1194 = vrot.slane %v1180, %v1193
      %v1195 = vcombine.high %v1187, %v1187
      %v1196 = vcombine.high %v1194, %v1194
      %v1198 = vunpack.c.l.s4 1966171168
      %v1199 = vunpack.c.0.s8 %v1198
      %v1200 = vlaneseq
      %v1201 = vshrl.u32 %v1200, 7
      %v1202 = vsub.s32 %v1199, %v1201
      %v1203 = vrot.slane %v1187, %v1202
      %v1205 = vunpack.c.l.s4 1966171168
      %v1206 = vunpack.c.0.s8 %v1205
      %v1207 = vlaneseq
      %v1208 = vshrl.u32 %v1207, 7
      %v1209 = vsub.s32 %v1206, %v1208
      %v1210 = vrot.slane %v1194, %v1209
      %v1212 = vunpack.c.l.s4 1966171168
      %v1213 = vunpack.c.0.s8 %v1212
      %v1214 = vlaneseq
      %v1215 = vshrl.u32 %v1214, 7
      %v1216 = vsub.s32 %v1213, %v1215
      %v1217 = vrot.slane %v1195, %v1216
      %v1219 = vunpack.c.l.s4 1966171168
      %v1220 = vunpack.c.0.s8 %v1219
      %v1221 = vlaneseq
      %v1222 = vshrl.u32 %v1221, 7
      %v1223 = vsub.s32 %v1220, %v1222
      %v1224 = vrot.slane %v1196, %v1223
      %v1225 = vcombine.high %v1203, %v1203
      %v1226 = vcombine.high %v1210, %v1210
      %v1227 = vcombine.high %v1217, %v1217
      %v1228 = vcombine.high %v1224, %v1224
      %v1229 = vcombine.high %v1177, %v1177
      %v1231 = vunpack.c.l.s4 1966171168
      %v1232 = vunpack.c.0.s8 %v1231
      %v1233 = vlaneseq
      %v1234 = vshrl.u32 %v1233, 7
      %v1235 = vsub.s32 %v1232, %v1234
      %v1236 = vrot.slane %v1177, %v1235
      %v1238 = vunpack.c.l.s4 1966171168
      %v1239 = vunpack.c.0.s8 %v1238
      %v1240 = vlaneseq
      %v1241 = vshrl.u32 %v1240, 7
      %v1242 = vsub.s32 %v1239, %v1241
      %v1243 = vrot.slane %v1229, %v1242
      %v1244 = vcombine.high %v1236, %v1236
      %v1245 = vcombine.high %v1243, %v1243
      %v1247 = vunpack.c.l.s4 1966171168
      %v1248 = vunpack.c.0.s8 %v1247
      %v1249 = vlaneseq
      %v1250 = vshrl.u32 %v1249, 7
      %v1251 = vsub.s32 %v1248, %v1250
      %v1252 = vrot.slane %v1236, %v1251
      %v1254 = vunpack.c.l.s4 1966171168
      %v1255 = vunpack.c.0.s8 %v1254
      %v1256 = vlaneseq
      %v1257 = vshrl.u32 %v1256, 7
      %v1258 = vsub.s32 %v1255, %v1257
      %v1259 = vrot.slane %v1243, %v1258
      %v1261 = vunpack.c.l.s4 1966171168
      %v1262 = vunpack.c.0.s8 %v1261
      %v1263 = vlaneseq
      %v1264 = vshrl.u32 %v1263, 7
      %v1265 = vsub.s32 %v1262, %v1264
      %v1266 = vrot.slane %v1244, %v1265
      %v1268 = vunpack.c.l.s4 1966171168
      %v1269 = vunpack.c.0.s8 %v1268
      %v1270 = vlaneseq
      %v1271 = vshrl.u32 %v1270, 7
      %v1272 = vsub.s32 %v1269, %v1271
      %v1273 = vrot.slane %v1245, %v1272
      %v1274 = vcombine.high %v1252, %v1252
      %v1275 = vcombine.high %v1259, %v1259
      %v1276 = vcombine.high %v1266, %v1266
      %v1277 = vcombine.high %v1273, %v1273
      %v1278 = vlaneseq
      %v1279 = vshrl.u32 %v1278, 7
      %v1280 = vsub.s32 0, %v1279
      %v1281 = vrot.slane %v1203, %v1280
      %v1282 = vlaneseq
      %v1283 = vshrl.u32 %v1282, 7
      %v1284 = vsub.s32 0, %v1283
      %v1285 = vrot.slane %v1217, %v1284
      %v1286 = vlaneseq
      %v1287 = vshrl.u32 %v1286, 7
      %v1288 = vsub.s32 0, %v1287
      %v1289 = vrot.slane %v1225, %v1288
      %v1290 = vlaneseq
      %v1291 = vshrl.u32 %v1290, 7
      %v1292 = vsub.s32 0, %v1291
      %v1293 = vrot.slane %v1227, %v1292
      %v1294 = vlaneseq
      %v1295 = vshrl.u32 %v1294, 7
      %v1296 = vsub.s32 0, %v1295
      %v1297 = vrot.slane %v1210, %v1296
      %v1298 = vlaneseq
      %v1299 = vshrl.u32 %v1298, 7
      %v1300 = vsub.s32 0, %v1299
      %v1301 = vrot.slane %v1224, %v1300
      %v1302 = vlaneseq
      %v1303 = vshrl.u32 %v1302, 7
      %v1304 = vsub.s32 0, %v1303
      %v1305 = vrot.slane %v1226, %v1304
      %v1306 = vlaneseq
      %v1307 = vshrl.u32 %v1306, 7
      %v1308 = vsub.s32 0, %v1307
      %v1309 = vrot.slane %v1228, %v1308
      %v1310 = vlaneseq
      %v1311 = vshrl.u32 %v1310, 7
      %v1312 = vsub.s32 0, %v1311
      %v1313 = vrot.slane %v1252, %v1312
      %v1314 = vlaneseq
      %v1315 = vshrl.u32 %v1314, 7
      %v1316 = vsub.s32 0, %v1315
      %v1317 = vrot.slane %v1266, %v1316
      %v1318 = vlaneseq
      %v1319 = vshrl.u32 %v1318, 7
      %v1320 = vsub.s32 0, %v1319
      %v1321 = vrot.slane %v1274, %v1320
      %v1322 = vlaneseq
      %v1323 = vshrl.u32 %v1322, 7
      %v1324 = vsub.s32 0, %v1323
      %v1325 = vrot.slane %v1276, %v1324
      %v1326 = vlaneseq
      %v1327 = vshrl.u32 %v1326, 7
      %v1328 = vsub.s32 0, %v1327
      %v1329 = vrot.slane %v1259, %v1328
      %v1330 = vlaneseq
      %v1331 = vshrl.u32 %v1330, 7
      %v1332 = vsub.s32 0, %v1331
      %v1333 = vrot.slane %v1273, %v1332
      %v1334 = vlaneseq
      %v1335 = vshrl.u32 %v1334, 7
      %v1336 = vsub.s32 0, %v1335
      %v1337 = vrot.slane %v1275, %v1336
      %v1338 = vlaneseq
      %v1339 = vshrl.u32 %v1338, 7
      %v1340 = vsub.s32 0, %v1339
      %v1341 = vrot.slane %v1277, %v1340
      %v1358 = vmul.f32 %v1128, %v1281
      %v1359 = vmul.f32 %v1129, %v1281
      %v1360 = vmul.f32 %v1130, %v1281
      %v1361 = vmul.f32 %v1131, %v1285
      %v1362 = vmul.f32 %v1132, %v1285
      %v1363 = vmul.f32 %v1133, %v1285
      %v1364 = vmul.f32 %v1134, %v1289
      %v1365 = vmul.f32 %v1135, %v1289
      %v1366 = vmul.f32 %v1136, %v1289
      %v1367 = vmul.f32 %v1137, %v1293
      %v1368 = vmul.f32 %v1138, %v1293
      %v1369 = vmul.f32 %v1139, %v1293
      %v1370 = vmul.f32 %v1140, %v1297
      %v1371 = vmul.f32 %v1141, %v1297
      %v1372 = vmul.f32 %v1142, %v1297
      %v1373 = vmul.f32 %v1143, %v1301
      %v1374 = vmul.f32 %v1144, %v1301
      %v1375 = vmul.f32 %v1145, %v1301
      %v1376 = vmul.f32 %v1146, %v1305
      %v1377 = vmul.f32 %v1147, %v1305
      %v1378 = vmul.f32 %v1148, %v1305
      %v1379 = vmul.f32 %v1149, %v1309
      %v1380 = vmul.f32 %v1150, %v1309
      %v1381 = vmul.f32 %v1151, %v1309
      %v1382 = vmul.f32 %v1152, %v1313
      %v1383 = vmul.f32 %v1153, %v1313
      %v1384 = vmul.f32 %v1154, %v1313
      %v1385 = vmul.f32 %v1155, %v1317
      %v1386 = vmul.f32 %v1156, %v1317
      %v1387 = vmul.f32 %v1157, %v1317
      %v1388 = vmul.f32 %v1158, %v1321
      %v1389 = vmul.f32 %v1159, %v1321
      %v1390 = vmul.f32 %v1160, %v1321
      %v1391 = vmul.f32 %v1161, %v1325
      %v1392 = vmul.f32 %v1162, %v1325
      %v1393 = vmul.f32 %v1163, %v1325
      %v1394 = vmul.f32 %v1164, %v1329
      %v1395 = vmul.f32 %v1165, %v1329
      %v1396 = vmul.f32 %v1166, %v1329
      %v1397 = vmul.f32 %v1167, %v1333
      %v1398 = vmul.f32 %v1168, %v1333
      %v1399 = vmul.f32 %v1169, %v1333
      %v1400 = vmul.f32 %v1170, %v1337
      %v1401 = vmul.f32 %v1171, %v1337
      %v1402 = vmul.f32 %v1172, %v1337
      %v1403 = vmul.f32 %v1173, %v1341
      %v1404 = vmul.f32 %v1174, %v1341
      %v1405 = vmul.f32 %v1175, %v1341
      %v1406 = vld [vmem:[%s3] sm:$0xff]
      %v1407 = vld [vmem:[%s3 + $0x8] sm:$0xff]
      %v1410 = vcombine.high %v1406, %v1406
      %v1412 = vunpack.c.l.s4 1966171168
      %v1413 = vunpack.c.0.s8 %v1412
      %v1414 = vlaneseq
      %v1415 = vshrl.u32 %v1414, 7
      %v1416 = vsub.s32 %v1413, %v1415
      %v1417 = vrot.slane %v1406, %v1416
      %v1419 = vunpack.c.l.s4 1966171168
      %v1420 = vunpack.c.0.s8 %v1419
      %v1421 = vlaneseq
      %v1422 = vshrl.u32 %v1421, 7
      %v1423 = vsub.s32 %v1420, %v1422
      %v1424 = vrot.slane %v1410, %v1423
      %v1425 = vcombine.high %v1417, %v1417
      %v1426 = vcombine.high %v1424, %v1424
      %v1428 = vunpack.c.l.s4 1966171168
      %v1429 = vunpack.c.0.s8 %v1428
      %v1430 = vlaneseq
      %v1431 = vshrl.u32 %v1430, 7
      %v1432 = vsub.s32 %v1429, %v1431
      %v1433 = vrot.slane %v1417, %v1432
      %v1435 = vunpack.c.l.s4 1966171168
      %v1436 = vunpack.c.0.s8 %v1435
      %v1437 = vlaneseq
      %v1438 = vshrl.u32 %v1437, 7
      %v1439 = vsub.s32 %v1436, %v1438
      %v1440 = vrot.slane %v1424, %v1439
      %v1442 = vunpack.c.l.s4 1966171168
      %v1443 = vunpack.c.0.s8 %v1442
      %v1444 = vlaneseq
      %v1445 = vshrl.u32 %v1444, 7
      %v1446 = vsub.s32 %v1443, %v1445
      %v1447 = vrot.slane %v1425, %v1446
      %v1449 = vunpack.c.l.s4 1966171168
      %v1450 = vunpack.c.0.s8 %v1449
      %v1451 = vlaneseq
      %v1452 = vshrl.u32 %v1451, 7
      %v1453 = vsub.s32 %v1450, %v1452
      %v1454 = vrot.slane %v1426, %v1453
      %v1455 = vcombine.high %v1433, %v1433
      %v1456 = vcombine.high %v1440, %v1440
      %v1457 = vcombine.high %v1447, %v1447
      %v1458 = vcombine.high %v1454, %v1454
      %v1459 = vcombine.high %v1407, %v1407
      %v1461 = vunpack.c.l.s4 1966171168
      %v1462 = vunpack.c.0.s8 %v1461
      %v1463 = vlaneseq
      %v1464 = vshrl.u32 %v1463, 7
      %v1465 = vsub.s32 %v1462, %v1464
      %v1466 = vrot.slane %v1407, %v1465
      %v1468 = vunpack.c.l.s4 1966171168
      %v1469 = vunpack.c.0.s8 %v1468
      %v1470 = vlaneseq
      %v1471 = vshrl.u32 %v1470, 7
      %v1472 = vsub.s32 %v1469, %v1471
      %v1473 = vrot.slane %v1459, %v1472
      %v1474 = vcombine.high %v1466, %v1466
      %v1475 = vcombine.high %v1473, %v1473
      %v1477 = vunpack.c.l.s4 1966171168
      %v1478 = vunpack.c.0.s8 %v1477
      %v1479 = vlaneseq
      %v1480 = vshrl.u32 %v1479, 7
      %v1481 = vsub.s32 %v1478, %v1480
      %v1482 = vrot.slane %v1466, %v1481
      %v1484 = vunpack.c.l.s4 1966171168
      %v1485 = vunpack.c.0.s8 %v1484
      %v1486 = vlaneseq
      %v1487 = vshrl.u32 %v1486, 7
      %v1488 = vsub.s32 %v1485, %v1487
      %v1489 = vrot.slane %v1473, %v1488
      %v1491 = vunpack.c.l.s4 1966171168
      %v1492 = vunpack.c.0.s8 %v1491
      %v1493 = vlaneseq
      %v1494 = vshrl.u32 %v1493, 7
      %v1495 = vsub.s32 %v1492, %v1494
      %v1496 = vrot.slane %v1474, %v1495
      %v1498 = vunpack.c.l.s4 1966171168
      %v1499 = vunpack.c.0.s8 %v1498
      %v1500 = vlaneseq
      %v1501 = vshrl.u32 %v1500, 7
      %v1502 = vsub.s32 %v1499, %v1501
      %v1503 = vrot.slane %v1475, %v1502
      %v1504 = vcombine.high %v1482, %v1482
      %v1505 = vcombine.high %v1489, %v1489
      %v1506 = vcombine.high %v1496, %v1496
      %v1507 = vcombine.high %v1503, %v1503
      %v1508 = vlaneseq
      %v1509 = vshrl.u32 %v1508, 7
      %v1510 = vsub.s32 0, %v1509
      %v1511 = vrot.slane %v1433, %v1510
      %v1512 = vlaneseq
      %v1513 = vshrl.u32 %v1512, 7
      %v1514 = vsub.s32 0, %v1513
      %v1515 = vrot.slane %v1447, %v1514
      %v1516 = vlaneseq
      %v1517 = vshrl.u32 %v1516, 7
      %v1518 = vsub.s32 0, %v1517
      %v1519 = vrot.slane %v1455, %v1518
      %v1520 = vlaneseq
      %v1521 = vshrl.u32 %v1520, 7
      %v1522 = vsub.s32 0, %v1521
      %v1523 = vrot.slane %v1457, %v1522
      %v1524 = vlaneseq
      %v1525 = vshrl.u32 %v1524, 7
      %v1526 = vsub.s32 0, %v1525
      %v1527 = vrot.slane %v1440, %v1526
      %v1528 = vlaneseq
      %v1529 = vshrl.u32 %v1528, 7
      %v1530 = vsub.s32 0, %v1529
      %v1531 = vrot.slane %v1454, %v1530
      %v1532 = vlaneseq
      %v1533 = vshrl.u32 %v1532, 7
      %v1534 = vsub.s32 0, %v1533
      %v1535 = vrot.slane %v1456, %v1534
      %v1536 = vlaneseq
      %v1537 = vshrl.u32 %v1536, 7
      %v1538 = vsub.s32 0, %v1537
      %v1539 = vrot.slane %v1458, %v1538
      %v1540 = vlaneseq
      %v1541 = vshrl.u32 %v1540, 7
      %v1542 = vsub.s32 0, %v1541
      %v1543 = vrot.slane %v1482, %v1542
      %v1544 = vlaneseq
      %v1545 = vshrl.u32 %v1544, 7
      %v1546 = vsub.s32 0, %v1545
      %v1547 = vrot.slane %v1496, %v1546
      %v1548 = vlaneseq
      %v1549 = vshrl.u32 %v1548, 7
      %v1550 = vsub.s32 0, %v1549
      %v1551 = vrot.slane %v1504, %v1550
      %v1552 = vlaneseq
      %v1553 = vshrl.u32 %v1552, 7
      %v1554 = vsub.s32 0, %v1553
      %v1555 = vrot.slane %v1506, %v1554
      %v1556 = vlaneseq
      %v1557 = vshrl.u32 %v1556, 7
      %v1558 = vsub.s32 0, %v1557
      %v1559 = vrot.slane %v1489, %v1558
      %v1560 = vlaneseq
      %v1561 = vshrl.u32 %v1560, 7
      %v1562 = vsub.s32 0, %v1561
      %v1563 = vrot.slane %v1503, %v1562
      %v1564 = vlaneseq
      %v1565 = vshrl.u32 %v1564, 7
      %v1566 = vsub.s32 0, %v1565
      %v1567 = vrot.slane %v1505, %v1566
      %v1568 = vlaneseq
      %v1569 = vshrl.u32 %v1568, 7
      %v1570 = vsub.s32 0, %v1569
      %v1571 = vrot.slane %v1507, %v1570
      %v1588 = vadd.f32 %v1358, %v1511
      %v1589 = vadd.f32 %v1359, %v1511
      %v1590 = vadd.f32 %v1360, %v1511
      %v1591 = vadd.f32 %v1361, %v1515
      %v1592 = vadd.f32 %v1362, %v1515
      %v1593 = vadd.f32 %v1363, %v1515
      %v1594 = vadd.f32 %v1364, %v1519
      %v1595 = vadd.f32 %v1365, %v1519
      %v1596 = vadd.f32 %v1366, %v1519
      %v1597 = vadd.f32 %v1367, %v1523
      %v1598 = vadd.f32 %v1368, %v1523
      %v1599 = vadd.f32 %v1369, %v1523
      %v1600 = vadd.f32 %v1370, %v1527
      %v1601 = vadd.f32 %v1371, %v1527
      %v1602 = vadd.f32 %v1372, %v1527
      %v1603 = vadd.f32 %v1373, %v1531
      %v1604 = vadd.f32 %v1374, %v1531
      %v1605 = vadd.f32 %v1375, %v1531
      %v1606 = vadd.f32 %v1376, %v1535
      %v1607 = vadd.f32 %v1377, %v1535
      %v1608 = vadd.f32 %v1378, %v1535
      %v1609 = vadd.f32 %v1379, %v1539
      %v1610 = vadd.f32 %v1380, %v1539
      %v1611 = vadd.f32 %v1381, %v1539
      %v1612 = vadd.f32 %v1382, %v1543
      %v1613 = vadd.f32 %v1383, %v1543
      %v1614 = vadd.f32 %v1384, %v1543
      %v1615 = vadd.f32 %v1385, %v1547
      %v1616 = vadd.f32 %v1386, %v1547
      %v1617 = vadd.f32 %v1387, %v1547
      %v1618 = vadd.f32 %v1388, %v1551
      %v1619 = vadd.f32 %v1389, %v1551
      %v1620 = vadd.f32 %v1390, %v1551
      %v1621 = vadd.f32 %v1391, %v1555
      %v1622 = vadd.f32 %v1392, %v1555
      %v1623 = vadd.f32 %v1393, %v1555
      %v1624 = vadd.f32 %v1394, %v1559
      %v1625 = vadd.f32 %v1395, %v1559
      %v1626 = vadd.f32 %v1396, %v1559
      %v1627 = vadd.f32 %v1397, %v1563
      %v1628 = vadd.f32 %v1398, %v1563
      %v1629 = vadd.f32 %v1399, %v1563
      %v1630 = vadd.f32 %v1400, %v1567
      %v1631 = vadd.f32 %v1401, %v1567
      %v1632 = vadd.f32 %v1402, %v1567
      %v1633 = vadd.f32 %v1403, %v1571
      %v1634 = vadd.f32 %v1404, %v1571
      %v1635 = vadd.f32 %v1405, %v1571
      %vm1685 = vcmask 1040384
      %v1686 = vrot.slane 0.0, 7
      %v1687 = vsel %vm1685, %v1686, %v1686
      %v1688 = vrot.slane %v1588, 7
      %v1689 = vrot.slane %v1589, 7
      %v1690 = vsel %vm1685, %v1688, %v1689
      %v1691 = vrot.slane %v1590, 7
      %v1692 = vsel %vm1685, %v1689, %v1691
      %v1693 = vrot.slane %v1591, 7
      %v1694 = vrot.slane %v1592, 7
      %v1695 = vsel %vm1685, %v1693, %v1694
      %v1696 = vrot.slane %v1593, 7
      %v1697 = vsel %vm1685, %v1694, %v1696
      %v1698 = vrot.slane %v1594, 7
      %v1699 = vrot.slane %v1595, 7
      %v1700 = vsel %vm1685, %v1698, %v1699
      %v1701 = vrot.slane %v1596, 7
      %v1702 = vsel %vm1685, %v1699, %v1701
      %v1703 = vrot.slane %v1597, 7
      %v1704 = vrot.slane %v1598, 7
      %v1705 = vsel %vm1685, %v1703, %v1704
      %v1706 = vrot.slane %v1599, 7
      %v1707 = vsel %vm1685, %v1704, %v1706
      %v1708 = vrot.slane %v1600, 7
      %v1709 = vrot.slane %v1601, 7
      %v1710 = vsel %vm1685, %v1708, %v1709
      %v1711 = vrot.slane %v1602, 7
      %v1712 = vsel %vm1685, %v1709, %v1711
      %v1713 = vrot.slane %v1603, 7
      %v1714 = vrot.slane %v1604, 7
      %v1715 = vsel %vm1685, %v1713, %v1714
      %v1716 = vrot.slane %v1605, 7
      %v1717 = vsel %vm1685, %v1714, %v1716
      %v1718 = vrot.slane %v1606, 7
      %v1719 = vrot.slane %v1607, 7
      %v1720 = vsel %vm1685, %v1718, %v1719
      %v1721 = vrot.slane %v1608, 7
      %v1722 = vsel %vm1685, %v1719, %v1721
      %v1723 = vrot.slane %v1609, 7
      %v1724 = vrot.slane %v1610, 7
      %v1725 = vsel %vm1685, %v1723, %v1724
      %v1726 = vrot.slane %v1611, 7
      %v1727 = vsel %vm1685, %v1724, %v1726
      %v1728 = vrot.slane %v1612, 7
      %v1729 = vrot.slane %v1613, 7
      %v1730 = vsel %vm1685, %v1728, %v1729
      %v1731 = vrot.slane %v1614, 7
      %v1732 = vsel %vm1685, %v1729, %v1731
      %v1733 = vrot.slane %v1615, 7
      %v1734 = vrot.slane %v1616, 7
      %v1735 = vsel %vm1685, %v1733, %v1734
      %v1736 = vrot.slane %v1617, 7
      %v1737 = vsel %vm1685, %v1734, %v1736
      %v1738 = vrot.slane %v1618, 7
      %v1739 = vrot.slane %v1619, 7
      %v1740 = vsel %vm1685, %v1738, %v1739
      %v1741 = vrot.slane %v1620, 7
      %v1742 = vsel %vm1685, %v1739, %v1741
      %v1743 = vrot.slane %v1621, 7
      %v1744 = vrot.slane %v1622, 7
      %v1745 = vsel %vm1685, %v1743, %v1744
      %v1746 = vrot.slane %v1623, 7
      %v1747 = vsel %vm1685, %v1744, %v1746
      %v1748 = vrot.slane %v1624, 7
      %v1749 = vrot.slane %v1625, 7
      %v1750 = vsel %vm1685, %v1748, %v1749
      %v1751 = vrot.slane %v1626, 7
      %v1752 = vsel %vm1685, %v1749, %v1751
      %v1753 = vrot.slane %v1627, 7
      %v1754 = vrot.slane %v1628, 7
      %v1755 = vsel %vm1685, %v1753, %v1754
      %v1756 = vrot.slane %v1629, 7
      %v1757 = vsel %vm1685, %v1754, %v1756
      %v1758 = vrot.slane %v1630, 7
      %v1759 = vrot.slane %v1631, 7
      %v1760 = vsel %vm1685, %v1758, %v1759
      %v1761 = vrot.slane %v1632, 7
      %v1762 = vsel %vm1685, %v1759, %v1761
      %v1763 = vrot.slane %v1633, 7
      %v1764 = vrot.slane %v1634, 7
      %v1765 = vsel %vm1685, %v1763, %v1764
      %v1766 = vrot.slane %v1635, 7
      %v1767 = vsel %vm1685, %v1764, %v1766
      %v1832 = vsel %vm1685, 0.0, %v1686
      %v1833 = vsel %vm1685, 0.0, %v1688
      %v1834 = vsel %vm1685, 0.0, %v1693
      %v1835 = vsel %vm1685, 0.0, %v1698
      %v1836 = vsel %vm1685, 0.0, %v1703
      %v1837 = vsel %vm1685, 0.0, %v1708
      %v1838 = vsel %vm1685, 0.0, %v1713
      %v1839 = vsel %vm1685, 0.0, %v1718
      %v1840 = vsel %vm1685, 0.0, %v1723
      %v1841 = vsel %vm1685, 0.0, %v1728
      %v1842 = vsel %vm1685, 0.0, %v1733
      %v1843 = vsel %vm1685, 0.0, %v1738
      %v1844 = vsel %vm1685, 0.0, %v1743
      %v1845 = vsel %vm1685, 0.0, %v1748
      %v1846 = vsel %vm1685, 0.0, %v1753
      %v1847 = vsel %vm1685, 0.0, %v1758
      %v1848 = vsel %vm1685, 0.0, %v1763
      %v1849 = vsel %vm1685, %v1686, 0.0
      %v1850 = vsel %vm1685, %v1691, 0.0
      %v1851 = vsel %vm1685, %v1696, 0.0
      %v1852 = vsel %vm1685, %v1701, 0.0
      %v1853 = vsel %vm1685, %v1706, 0.0
      %v1854 = vsel %vm1685, %v1711, 0.0
      %v1855 = vsel %vm1685, %v1716, 0.0
      %v1856 = vsel %vm1685, %v1721, 0.0
      %v1857 = vsel %vm1685, %v1726, 0.0
      %v1858 = vsel %vm1685, %v1731, 0.0
      %v1859 = vsel %vm1685, %v1736, 0.0
      %v1860 = vsel %vm1685, %v1741, 0.0
      %v1861 = vsel %vm1685, %v1746, 0.0
      %v1862 = vsel %vm1685, %v1751, 0.0
      %v1863 = vsel %vm1685, %v1756, 0.0
      %v1864 = vsel %vm1685, %v1761, 0.0
      %v1865 = vsel %vm1685, %v1766, 0.0
      %vm1898 = vcmask 1046528
      %v1899 = vrot.slane %v1832, 1
      %v1900 = vrot.slane %v1687, 1
      %v1901 = vsel %vm1898, %v1899, %v1900
      %v1902 = vsel %vm1898, %v1900, %v1900
      %v1903 = vrot.slane %v1849, 1
      %v1904 = vsel %vm1898, %v1900, %v1903
      %v1905 = vrot.slane %v1833, 1
      %v1906 = vrot.slane %v1690, 1
      %v1907 = vsel %vm1898, %v1905, %v1906
      %v1908 = vrot.slane %v1692, 1
      %v1909 = vsel %vm1898, %v1906, %v1908
      %v1910 = vrot.slane %v1850, 1
      %v1911 = vsel %vm1898, %v1908, %v1910
      %v1912 = vrot.slane %v1834, 1
      %v1913 = vrot.slane %v1695, 1
      %v1914 = vsel %vm1898, %v1912, %v1913
      %v1915 = vrot.slane %v1697, 1
      %v1916 = vsel %vm1898, %v1913, %v1915
      %v1917 = vrot.slane %v1851, 1
      %v1918 = vsel %vm1898, %v1915, %v1917
      %v1919 = vrot.slane %v1835, 1
      %v1920 = vrot.slane %v1700, 1
      %v1921 = vsel %vm1898, %v1919, %v1920
      %v1922 = vrot.slane %v1702, 1
      %v1923 = vsel %vm1898, %v1920, %v1922
      %v1924 = vrot.slane %v1852, 1
      %v1925 = vsel %vm1898, %v1922, %v1924
      %v1926 = vrot.slane %v1836, 1
      %v1927 = vrot.slane %v1705, 1
      %v1928 = vsel %vm1898, %v1926, %v1927
      %v1929 = vrot.slane %v1707, 1
      %v1930 = vsel %vm1898, %v1927, %v1929
      %v1931 = vrot.slane %v1853, 1
      %v1932 = vsel %vm1898, %v1929, %v1931
      %v1933 = vrot.slane %v1837, 1
      %v1934 = vrot.slane %v1710, 1
      %v1935 = vsel %vm1898, %v1933, %v1934
      %v1936 = vrot.slane %v1712, 1
      %v1937 = vsel %vm1898, %v1934, %v1936
      %v1938 = vrot.slane %v1854, 1
      %v1939 = vsel %vm1898, %v1936, %v1938
      %v1940 = vrot.slane %v1838, 1
      %v1941 = vrot.slane %v1715, 1
      %v1942 = vsel %vm1898, %v1940, %v1941
      %v1943 = vrot.slane %v1717, 1
      %v1944 = vsel %vm1898, %v1941, %v1943
      %v1945 = vrot.slane %v1855, 1
      %v1946 = vsel %vm1898, %v1943, %v1945
      %v1947 = vrot.slane %v1839, 1
      %v1948 = vrot.slane %v1720, 1
      %v1949 = vsel %vm1898, %v1947, %v1948
      %v1950 = vrot.slane %v1722, 1
      %v1951 = vsel %vm1898, %v1948, %v1950
      %v1952 = vrot.slane %v1856, 1
      %v1953 = vsel %vm1898, %v1950, %v1952
      %v1954 = vrot.slane %v1840, 1
      %v1955 = vrot.slane %v1725, 1
      %v1956 = vsel %vm1898, %v1954, %v1955
      %v1957 = vrot.slane %v1727, 1
      %v1958 = vsel %vm1898, %v1955, %v1957
      %v1959 = vrot.slane %v1857, 1
      %v1960 = vsel %vm1898, %v1957, %v1959
      %v1961 = vrot.slane %v1841, 1
      %v1962 = vrot.slane %v1730, 1
      %v1963 = vsel %vm1898, %v1961, %v1962
      %v1964 = vrot.slane %v1732, 1
      %v1965 = vsel %vm1898, %v1962, %v1964
      %v1966 = vrot.slane %v1858, 1
      %v1967 = vsel %vm1898, %v1964, %v1966
      %v1968 = vrot.slane %v1842, 1
      %v1969 = vrot.slane %v1735, 1
      %v1970 = vsel %vm1898, %v1968, %v1969
      %v1971 = vrot.slane %v1737, 1
      %v1972 = vsel %vm1898, %v1969, %v1971
      %v1973 = vrot.slane %v1859, 1
      %v1974 = vsel %vm1898, %v1971, %v1973
      %v1975 = vrot.slane %v1843, 1
      %v1976 = vrot.slane %v1740, 1
      %v1977 = vsel %vm1898, %v1975, %v1976
      %v1978 = vrot.slane %v1742, 1
      %v1979 = vsel %vm1898, %v1976, %v1978
      %v1980 = vrot.slane %v1860, 1
      %v1981 = vsel %vm1898, %v1978, %v1980
      %v1982 = vrot.slane %v1844, 1
      %v1983 = vrot.slane %v1745, 1
      %v1984 = vsel %vm1898, %v1982, %v1983
      %v1985 = vrot.slane %v1747, 1
      %v1986 = vsel %vm1898, %v1983, %v1985
      %v1987 = vrot.slane %v1861, 1
      %v1988 = vsel %vm1898, %v1985, %v1987
      %v1989 = vrot.slane %v1845, 1
      %v1990 = vrot.slane %v1750, 1
      %v1991 = vsel %vm1898, %v1989, %v1990
      %v1992 = vrot.slane %v1752, 1
      %v1993 = vsel %vm1898, %v1990, %v1992
      %v1994 = vrot.slane %v1862, 1
      %v1995 = vsel %vm1898, %v1992, %v1994
      %v1996 = vrot.slane %v1846, 1
      %v1997 = vrot.slane %v1755, 1
      %v1998 = vsel %vm1898, %v1996, %v1997
      %v1999 = vrot.slane %v1757, 1
      %v2000 = vsel %vm1898, %v1997, %v1999
      %v2001 = vrot.slane %v1863, 1
      %v2002 = vsel %vm1898, %v1999, %v2001
      %v2003 = vrot.slane %v1847, 1
      %v2004 = vrot.slane %v1760, 1
      %v2005 = vsel %vm1898, %v2003, %v2004
      %v2006 = vrot.slane %v1762, 1
      %v2007 = vsel %vm1898, %v2004, %v2006
      %v2008 = vrot.slane %v1864, 1
      %v2009 = vsel %vm1898, %v2006, %v2008
      %2010 = vrot.lane.b32.xlu0 %v1901, 12
      %v2011 = vpop.permute.xlu0 %2010
      %2012 = vrot.lane.b32.xlu0 %v1902, 12
      %v2013 = vpop.permute.xlu0 %2012
      %2014 = vrot.lane.b32.xlu0 %v1904, 12
      %v2015 = vpop.permute.xlu0 %2014
      %2016 = vrot.lane.b32.xlu0 %v1907, 12
      %v2017 = vpop.permute.xlu0 %2016
      %2018 = vrot.lane.b32.xlu0 %v1909, 12
      %v2019 = vpop.permute.xlu0 %2018
      %2020 = vrot.lane.b32.xlu0 %v1911, 12
      %v2021 = vpop.permute.xlu0 %2020
      %2022 = vrot.lane.b32.xlu0 %v1914, 12
      %v2023 = vpop.permute.xlu0 %2022
      %2024 = vrot.lane.b32.xlu0 %v1916, 12
      %v2025 = vpop.permute.xlu0 %2024
      %2026 = vrot.lane.b32.xlu0 %v1918, 12
      %v2027 = vpop.permute.xlu0 %2026
      %2028 = vrot.lane.b32.xlu0 %v1921, 12
      %v2029 = vpop.permute.xlu0 %2028
      %2030 = vrot.lane.b32.xlu0 %v1923, 12
      %v2031 = vpop.permute.xlu0 %2030
      %2032 = vrot.lane.b32.xlu0 %v1925, 12
      %v2033 = vpop.permute.xlu0 %2032
      %2034 = vrot.lane.b32.xlu0 %v1928, 12
      %v2035 = vpop.permute.xlu0 %2034
      %2036 = vrot.lane.b32.xlu0 %v1930, 12
      %v2037 = vpop.permute.xlu0 %2036
      %2038 = vrot.lane.b32.xlu0 %v1932, 12
      %v2039 = vpop.permute.xlu0 %2038
      %2040 = vrot.lane.b32.xlu0 %v1935, 12
      %v2041 = vpop.permute.xlu0 %2040
      %2042 = vrot.lane.b32.xlu0 %v1937, 12
      %v2043 = vpop.permute.xlu0 %2042
      %2044 = vrot.lane.b32.xlu0 %v1939, 12
      %v2045 = vpop.permute.xlu0 %2044
      %2046 = vrot.lane.b32.xlu0 %v1942, 12
      %v2047 = vpop.permute.xlu0 %2046
      %2048 = vrot.lane.b32.xlu0 %v1944, 12
      %v2049 = vpop.permute.xlu0 %2048
      %2050 = vrot.lane.b32.xlu0 %v1946, 12
      %v2051 = vpop.permute.xlu0 %2050
      %2052 = vrot.lane.b32.xlu0 %v1949, 12
      %v2053 = vpop.permute.xlu0 %2052
      %2054 = vrot.lane.b32.xlu0 %v1951, 12
      %v2055 = vpop.permute.xlu0 %2054
      %2056 = vrot.lane.b32.xlu0 %v1953, 12
      %v2057 = vpop.permute.xlu0 %2056
      %2058 = vrot.lane.b32.xlu0 %v1956, 12
      %v2059 = vpop.permute.xlu0 %2058
      %2060 = vrot.lane.b32.xlu0 %v1958, 12
      %v2061 = vpop.permute.xlu0 %2060
      %2062 = vrot.lane.b32.xlu0 %v1960, 12
      %v2063 = vpop.permute.xlu0 %2062
      %2064 = vrot.lane.b32.xlu0 %v1963, 12
      %v2065 = vpop.permute.xlu0 %2064
      %2066 = vrot.lane.b32.xlu0 %v1965, 12
      %v2067 = vpop.permute.xlu0 %2066
      %2068 = vrot.lane.b32.xlu0 %v1967, 12
      %v2069 = vpop.permute.xlu0 %2068
      %2070 = vrot.lane.b32.xlu0 %v1970, 12
      %v2071 = vpop.permute.xlu0 %2070
      %2072 = vrot.lane.b32.xlu0 %v1972, 12
      %v2073 = vpop.permute.xlu0 %2072
      %2074 = vrot.lane.b32.xlu0 %v1974, 12
      %v2075 = vpop.permute.xlu0 %2074
      %2076 = vrot.lane.b32.xlu0 %v1977, 12
      %v2077 = vpop.permute.xlu0 %2076
      %2078 = vrot.lane.b32.xlu0 %v1979, 12
      %v2079 = vpop.permute.xlu0 %2078
      %2080 = vrot.lane.b32.xlu0 %v1981, 12
      %v2081 = vpop.permute.xlu0 %2080
      %2082 = vrot.lane.b32.xlu0 %v1984, 12
      %v2083 = vpop.permute.xlu0 %2082
      %2084 = vrot.lane.b32.xlu0 %v1986, 12
      %v2085 = vpop.permute.xlu0 %2084
      %2086 = vrot.lane.b32.xlu0 %v1988, 12
      %v2087 = vpop.permute.xlu0 %2086
      %2088 = vrot.lane.b32.xlu0 %v1991, 12
      %v2089 = vpop.permute.xlu0 %2088
      %2090 = vrot.lane.b32.xlu0 %v1993, 12
      %v2091 = vpop.permute.xlu0 %2090
      %2092 = vrot.lane.b32.xlu0 %v1995, 12
      %v2093 = vpop.permute.xlu0 %2092
      %2094 = vrot.lane.b32.xlu0 %v1998, 12
      %v2095 = vpop.permute.xlu0 %2094
      %2096 = vrot.lane.b32.xlu0 %v2000, 12
      %v2097 = vpop.permute.xlu0 %2096
      %2098 = vrot.lane.b32.xlu0 %v2002, 12
      %v2099 = vpop.permute.xlu0 %2098
      %2100 = vrot.lane.b32.xlu0 %v2005, 12
      %v2101 = vpop.permute.xlu0 %2100
      %2102 = vrot.lane.b32.xlu0 %v2007, 12
      %v2103 = vpop.permute.xlu0 %2102
      %2104 = vrot.lane.b32.xlu0 %v2009, 12
      %v2105 = vpop.permute.xlu0 %2104
      %vm2154 = vcmask 1045504
      %v2155 = vrot.slane %v1832, 2
      %v2156 = vrot.slane %v1687, 2
      %v2157 = vsel %vm2154, %v2155, %v2156
      %v2158 = vsel %vm2154, %v2156, %v2156
      %v2159 = vrot.slane %v1849, 2
      %v2160 = vsel %vm2154, %v2156, %v2159
      %v2161 = vrot.slane %v1833, 2
      %v2162 = vrot.slane %v1690, 2
      %v2163 = vsel %vm2154, %v2161, %v2162
      %v2164 = vrot.slane %v1692, 2
      %v2165 = vsel %vm2154, %v2162, %v2164
      %v2166 = vrot.slane %v1850, 2
      %v2167 = vsel %vm2154, %v2164, %v2166
      %v2168 = vrot.slane %v1834, 2
      %v2169 = vrot.slane %v1695, 2
      %v2170 = vsel %vm2154, %v2168, %v2169
      %v2171 = vrot.slane %v1697, 2
      %v2172 = vsel %vm2154, %v2169, %v2171
      %v2173 = vrot.slane %v1851, 2
      %v2174 = vsel %vm2154, %v2171, %v2173
      %v2175 = vrot.slane %v1835, 2
      %v2176 = vrot.slane %v1700, 2
      %v2177 = vsel %vm2154, %v2175, %v2176
      %v2178 = vrot.slane %v1702, 2
      %v2179 = vsel %vm2154, %v2176, %v2178
      %v2180 = vrot.slane %v1852, 2
      %v2181 = vsel %vm2154, %v2178, %v2180
      %v2182 = vrot.slane %v1836, 2
      %v2183 = vrot.slane %v1705, 2
      %v2184 = vsel %vm2154, %v2182, %v2183
      %v2185 = vrot.slane %v1707, 2
      %v2186 = vsel %vm2154, %v2183, %v2185
      %v2187 = vrot.slane %v1853, 2
      %v2188 = vsel %vm2154, %v2185, %v2187
      %v2189 = vrot.slane %v1837, 2
      %v2190 = vrot.slane %v1710, 2
      %v2191 = vsel %vm2154, %v2189, %v2190
      %v2192 = vrot.slane %v1712, 2
      %v2193 = vsel %vm2154, %v2190, %v2192
      %v2194 = vrot.slane %v1854, 2
      %v2195 = vsel %vm2154, %v2192, %v2194
      %v2196 = vrot.slane %v1838, 2
      %v2197 = vrot.slane %v1715, 2
      %v2198 = vsel %vm2154, %v2196, %v2197
      %v2199 = vrot.slane %v1717, 2
      %v2200 = vsel %vm2154, %v2197, %v2199
      %v2201 = vrot.slane %v1855, 2
      %v2202 = vsel %vm2154, %v2199, %v2201
      %v2203 = vrot.slane %v1839, 2
      %v2204 = vrot.slane %v1720, 2
      %v2205 = vsel %vm2154, %v2203, %v2204
      %v2206 = vrot.slane %v1722, 2
      %v2207 = vsel %vm2154, %v2204, %v2206
      %v2208 = vrot.slane %v1856, 2
      %v2209 = vsel %vm2154, %v2206, %v2208
      %v2210 = vrot.slane %v1840, 2
      %v2211 = vrot.slane %v1725, 2
      %v2212 = vsel %vm2154, %v2210, %v2211
      %v2213 = vrot.slane %v1727, 2
      %v2214 = vsel %vm2154, %v2211, %v2213
      %v2215 = vrot.slane %v1857, 2
      %v2216 = vsel %vm2154, %v2213, %v2215
      %v2217 = vrot.slane %v1841, 2
      %v2218 = vrot.slane %v1730, 2
      %v2219 = vsel %vm2154, %v2217, %v2218
      %v2220 = vrot.slane %v1732, 2
      %v2221 = vsel %vm2154, %v2218, %v2220
      %v2222 = vrot.slane %v1858, 2
      %v2223 = vsel %vm2154, %v2220, %v2222
      %v2224 = vrot.slane %v1842, 2
      %v2225 = vrot.slane %v1735, 2
      %v2226 = vsel %vm2154, %v2224, %v2225
      %v2227 = vrot.slane %v1737, 2
      %v2228 = vsel %vm2154, %v2225, %v2227
      %v2229 = vrot.slane %v1859, 2
      %v2230 = vsel %vm2154, %v2227, %v2229
      %v2231 = vrot.slane %v1843, 2
      %v2232 = vrot.slane %v1740, 2
      %v2233 = vsel %vm2154, %v2231, %v2232
      %v2234 = vrot.slane %v1742, 2
      %v2235 = vsel %vm2154, %v2232, %v2234
      %v2236 = vrot.slane %v1860, 2
      %v2237 = vsel %vm2154, %v2234, %v2236
      %v2238 = vrot.slane %v1844, 2
      %v2239 = vrot.slane %v1745, 2
      %v2240 = vsel %vm2154, %v2238, %v2239
      %v2241 = vrot.slane %v1747, 2
      %v2242 = vsel %vm2154, %v2239, %v2241
      %v2243 = vrot.slane %v1861, 2
      %v2244 = vsel %vm2154, %v2241, %v2243
      %v2245 = vrot.slane %v1845, 2
      %v2246 = vrot.slane %v1750, 2
      %v2247 = vsel %vm2154, %v2245, %v2246
      %v2248 = vrot.slane %v1752, 2
      %v2249 = vsel %vm2154, %v2246, %v2248
      %v2250 = vrot.slane %v1862, 2
      %v2251 = vsel %vm2154, %v2248, %v2250
      %v2252 = vrot.slane %v1846, 2
      %v2253 = vrot.slane %v1755, 2
      %v2254 = vsel %vm2154, %v2252, %v2253
      %v2255 = vrot.slane %v1757, 2
      %v2256 = vsel %vm2154, %v2253, %v2255
      %v2257 = vrot.slane %v1863, 2
      %v2258 = vsel %vm2154, %v2255, %v2257
      %v2259 = vrot.slane %v1847, 2
      %v2260 = vrot.slane %v1760, 2
      %v2261 = vsel %vm2154, %v2259, %v2260
      %v2262 = vrot.slane %v1762, 2
      %v2263 = vsel %vm2154, %v2260, %v2262
      %v2264 = vrot.slane %v1864, 2
      %v2265 = vsel %vm2154, %v2262, %v2264
      %2266 = vrot.lane.b32.xlu0 %v2157, 24
      %v2267 = vpop.permute.xlu0 %2266
      %2268 = vrot.lane.b32.xlu0 %v2158, 24
      %v2269 = vpop.permute.xlu0 %2268
      %2270 = vrot.lane.b32.xlu0 %v2160, 24
      %v2271 = vpop.permute.xlu0 %2270
      %2272 = vrot.lane.b32.xlu0 %v2163, 24
      %v2273 = vpop.permute.xlu0 %2272
      %2274 = vrot.lane.b32.xlu0 %v2165, 24
      %v2275 = vpop.permute.xlu0 %2274
      %2276 = vrot.lane.b32.xlu0 %v2167, 24
      %v2277 = vpop.permute.xlu0 %2276
      %2278 = vrot.lane.b32.xlu0 %v2170, 24
      %v2279 = vpop.permute.xlu0 %2278
      %2280 = vrot.lane.b32.xlu0 %v2172, 24
      %v2281 = vpop.permute.xlu0 %2280
      %2282 = vrot.lane.b32.xlu0 %v2174, 24
      %v2283 = vpop.permute.xlu0 %2282
      %2284 = vrot.lane.b32.xlu0 %v2177, 24
      %v2285 = vpop.permute.xlu0 %2284
      %2286 = vrot.lane.b32.xlu0 %v2179, 24
      %v2287 = vpop.permute.xlu0 %2286
      %2288 = vrot.lane.b32.xlu0 %v2181, 24
      %v2289 = vpop.permute.xlu0 %2288
      %2290 = vrot.lane.b32.xlu0 %v2184, 24
      %v2291 = vpop.permute.xlu0 %2290
      %2292 = vrot.lane.b32.xlu0 %v2186, 24
      %v2293 = vpop.permute.xlu0 %2292
      %2294 = vrot.lane.b32.xlu0 %v2188, 24
      %v2295 = vpop.permute.xlu0 %2294
      %2296 = vrot.lane.b32.xlu0 %v2191, 24
      %v2297 = vpop.permute.xlu0 %2296
      %2298 = vrot.lane.b32.xlu0 %v2193, 24
      %v2299 = vpop.permute.xlu0 %2298
      %2300 = vrot.lane.b32.xlu0 %v2195, 24
      %v2301 = vpop.permute.xlu0 %2300
      %2302 = vrot.lane.b32.xlu0 %v2198, 24
      %v2303 = vpop.permute.xlu0 %2302
      %2304 = vrot.lane.b32.xlu0 %v2200, 24
      %v2305 = vpop.permute.xlu0 %2304
      %2306 = vrot.lane.b32.xlu0 %v2202, 24
      %v2307 = vpop.permute.xlu0 %2306
      %2308 = vrot.lane.b32.xlu0 %v2205, 24
      %v2309 = vpop.permute.xlu0 %2308
      %2310 = vrot.lane.b32.xlu0 %v2207, 24
      %v2311 = vpop.permute.xlu0 %2310
      %2312 = vrot.lane.b32.xlu0 %v2209, 24
      %v2313 = vpop.permute.xlu0 %2312
      %2314 = vrot.lane.b32.xlu0 %v2212, 24
      %v2315 = vpop.permute.xlu0 %2314
      %2316 = vrot.lane.b32.xlu0 %v2214, 24
      %v2317 = vpop.permute.xlu0 %2316
      %2318 = vrot.lane.b32.xlu0 %v2216, 24
      %v2319 = vpop.permute.xlu0 %2318
      %2320 = vrot.lane.b32.xlu0 %v2219, 24
      %v2321 = vpop.permute.xlu0 %2320
      %2322 = vrot.lane.b32.xlu0 %v2221, 24
      %v2323 = vpop.permute.xlu0 %2322
      %2324 = vrot.lane.b32.xlu0 %v2223, 24
      %v2325 = vpop.permute.xlu0 %2324
      %2326 = vrot.lane.b32.xlu0 %v2226, 24
      %v2327 = vpop.permute.xlu0 %2326
      %2328 = vrot.lane.b32.xlu0 %v2228, 24
      %v2329 = vpop.permute.xlu0 %2328
      %2330 = vrot.lane.b32.xlu0 %v2230, 24
      %v2331 = vpop.permute.xlu0 %2330
      %2332 = vrot.lane.b32.xlu0 %v2233, 24
      %v2333 = vpop.permute.xlu0 %2332
      %2334 = vrot.lane.b32.xlu0 %v2235, 24
      %v2335 = vpop.permute.xlu0 %2334
      %2336 = vrot.lane.b32.xlu0 %v2237, 24
      %v2337 = vpop.permute.xlu0 %2336
      %2338 = vrot.lane.b32.xlu0 %v2240, 24
      %v2339 = vpop.permute.xlu0 %2338
      %2340 = vrot.lane.b32.xlu0 %v2242, 24
      %v2341 = vpop.permute.xlu0 %2340
      %2342 = vrot.lane.b32.xlu0 %v2244, 24
      %v2343 = vpop.permute.xlu0 %2342
      %2344 = vrot.lane.b32.xlu0 %v2247, 24
      %v2345 = vpop.permute.xlu0 %2344
      %2346 = vrot.lane.b32.xlu0 %v2249, 24
      %v2347 = vpop.permute.xlu0 %2346
      %2348 = vrot.lane.b32.xlu0 %v2251, 24
      %v2349 = vpop.permute.xlu0 %2348
      %2350 = vrot.lane.b32.xlu0 %v2254, 24
      %v2351 = vpop.permute.xlu0 %2350
      %2352 = vrot.lane.b32.xlu0 %v2256, 24
      %v2353 = vpop.permute.xlu0 %2352
      %2354 = vrot.lane.b32.xlu0 %v2258, 24
      %v2355 = vpop.permute.xlu0 %2354
      %2356 = vrot.lane.b32.xlu0 %v2261, 24
      %v2357 = vpop.permute.xlu0 %2356
      %2358 = vrot.lane.b32.xlu0 %v2263, 24
      %v2359 = vpop.permute.xlu0 %2358
      %2360 = vrot.lane.b32.xlu0 %v2265, 24
      %v2361 = vpop.permute.xlu0 %2360
      %2411 = vrot.lane.b32.xlu0 %v1833, 36
      %v2412 = vpop.permute.xlu0 %2411
      %2413 = vrot.lane.b32.xlu0 %v1690, 36
      %v2414 = vpop.permute.xlu0 %2413
      %2415 = vrot.lane.b32.xlu0 %v1692, 36
      %v2416 = vpop.permute.xlu0 %2415
      %2417 = vrot.lane.b32.xlu0 %v1834, 36
      %v2418 = vpop.permute.xlu0 %2417
      %2419 = vrot.lane.b32.xlu0 %v1695, 36
      %v2420 = vpop.permute.xlu0 %2419
      %2421 = vrot.lane.b32.xlu0 %v1697, 36
      %v2422 = vpop.permute.xlu0 %2421
      %2423 = vrot.lane.b32.xlu0 %v1835, 36
      %v2424 = vpop.permute.xlu0 %2423
      %2425 = vrot.lane.b32.xlu0 %v1700, 36
      %v2426 = vpop.permute.xlu0 %2425
      %2427 = vrot.lane.b32.xlu0 %v1702, 36
      %v2428 = vpop.permute.xlu0 %2427
      %2429 = vrot.lane.b32.xlu0 %v1836, 36
      %v2430 = vpop.permute.xlu0 %2429
      %2431 = vrot.lane.b32.xlu0 %v1705, 36
      %v2432 = vpop.permute.xlu0 %2431
      %2433 = vrot.lane.b32.xlu0 %v1707, 36
      %v2434 = vpop.permute.xlu0 %2433
      %2435 = vrot.lane.b32.xlu0 %v1837, 36
      %v2436 = vpop.permute.xlu0 %2435
      %2437 = vrot.lane.b32.xlu0 %v1710, 36
      %v2438 = vpop.permute.xlu0 %2437
      %2439 = vrot.lane.b32.xlu0 %v1712, 36
      %v2440 = vpop.permute.xlu0 %2439
      %2441 = vrot.lane.b32.xlu0 %v1838, 36
      %v2442 = vpop.permute.xlu0 %2441
      %2443 = vrot.lane.b32.xlu0 %v1715, 36
      %v2444 = vpop.permute.xlu0 %2443
      %2445 = vrot.lane.b32.xlu0 %v1717, 36
      %v2446 = vpop.permute.xlu0 %2445
      %2447 = vrot.lane.b32.xlu0 %v1839, 36
      %v2448 = vpop.permute.xlu0 %2447
      %2449 = vrot.lane.b32.xlu0 %v1720, 36
      %v2450 = vpop.permute.xlu0 %2449
      %2451 = vrot.lane.b32.xlu0 %v1722, 36
      %v2452 = vpop.permute.xlu0 %2451
      %2453 = vrot.lane.b32.xlu0 %v1840, 36
      %v2454 = vpop.permute.xlu0 %2453
      %2455 = vrot.lane.b32.xlu0 %v1725, 36
      %v2456 = vpop.permute.xlu0 %2455
      %2457 = vrot.lane.b32.xlu0 %v1727, 36
      %v2458 = vpop.permute.xlu0 %2457
      %2459 = vrot.lane.b32.xlu0 %v1841, 36
      %v2460 = vpop.permute.xlu0 %2459
      %2461 = vrot.lane.b32.xlu0 %v1730, 36
      %v2462 = vpop.permute.xlu0 %2461
      %2463 = vrot.lane.b32.xlu0 %v1732, 36
      %v2464 = vpop.permute.xlu0 %2463
      %2465 = vrot.lane.b32.xlu0 %v1842, 36
      %v2466 = vpop.permute.xlu0 %2465
      %2467 = vrot.lane.b32.xlu0 %v1735, 36
      %v2468 = vpop.permute.xlu0 %2467
      %2469 = vrot.lane.b32.xlu0 %v1737, 36
      %v2470 = vpop.permute.xlu0 %2469
      %2471 = vrot.lane.b32.xlu0 %v1843, 36
      %v2472 = vpop.permute.xlu0 %2471
      %2473 = vrot.lane.b32.xlu0 %v1740, 36
      %v2474 = vpop.permute.xlu0 %2473
      %2475 = vrot.lane.b32.xlu0 %v1742, 36
      %v2476 = vpop.permute.xlu0 %2475
      %2477 = vrot.lane.b32.xlu0 %v1844, 36
      %v2478 = vpop.permute.xlu0 %2477
      %2479 = vrot.lane.b32.xlu0 %v1745, 36
      %v2480 = vpop.permute.xlu0 %2479
      %2481 = vrot.lane.b32.xlu0 %v1747, 36
      %v2482 = vpop.permute.xlu0 %2481
      %2483 = vrot.lane.b32.xlu0 %v1845, 36
      %v2484 = vpop.permute.xlu0 %2483
      %2485 = vrot.lane.b32.xlu0 %v1750, 36
      %v2486 = vpop.permute.xlu0 %2485
      %2487 = vrot.lane.b32.xlu0 %v1752, 36
      %v2488 = vpop.permute.xlu0 %2487
      %2489 = vrot.lane.b32.xlu0 %v1846, 36
      %v2490 = vpop.permute.xlu0 %2489
      %2491 = vrot.lane.b32.xlu0 %v1755, 36
      %v2492 = vpop.permute.xlu0 %2491
      %2493 = vrot.lane.b32.xlu0 %v1757, 36
      %v2494 = vpop.permute.xlu0 %2493
      %2495 = vrot.lane.b32.xlu0 %v1847, 36
      %v2496 = vpop.permute.xlu0 %2495
      %2497 = vrot.lane.b32.xlu0 %v1760, 36
      %v2498 = vpop.permute.xlu0 %2497
      %2499 = vrot.lane.b32.xlu0 %v1762, 36
      %v2500 = vpop.permute.xlu0 %2499
      %2501 = vrot.lane.b32.xlu0 %v1848, 36
      %v2502 = vpop.permute.xlu0 %2501
      %2503 = vrot.lane.b32.xlu0 %v1765, 36
      %v2504 = vpop.permute.xlu0 %2503
      %2505 = vrot.lane.b32.xlu0 %v1767, 36
      %v2506 = vpop.permute.xlu0 %2505
      %v2556 = vrot.slane %v1848, 1
      %v2557 = vrot.slane %v1765, 1
      %v2558 = vsel %vm1898, %v2556, %v2557
      %v2559 = vrot.slane %v1767, 1
      %v2560 = vsel %vm1898, %v2557, %v2559
      %v2561 = vrot.slane %v1865, 1
      %v2562 = vsel %vm1898, %v2559, %v2561
      %2563 = vrot.lane.b32.xlu0 %v1907, 48
      %v2564 = vpop.permute.xlu0 %2563
      %2565 = vrot.lane.b32.xlu0 %v1909, 48
      %v2566 = vpop.permute.xlu0 %2565
      %2567 = vrot.lane.b32.xlu0 %v1911, 48
      %v2568 = vpop.permute.xlu0 %2567
      %2569 = vrot.lane.b32.xlu0 %v1914, 48
      %v2570 = vpop.permute.xlu0 %2569
      %2571 = vrot.lane.b32.xlu0 %v1916, 48
      %v2572 = vpop.permute.xlu0 %2571
      %2573 = vrot.lane.b32.xlu0 %v1918, 48
      %v2574 = vpop.permute.xlu0 %2573
      %2575 = vrot.lane.b32.xlu0 %v1921, 48
      %v2576 = vpop.permute.xlu0 %2575
      %2577 = vrot.lane.b32.xlu0 %v1923, 48
      %v2578 = vpop.permute.xlu0 %2577
      %2579 = vrot.lane.b32.xlu0 %v1925, 48
      %v2580 = vpop.permute.xlu0 %2579
      %2581 = vrot.lane.b32.xlu0 %v1928, 48
      %v2582 = vpop.permute.xlu0 %2581
      %2583 = vrot.lane.b32.xlu0 %v1930, 48
      %v2584 = vpop.permute.xlu0 %2583
      %2585 = vrot.lane.b32.xlu0 %v1932, 48
      %v2586 = vpop.permute.xlu0 %2585
      %2587 = vrot.lane.b32.xlu0 %v1935, 48
      %v2588 = vpop.permute.xlu0 %2587
      %2589 = vrot.lane.b32.xlu0 %v1937, 48
      %v2590 = vpop.permute.xlu0 %2589
      %2591 = vrot.lane.b32.xlu0 %v1939, 48
      %v2592 = vpop.permute.xlu0 %2591
      %2593 = vrot.lane.b32.xlu0 %v1942, 48
      %v2594 = vpop.permute.xlu0 %2593
      %2595 = vrot.lane.b32.xlu0 %v1944, 48
      %v2596 = vpop.permute.xlu0 %2595
      %2597 = vrot.lane.b32.xlu0 %v1946, 48
      %v2598 = vpop.permute.xlu0 %2597
      %2599 = vrot.lane.b32.xlu0 %v1949, 48
      %v2600 = vpop.permute.xlu0 %2599
      %2601 = vrot.lane.b32.xlu0 %v1951, 48
      %v2602 = vpop.permute.xlu0 %2601
      %2603 = vrot.lane.b32.xlu0 %v1953, 48
      %v2604 = vpop.permute.xlu0 %2603
      %2605 = vrot.lane.b32.xlu0 %v1956, 48
      %v2606 = vpop.permute.xlu0 %2605
      %2607 = vrot.lane.b32.xlu0 %v1958, 48
      %v2608 = vpop.permute.xlu0 %2607
      %2609 = vrot.lane.b32.xlu0 %v1960, 48
      %v2610 = vpop.permute.xlu0 %2609
      %2611 = vrot.lane.b32.xlu0 %v1963, 48
      %v2612 = vpop.permute.xlu0 %2611
      %2613 = vrot.lane.b32.xlu0 %v1965, 48
      %v2614 = vpop.permute.xlu0 %2613
      %2615 = vrot.lane.b32.xlu0 %v1967, 48
      %v2616 = vpop.permute.xlu0 %2615
      %2617 = vrot.lane.b32.xlu0 %v1970, 48
      %v2618 = vpop.permute.xlu0 %2617
      %2619 = vrot.lane.b32.xlu0 %v1972, 48
      %v2620 = vpop.permute.xlu0 %2619
      %2621 = vrot.lane.b32.xlu0 %v1974, 48
      %v2622 = vpop.permute.xlu0 %2621
      %2623 = vrot.lane.b32.xlu0 %v1977, 48
      %v2624 = vpop.permute.xlu0 %2623
      %2625 = vrot.lane.b32.xlu0 %v1979, 48
      %v2626 = vpop.permute.xlu0 %2625
      %2627 = vrot.lane.b32.xlu0 %v1981, 48
      %v2628 = vpop.permute.xlu0 %2627
      %2629 = vrot.lane.b32.xlu0 %v1984, 48
      %v2630 = vpop.permute.xlu0 %2629
      %2631 = vrot.lane.b32.xlu0 %v1986, 48
      %v2632 = vpop.permute.xlu0 %2631
      %2633 = vrot.lane.b32.xlu0 %v1988, 48
      %v2634 = vpop.permute.xlu0 %2633
      %2635 = vrot.lane.b32.xlu0 %v1991, 48
      %v2636 = vpop.permute.xlu0 %2635
      %2637 = vrot.lane.b32.xlu0 %v1993, 48
      %v2638 = vpop.permute.xlu0 %2637
      %2639 = vrot.lane.b32.xlu0 %v1995, 48
      %v2640 = vpop.permute.xlu0 %2639
      %2641 = vrot.lane.b32.xlu0 %v1998, 48
      %v2642 = vpop.permute.xlu0 %2641
      %2643 = vrot.lane.b32.xlu0 %v2000, 48
      %v2644 = vpop.permute.xlu0 %2643
      %2645 = vrot.lane.b32.xlu0 %v2002, 48
      %v2646 = vpop.permute.xlu0 %2645
      %2647 = vrot.lane.b32.xlu0 %v2005, 48
      %v2648 = vpop.permute.xlu0 %2647
      %2649 = vrot.lane.b32.xlu0 %v2007, 48
      %v2650 = vpop.permute.xlu0 %2649
      %2651 = vrot.lane.b32.xlu0 %v2009, 48
      %v2652 = vpop.permute.xlu0 %2651
      %2653 = vrot.lane.b32.xlu0 %v2558, 48
      %v2654 = vpop.permute.xlu0 %2653
      %2655 = vrot.lane.b32.xlu0 %v2560, 48
      %v2656 = vpop.permute.xlu0 %2655
      %2657 = vrot.lane.b32.xlu0 %v2562, 48
      %v2658 = vpop.permute.xlu0 %2657
      %v2707 = vrot.slane %v1848, 2
      %v2708 = vrot.slane %v1765, 2
      %v2709 = vsel %vm2154, %v2707, %v2708
      %v2710 = vrot.slane %v1767, 2
      %v2711 = vsel %vm2154, %v2708, %v2710
      %v2712 = vrot.slane %v1865, 2
      %v2713 = vsel %vm2154, %v2710, %v2712
      %2714 = vrot.lane.b32.xlu0 %v2163, 60
      %v2715 = vpop.permute.xlu0 %2714
      %2716 = vrot.lane.b32.xlu0 %v2165, 60
      %v2717 = vpop.permute.xlu0 %2716
      %2718 = vrot.lane.b32.xlu0 %v2167, 60
      %v2719 = vpop.permute.xlu0 %2718
      %2720 = vrot.lane.b32.xlu0 %v2170, 60
      %v2721 = vpop.permute.xlu0 %2720
      %2722 = vrot.lane.b32.xlu0 %v2172, 60
      %v2723 = vpop.permute.xlu0 %2722
      %2724 = vrot.lane.b32.xlu0 %v2174, 60
      %v2725 = vpop.permute.xlu0 %2724
      %2726 = vrot.lane.b32.xlu0 %v2177, 60
      %v2727 = vpop.permute.xlu0 %2726
      %2728 = vrot.lane.b32.xlu0 %v2179, 60
      %v2729 = vpop.permute.xlu0 %2728
      %2730 = vrot.lane.b32.xlu0 %v2181, 60
      %v2731 = vpop.permute.xlu0 %2730
      %2732 = vrot.lane.b32.xlu0 %v2184, 60
      %v2733 = vpop.permute.xlu0 %2732
      %2734 = vrot.lane.b32.xlu0 %v2186, 60
      %v2735 = vpop.permute.xlu0 %2734
      %2736 = vrot.lane.b32.xlu0 %v2188, 60
      %v2737 = vpop.permute.xlu0 %2736
      %2738 = vrot.lane.b32.xlu0 %v2191, 60
      %v2739 = vpop.permute.xlu0 %2738
      %2740 = vrot.lane.b32.xlu0 %v2193, 60
      %v2741 = vpop.permute.xlu0 %2740
      %2742 = vrot.lane.b32.xlu0 %v2195, 60
      %v2743 = vpop.permute.xlu0 %2742
      %2744 = vrot.lane.b32.xlu0 %v2198, 60
      %v2745 = vpop.permute.xlu0 %2744
      %2746 = vrot.lane.b32.xlu0 %v2200, 60
      %v2747 = vpop.permute.xlu0 %2746
      %2748 = vrot.lane.b32.xlu0 %v2202, 60
      %v2749 = vpop.permute.xlu0 %2748
      %2750 = vrot.lane.b32.xlu0 %v2205, 60
      %v2751 = vpop.permute.xlu0 %2750
      %2752 = vrot.lane.b32.xlu0 %v2207, 60
      %v2753 = vpop.permute.xlu0 %2752
      %2754 = vrot.lane.b32.xlu0 %v2209, 60
      %v2755 = vpop.permute.xlu0 %2754
      %2756 = vrot.lane.b32.xlu0 %v2212, 60
      %v2757 = vpop.permute.xlu0 %2756
      %2758 = vrot.lane.b32.xlu0 %v2214, 60
      %v2759 = vpop.permute.xlu0 %2758
      %2760 = vrot.lane.b32.xlu0 %v2216, 60
      %v2761 = vpop.permute.xlu0 %2760
      %2762 = vrot.lane.b32.xlu0 %v2219, 60
      %v2763 = vpop.permute.xlu0 %2762
      %2764 = vrot.lane.b32.xlu0 %v2221, 60
      %v2765 = vpop.permute.xlu0 %2764
      %2766 = vrot.lane.b32.xlu0 %v2223, 60
      %v2767 = vpop.permute.xlu0 %2766
      %2768 = vrot.lane.b32.xlu0 %v2226, 60
      %v2769 = vpop.permute.xlu0 %2768
      %2770 = vrot.lane.b32.xlu0 %v2228, 60
      %v2771 = vpop.permute.xlu0 %2770
      %2772 = vrot.lane.b32.xlu0 %v2230, 60
      %v2773 = vpop.permute.xlu0 %2772
      %2774 = vrot.lane.b32.xlu0 %v2233, 60
      %v2775 = vpop.permute.xlu0 %2774
      %2776 = vrot.lane.b32.xlu0 %v2235, 60
      %v2777 = vpop.permute.xlu0 %2776
      %2778 = vrot.lane.b32.xlu0 %v2237, 60
      %v2779 = vpop.permute.xlu0 %2778
      %2780 = vrot.lane.b32.xlu0 %v2240, 60
      %v2781 = vpop.permute.xlu0 %2780
      %2782 = vrot.lane.b32.xlu0 %v2242, 60
      %v2783 = vpop.permute.xlu0 %2782
      %2784 = vrot.lane.b32.xlu0 %v2244, 60
      %v2785 = vpop.permute.xlu0 %2784
      %2786 = vrot.lane.b32.xlu0 %v2247, 60
      %v2787 = vpop.permute.xlu0 %2786
      %2788 = vrot.lane.b32.xlu0 %v2249, 60
      %v2789 = vpop.permute.xlu0 %2788
      %2790 = vrot.lane.b32.xlu0 %v2251, 60
      %v2791 = vpop.permute.xlu0 %2790
      %2792 = vrot.lane.b32.xlu0 %v2254, 60
      %v2793 = vpop.permute.xlu0 %2792
      %2794 = vrot.lane.b32.xlu0 %v2256, 60
      %v2795 = vpop.permute.xlu0 %2794
      %2796 = vrot.lane.b32.xlu0 %v2258, 60
      %v2797 = vpop.permute.xlu0 %2796
      %2798 = vrot.lane.b32.xlu0 %v2261, 60
      %v2799 = vpop.permute.xlu0 %2798
      %2800 = vrot.lane.b32.xlu0 %v2263, 60
      %v2801 = vpop.permute.xlu0 %2800
      %2802 = vrot.lane.b32.xlu0 %v2265, 60
      %v2803 = vpop.permute.xlu0 %2802
      %2804 = vrot.lane.b32.xlu0 %v2709, 60
      %v2805 = vpop.permute.xlu0 %2804
      %2806 = vrot.lane.b32.xlu0 %v2711, 60
      %v2807 = vpop.permute.xlu0 %2806
      %2808 = vrot.lane.b32.xlu0 %v2713, 60
      %v2809 = vpop.permute.xlu0 %2808
      %2858 = vrot.lane.b32.xlu0 %v1834, 72
      %v2859 = vpop.permute.xlu0 %2858
      %2860 = vrot.lane.b32.xlu0 %v1695, 72
      %v2861 = vpop.permute.xlu0 %2860
      %2862 = vrot.lane.b32.xlu0 %v1697, 72
      %v2863 = vpop.permute.xlu0 %2862
      %2864 = vrot.lane.b32.xlu0 %v1835, 72
      %v2865 = vpop.permute.xlu0 %2864
      %2866 = vrot.lane.b32.xlu0 %v1700, 72
      %v2867 = vpop.permute.xlu0 %2866
      %2868 = vrot.lane.b32.xlu0 %v1702, 72
      %v2869 = vpop.permute.xlu0 %2868
      %2870 = vrot.lane.b32.xlu0 %v1836, 72
      %v2871 = vpop.permute.xlu0 %2870
      %2872 = vrot.lane.b32.xlu0 %v1705, 72
      %v2873 = vpop.permute.xlu0 %2872
      %2874 = vrot.lane.b32.xlu0 %v1707, 72
      %v2875 = vpop.permute.xlu0 %2874
      %2876 = vrot.lane.b32.xlu0 %v1837, 72
      %v2877 = vpop.permute.xlu0 %2876
      %2878 = vrot.lane.b32.xlu0 %v1710, 72
      %v2879 = vpop.permute.xlu0 %2878
      %2880 = vrot.lane.b32.xlu0 %v1712, 72
      %v2881 = vpop.permute.xlu0 %2880
      %2882 = vrot.lane.b32.xlu0 %v1838, 72
      %v2883 = vpop.permute.xlu0 %2882
      %2884 = vrot.lane.b32.xlu0 %v1715, 72
      %v2885 = vpop.permute.xlu0 %2884
      %2886 = vrot.lane.b32.xlu0 %v1717, 72
      %v2887 = vpop.permute.xlu0 %2886
      %2888 = vrot.lane.b32.xlu0 %v1839, 72
      %v2889 = vpop.permute.xlu0 %2888
      %2890 = vrot.lane.b32.xlu0 %v1720, 72
      %v2891 = vpop.permute.xlu0 %2890
      %2892 = vrot.lane.b32.xlu0 %v1722, 72
      %v2893 = vpop.permute.xlu0 %2892
      %2894 = vrot.lane.b32.xlu0 %v1840, 72
      %v2895 = vpop.permute.xlu0 %2894
      %2896 = vrot.lane.b32.xlu0 %v1725, 72
      %v2897 = vpop.permute.xlu0 %2896
      %2898 = vrot.lane.b32.xlu0 %v1727, 72
      %v2899 = vpop.permute.xlu0 %2898
      %2900 = vrot.lane.b32.xlu0 %v1841, 72
      %v2901 = vpop.permute.xlu0 %2900
      %2902 = vrot.lane.b32.xlu0 %v1730, 72
      %v2903 = vpop.permute.xlu0 %2902
      %2904 = vrot.lane.b32.xlu0 %v1732, 72
      %v2905 = vpop.permute.xlu0 %2904
      %2906 = vrot.lane.b32.xlu0 %v1842, 72
      %v2907 = vpop.permute.xlu0 %2906
      %2908 = vrot.lane.b32.xlu0 %v1735, 72
      %v2909 = vpop.permute.xlu0 %2908
      %2910 = vrot.lane.b32.xlu0 %v1737, 72
      %v2911 = vpop.permute.xlu0 %2910
      %2912 = vrot.lane.b32.xlu0 %v1843, 72
      %v2913 = vpop.permute.xlu0 %2912
      %2914 = vrot.lane.b32.xlu0 %v1740, 72
      %v2915 = vpop.permute.xlu0 %2914
      %2916 = vrot.lane.b32.xlu0 %v1742, 72
      %v2917 = vpop.permute.xlu0 %2916
      %2918 = vrot.lane.b32.xlu0 %v1844, 72
      %v2919 = vpop.permute.xlu0 %2918
      %2920 = vrot.lane.b32.xlu0 %v1745, 72
      %v2921 = vpop.permute.xlu0 %2920
      %2922 = vrot.lane.b32.xlu0 %v1747, 72
      %v2923 = vpop.permute.xlu0 %2922
      %2924 = vrot.lane.b32.xlu0 %v1845, 72
      %v2925 = vpop.permute.xlu0 %2924
      %2926 = vrot.lane.b32.xlu0 %v1750, 72
      %v2927 = vpop.permute.xlu0 %2926
      %2928 = vrot.lane.b32.xlu0 %v1752, 72
      %v2929 = vpop.permute.xlu0 %2928
      %2930 = vrot.lane.b32.xlu0 %v1846, 72
      %v2931 = vpop.permute.xlu0 %2930
      %2932 = vrot.lane.b32.xlu0 %v1755, 72
      %v2933 = vpop.permute.xlu0 %2932
      %2934 = vrot.lane.b32.xlu0 %v1757, 72
      %v2935 = vpop.permute.xlu0 %2934
      %2936 = vrot.lane.b32.xlu0 %v1847, 72
      %v2937 = vpop.permute.xlu0 %2936
      %2938 = vrot.lane.b32.xlu0 %v1760, 72
      %v2939 = vpop.permute.xlu0 %2938
      %2940 = vrot.lane.b32.xlu0 %v1762, 72
      %v2941 = vpop.permute.xlu0 %2940
      %2942 = vrot.lane.b32.xlu0 %v1848, 72
      %v2943 = vpop.permute.xlu0 %2942
      %2944 = vrot.lane.b32.xlu0 %v1765, 72
      %v2945 = vpop.permute.xlu0 %2944
      %2946 = vrot.lane.b32.xlu0 %v1767, 72
      %v2947 = vpop.permute.xlu0 %2946
      %2948 = vrot.lane.b32.xlu0 %v1832, 72
      %v2949 = vpop.permute.xlu0 %2948
      %2950 = vrot.lane.b32.xlu0 %v1687, 72
      %v2951 = vpop.permute.xlu0 %2950
      %2999 = vrot.lane.b32.xlu0 %v1914, 84
      %v3000 = vpop.permute.xlu0 %2999
      %3001 = vrot.lane.b32.xlu0 %v1916, 84
      %v3002 = vpop.permute.xlu0 %3001
      %3003 = vrot.lane.b32.xlu0 %v1918, 84
      %v3004 = vpop.permute.xlu0 %3003
      %3005 = vrot.lane.b32.xlu0 %v1921, 84
      %v3006 = vpop.permute.xlu0 %3005
      %3007 = vrot.lane.b32.xlu0 %v1923, 84
      %v3008 = vpop.permute.xlu0 %3007
      %3009 = vrot.lane.b32.xlu0 %v1925, 84
      %v3010 = vpop.permute.xlu0 %3009
      %3011 = vrot.lane.b32.xlu0 %v1928, 84
      %v3012 = vpop.permute.xlu0 %3011
      %3013 = vrot.lane.b32.xlu0 %v1930, 84
      %v3014 = vpop.permute.xlu0 %3013
      %3015 = vrot.lane.b32.xlu0 %v1932, 84
      %v3016 = vpop.permute.xlu0 %3015
      %3017 = vrot.lane.b32.xlu0 %v1935, 84
      %v3018 = vpop.permute.xlu0 %3017
      %3019 = vrot.lane.b32.xlu0 %v1937, 84
      %v3020 = vpop.permute.xlu0 %3019
      %3021 = vrot.lane.b32.xlu0 %v1939, 84
      %v3022 = vpop.permute.xlu0 %3021
      %3023 = vrot.lane.b32.xlu0 %v1942, 84
      %v3024 = vpop.permute.xlu0 %3023
      %3025 = vrot.lane.b32.xlu0 %v1944, 84
      %v3026 = vpop.permute.xlu0 %3025
      %3027 = vrot.lane.b32.xlu0 %v1946, 84
      %v3028 = vpop.permute.xlu0 %3027
      %3029 = vrot.lane.b32.xlu0 %v1949, 84
      %v3030 = vpop.permute.xlu0 %3029
      %3031 = vrot.lane.b32.xlu0 %v1951, 84
      %v3032 = vpop.permute.xlu0 %3031
      %3033 = vrot.lane.b32.xlu0 %v1953, 84
      %v3034 = vpop.permute.xlu0 %3033
      %3035 = vrot.lane.b32.xlu0 %v1956, 84
      %v3036 = vpop.permute.xlu0 %3035
      %3037 = vrot.lane.b32.xlu0 %v1958, 84
      %v3038 = vpop.permute.xlu0 %3037
      %3039 = vrot.lane.b32.xlu0 %v1960, 84
      %v3040 = vpop.permute.xlu0 %3039
      %3041 = vrot.lane.b32.xlu0 %v1963, 84
      %v3042 = vpop.permute.xlu0 %3041
      %3043 = vrot.lane.b32.xlu0 %v1965, 84
      %v3044 = vpop.permute.xlu0 %3043
      %3045 = vrot.lane.b32.xlu0 %v1967, 84
      %v3046 = vpop.permute.xlu0 %3045
      %3047 = vrot.lane.b32.xlu0 %v1970, 84
      %v3048 = vpop.permute.xlu0 %3047
      %3049 = vrot.lane.b32.xlu0 %v1972, 84
      %v3050 = vpop.permute.xlu0 %3049
      %3051 = vrot.lane.b32.xlu0 %v1974, 84
      %v3052 = vpop.permute.xlu0 %3051
      %3053 = vrot.lane.b32.xlu0 %v1977, 84
      %v3054 = vpop.permute.xlu0 %3053
      %3055 = vrot.lane.b32.xlu0 %v1979, 84
      %v3056 = vpop.permute.xlu0 %3055
      %3057 = vrot.lane.b32.xlu0 %v1981, 84
      %v3058 = vpop.permute.xlu0 %3057
      %3059 = vrot.lane.b32.xlu0 %v1984, 84
      %v3060 = vpop.permute.xlu0 %3059
      %3061 = vrot.lane.b32.xlu0 %v1986, 84
      %v3062 = vpop.permute.xlu0 %3061
      %3063 = vrot.lane.b32.xlu0 %v1988, 84
      %v3064 = vpop.permute.xlu0 %3063
      %3065 = vrot.lane.b32.xlu0 %v1991, 84
      %v3066 = vpop.permute.xlu0 %3065
      %3067 = vrot.lane.b32.xlu0 %v1993, 84
      %v3068 = vpop.permute.xlu0 %3067
      %3069 = vrot.lane.b32.xlu0 %v1995, 84
      %v3070 = vpop.permute.xlu0 %3069
      %3071 = vrot.lane.b32.xlu0 %v1998, 84
      %v3072 = vpop.permute.xlu0 %3071
      %3073 = vrot.lane.b32.xlu0 %v2000, 84
      %v3074 = vpop.permute.xlu0 %3073
      %3075 = vrot.lane.b32.xlu0 %v2002, 84
      %v3076 = vpop.permute.xlu0 %3075
      %3077 = vrot.lane.b32.xlu0 %v2005, 84
      %v3078 = vpop.permute.xlu0 %3077
      %3079 = vrot.lane.b32.xlu0 %v2007, 84
      %v3080 = vpop.permute.xlu0 %3079
      %3081 = vrot.lane.b32.xlu0 %v2009, 84
      %v3082 = vpop.permute.xlu0 %3081
      %3083 = vrot.lane.b32.xlu0 %v2558, 84
      %v3084 = vpop.permute.xlu0 %3083
      %3085 = vrot.lane.b32.xlu0 %v2560, 84
      %v3086 = vpop.permute.xlu0 %3085
      %3087 = vrot.lane.b32.xlu0 %v2562, 84
      %v3088 = vpop.permute.xlu0 %3087
      %3089 = vrot.lane.b32.xlu0 %v1901, 84
      %v3090 = vpop.permute.xlu0 %3089
      %3091 = vrot.lane.b32.xlu0 %v1902, 84
      %v3092 = vpop.permute.xlu0 %3091
      %3093 = vrot.lane.b32.xlu0 %v1904, 84
      %v3094 = vpop.permute.xlu0 %3093
      %3143 = vrot.lane.b32.xlu0 %v2170, 96
      %v3144 = vpop.permute.xlu0 %3143
      %3145 = vrot.lane.b32.xlu0 %v2172, 96
      %v3146 = vpop.permute.xlu0 %3145
      %3147 = vrot.lane.b32.xlu0 %v2174, 96
      %v3148 = vpop.permute.xlu0 %3147
      %3149 = vrot.lane.b32.xlu0 %v2177, 96
      %v3150 = vpop.permute.xlu0 %3149
      %3151 = vrot.lane.b32.xlu0 %v2179, 96
      %v3152 = vpop.permute.xlu0 %3151
      %3153 = vrot.lane.b32.xlu0 %v2181, 96
      %v3154 = vpop.permute.xlu0 %3153
      %3155 = vrot.lane.b32.xlu0 %v2184, 96
      %v3156 = vpop.permute.xlu0 %3155
      %3157 = vrot.lane.b32.xlu0 %v2186, 96
      %v3158 = vpop.permute.xlu0 %3157
      %3159 = vrot.lane.b32.xlu0 %v2188, 96
      %v3160 = vpop.permute.xlu0 %3159
      %3161 = vrot.lane.b32.xlu0 %v2191, 96
      %v3162 = vpop.permute.xlu0 %3161
      %3163 = vrot.lane.b32.xlu0 %v2193, 96
      %v3164 = vpop.permute.xlu0 %3163
      %3165 = vrot.lane.b32.xlu0 %v2195, 96
      %v3166 = vpop.permute.xlu0 %3165
      %3167 = vrot.lane.b32.xlu0 %v2198, 96
      %v3168 = vpop.permute.xlu0 %3167
      %3169 = vrot.lane.b32.xlu0 %v2200, 96
      %v3170 = vpop.permute.xlu0 %3169
      %3171 = vrot.lane.b32.xlu0 %v2202, 96
      %v3172 = vpop.permute.xlu0 %3171
      %3173 = vrot.lane.b32.xlu0 %v2205, 96
      %v3174 = vpop.permute.xlu0 %3173
      %3175 = vrot.lane.b32.xlu0 %v2207, 96
      %v3176 = vpop.permute.xlu0 %3175
      %3177 = vrot.lane.b32.xlu0 %v2209, 96
      %v3178 = vpop.permute.xlu0 %3177
      %3179 = vrot.lane.b32.xlu0 %v2212, 96
      %v3180 = vpop.permute.xlu0 %3179
      %3181 = vrot.lane.b32.xlu0 %v2214, 96
      %v3182 = vpop.permute.xlu0 %3181
      %3183 = vrot.lane.b32.xlu0 %v2216, 96
      %v3184 = vpop.permute.xlu0 %3183
      %3185 = vrot.lane.b32.xlu0 %v2219, 96
      %v3186 = vpop.permute.xlu0 %3185
      %3187 = vrot.lane.b32.xlu0 %v2221, 96
      %v3188 = vpop.permute.xlu0 %3187
      %3189 = vrot.lane.b32.xlu0 %v2223, 96
      %v3190 = vpop.permute.xlu0 %3189
      %3191 = vrot.lane.b32.xlu0 %v2226, 96
      %v3192 = vpop.permute.xlu0 %3191
      %3193 = vrot.lane.b32.xlu0 %v2228, 96
      %v3194 = vpop.permute.xlu0 %3193
      %3195 = vrot.lane.b32.xlu0 %v2230, 96
      %v3196 = vpop.permute.xlu0 %3195
      %3197 = vrot.lane.b32.xlu0 %v2233, 96
      %v3198 = vpop.permute.xlu0 %3197
      %3199 = vrot.lane.b32.xlu0 %v2235, 96
      %v3200 = vpop.permute.xlu0 %3199
      %3201 = vrot.lane.b32.xlu0 %v2237, 96
      %v3202 = vpop.permute.xlu0 %3201
      %3203 = vrot.lane.b32.xlu0 %v2240, 96
      %v3204 = vpop.permute.xlu0 %3203
      %3205 = vrot.lane.b32.xlu0 %v2242, 96
      %v3206 = vpop.permute.xlu0 %3205
      %3207 = vrot.lane.b32.xlu0 %v2244, 96
      %v3208 = vpop.permute.xlu0 %3207
      %3209 = vrot.lane.b32.xlu0 %v2247, 96
      %v3210 = vpop.permute.xlu0 %3209
      %3211 = vrot.lane.b32.xlu0 %v2249, 96
      %v3212 = vpop.permute.xlu0 %3211
      %3213 = vrot.lane.b32.xlu0 %v2251, 96
      %v3214 = vpop.permute.xlu0 %3213
      %3215 = vrot.lane.b32.xlu0 %v2254, 96
      %v3216 = vpop.permute.xlu0 %3215
      %3217 = vrot.lane.b32.xlu0 %v2256, 96
      %v3218 = vpop.permute.xlu0 %3217
      %3219 = vrot.lane.b32.xlu0 %v2258, 96
      %v3220 = vpop.permute.xlu0 %3219
      %3221 = vrot.lane.b32.xlu0 %v2261, 96
      %v3222 = vpop.permute.xlu0 %3221
      %3223 = vrot.lane.b32.xlu0 %v2263, 96
      %v3224 = vpop.permute.xlu0 %3223
      %3225 = vrot.lane.b32.xlu0 %v2265, 96
      %v3226 = vpop.permute.xlu0 %3225
      %3227 = vrot.lane.b32.xlu0 %v2709, 96
      %v3228 = vpop.permute.xlu0 %3227
      %3229 = vrot.lane.b32.xlu0 %v2711, 96
      %v3230 = vpop.permute.xlu0 %3229
      %3231 = vrot.lane.b32.xlu0 %v2713, 96
      %v3232 = vpop.permute.xlu0 %3231
      %3233 = vrot.lane.b32.xlu0 %v2157, 96
      %v3234 = vpop.permute.xlu0 %3233
      %3235 = vrot.lane.b32.xlu0 %v2158, 96
      %v3236 = vpop.permute.xlu0 %3235
      %3237 = vrot.lane.b32.xlu0 %v2160, 96
      %v3238 = vpop.permute.xlu0 %3237
      %v3287 = vsel %vm832, %v1832, %v2011
      %v3288 = vsel %vm832, %v1687, %v2013
      %v3289 = vsel %vm832, %v1687, %v2015
      %v3290 = vsel %vm832, %v1833, %v2017
      %v3291 = vsel %vm832, %v1690, %v2019
      %v3292 = vsel %vm832, %v1692, %v2021
      %v3293 = vsel %vm832, %v1834, %v2023
      %v3294 = vsel %vm832, %v1695, %v2025
      %v3295 = vsel %vm832, %v1697, %v2027
      %v3296 = vsel %vm832, %v1835, %v2029
      %v3297 = vsel %vm832, %v1700, %v2031
      %v3298 = vsel %vm832, %v1702, %v2033
      %v3299 = vsel %vm832, %v1836, %v2035
      %v3300 = vsel %vm832, %v1705, %v2037
      %v3301 = vsel %vm832, %v1707, %v2039
      %v3302 = vsel %vm832, %v1837, %v2041
      %v3303 = vsel %vm832, %v1710, %v2043
      %v3304 = vsel %vm832, %v1712, %v2045
      %v3305 = vsel %vm832, %v1838, %v2047
      %v3306 = vsel %vm832, %v1715, %v2049
      %v3307 = vsel %vm832, %v1717, %v2051
      %v3308 = vsel %vm832, %v1839, %v2053
      %v3309 = vsel %vm832, %v1720, %v2055
      %v3310 = vsel %vm832, %v1722, %v2057
      %v3311 = vsel %vm832, %v1840, %v2059
      %v3312 = vsel %vm832, %v1725, %v2061
      %v3313 = vsel %vm832, %v1727, %v2063
      %v3314 = vsel %vm832, %v1841, %v2065
      %v3315 = vsel %vm832, %v1730, %v2067
      %v3316 = vsel %vm832, %v1732, %v2069
      %v3317 = vsel %vm832, %v1842, %v2071
      %v3318 = vsel %vm832, %v1735, %v2073
      %v3319 = vsel %vm832, %v1737, %v2075
      %v3320 = vsel %vm832, %v1843, %v2077
      %v3321 = vsel %vm832, %v1740, %v2079
      %v3322 = vsel %vm832, %v1742, %v2081
      %v3323 = vsel %vm832, %v1844, %v2083
      %v3324 = vsel %vm832, %v1745, %v2085
      %v3325 = vsel %vm832, %v1747, %v2087
      %v3326 = vsel %vm832, %v1845, %v2089
      %v3327 = vsel %vm832, %v1750, %v2091
      %v3328 = vsel %vm832, %v1752, %v2093
      %v3329 = vsel %vm832, %v1846, %v2095
      %v3330 = vsel %vm832, %v1755, %v2097
      %v3331 = vsel %vm832, %v1757, %v2099
      %v3332 = vsel %vm832, %v1847, %v2101
      %v3333 = vsel %vm832, %v1760, %v2103
      %v3334 = vsel %vm832, %v1762, %v2105
      %vm3335 = vcmask 195584
      %v3336 = vsel %vm3335, %v3287, %v2267
      %v3337 = vsel %vm3335, %v3288, %v2269
      %v3338 = vsel %vm3335, %v3289, %v2271
      %v3339 = vsel %vm3335, %v3290, %v2273
      %v3340 = vsel %vm3335, %v3291, %v2275
      %v3341 = vsel %vm3335, %v3292, %v2277
      %v3342 = vsel %vm3335, %v3293, %v2279
      %v3343 = vsel %vm3335, %v3294, %v2281
      %v3344 = vsel %vm3335, %v3295, %v2283
      %v3345 = vsel %vm3335, %v3296, %v2285
      %v3346 = vsel %vm3335, %v3297, %v2287
      %v3347 = vsel %vm3335, %v3298, %v2289
      %v3348 = vsel %vm3335, %v3299, %v2291
      %v3349 = vsel %vm3335, %v3300, %v2293
      %v3350 = vsel %vm3335, %v3301, %v2295
      %v3351 = vsel %vm3335, %v3302, %v2297
      %v3352 = vsel %vm3335, %v3303, %v2299
      %v3353 = vsel %vm3335, %v3304, %v2301
      %v3354 = vsel %vm3335, %v3305, %v2303
      %v3355 = vsel %vm3335, %v3306, %v2305
      %v3356 = vsel %vm3335, %v3307, %v2307
      %v3357 = vsel %vm3335, %v3308, %v2309
      %v3358 = vsel %vm3335, %v3309, %v2311
      %v3359 = vsel %vm3335, %v3310, %v2313
      %v3360 = vsel %vm3335, %v3311, %v2315
      %v3361 = vsel %vm3335, %v3312, %v2317
      %v3362 = vsel %vm3335, %v3313, %v2319
      %v3363 = vsel %vm3335, %v3314, %v2321
      %v3364 = vsel %vm3335, %v3315, %v2323
      %v3365 = vsel %vm3335, %v3316, %v2325
      %v3366 = vsel %vm3335, %v3317, %v2327
      %v3367 = vsel %vm3335, %v3318, %v2329
      %v3368 = vsel %vm3335, %v3319, %v2331
      %v3369 = vsel %vm3335, %v3320, %v2333
      %v3370 = vsel %vm3335, %v3321, %v2335
      %v3371 = vsel %vm3335, %v3322, %v2337
      %v3372 = vsel %vm3335, %v3323, %v2339
      %v3373 = vsel %vm3335, %v3324, %v2341
      %v3374 = vsel %vm3335, %v3325, %v2343
      %v3375 = vsel %vm3335, %v3326, %v2345
      %v3376 = vsel %vm3335, %v3327, %v2347
      %v3377 = vsel %vm3335, %v3328, %v2349
      %v3378 = vsel %vm3335, %v3329, %v2351
      %v3379 = vsel %vm3335, %v3330, %v2353
      %v3380 = vsel %vm3335, %v3331, %v2355
      %v3381 = vsel %vm3335, %v3332, %v2357
      %v3382 = vsel %vm3335, %v3333, %v2359
      %v3383 = vsel %vm3335, %v3334, %v2361
      %vm3384 = vcmask 293888
      %v3385 = vsel %vm3384, %v3336, %v2412
      %v3386 = vsel %vm3384, %v3337, %v2414
      %v3387 = vsel %vm3384, %v3338, %v2416
      %v3388 = vsel %vm3384, %v3339, %v2418
      %v3389 = vsel %vm3384, %v3340, %v2420
      %v3390 = vsel %vm3384, %v3341, %v2422
      %v3391 = vsel %vm3384, %v3342, %v2424
      %v3392 = vsel %vm3384, %v3343, %v2426
      %v3393 = vsel %vm3384, %v3344, %v2428
      %v3394 = vsel %vm3384, %v3345, %v2430
      %v3395 = vsel %vm3384, %v3346, %v2432
      %v3396 = vsel %vm3384, %v3347, %v2434
      %v3397 = vsel %vm3384, %v3348, %v2436
      %v3398 = vsel %vm3384, %v3349, %v2438
      %v3399 = vsel %vm3384, %v3350, %v2440
      %v3400 = vsel %vm3384, %v3351, %v2442
      %v3401 = vsel %vm3384, %v3352, %v2444
      %v3402 = vsel %vm3384, %v3353, %v2446
      %v3403 = vsel %vm3384, %v3354, %v2448
      %v3404 = vsel %vm3384, %v3355, %v2450
      %v3405 = vsel %vm3384, %v3356, %v2452
      %v3406 = vsel %vm3384, %v3357, %v2454
      %v3407 = vsel %vm3384, %v3358, %v2456
      %v3408 = vsel %vm3384, %v3359, %v2458
      %v3409 = vsel %vm3384, %v3360, %v2460
      %v3410 = vsel %vm3384, %v3361, %v2462
      %v3411 = vsel %vm3384, %v3362, %v2464
      %v3412 = vsel %vm3384, %v3363, %v2466
      %v3413 = vsel %vm3384, %v3364, %v2468
      %v3414 = vsel %vm3384, %v3365, %v2470
      %v3415 = vsel %vm3384, %v3366, %v2472
      %v3416 = vsel %vm3384, %v3367, %v2474
      %v3417 = vsel %vm3384, %v3368, %v2476
      %v3418 = vsel %vm3384, %v3369, %v2478
      %v3419 = vsel %vm3384, %v3370, %v2480
      %v3420 = vsel %vm3384, %v3371, %v2482
      %v3421 = vsel %vm3384, %v3372, %v2484
      %v3422 = vsel %vm3384, %v3373, %v2486
      %v3423 = vsel %vm3384, %v3374, %v2488
      %v3424 = vsel %vm3384, %v3375, %v2490
      %v3425 = vsel %vm3384, %v3376, %v2492
      %v3426 = vsel %vm3384, %v3377, %v2494
      %v3427 = vsel %vm3384, %v3378, %v2496
      %v3428 = vsel %vm3384, %v3379, %v2498
      %v3429 = vsel %vm3384, %v3380, %v2500
      %v3430 = vsel %vm3384, %v3381, %v2502
      %v3431 = vsel %vm3384, %v3382, %v2504
      %v3432 = vsel %vm3384, %v3383, %v2506
      %vm3433 = vcmask 392192
      %v3434 = vsel %vm3433, %v3385, %v2564
      %v3435 = vsel %vm3433, %v3386, %v2566
      %v3436 = vsel %vm3433, %v3387, %v2568
      %v3437 = vsel %vm3433, %v3388, %v2570
      %v3438 = vsel %vm3433, %v3389, %v2572
      %v3439 = vsel %vm3433, %v3390, %v2574
      %v3440 = vsel %vm3433, %v3391, %v2576
      %v3441 = vsel %vm3433, %v3392, %v2578
      %v3442 = vsel %vm3433, %v3393, %v2580
      %v3443 = vsel %vm3433, %v3394, %v2582
      %v3444 = vsel %vm3433, %v3395, %v2584
      %v3445 = vsel %vm3433, %v3396, %v2586
      %v3446 = vsel %vm3433, %v3397, %v2588
      %v3447 = vsel %vm3433, %v3398, %v2590
      %v3448 = vsel %vm3433, %v3399, %v2592
      %v3449 = vsel %vm3433, %v3400, %v2594
      %v3450 = vsel %vm3433, %v3401, %v2596
      %v3451 = vsel %vm3433, %v3402, %v2598
      %v3452 = vsel %vm3433, %v3403, %v2600
      %v3453 = vsel %vm3433, %v3404, %v2602
      %v3454 = vsel %vm3433, %v3405, %v2604
      %v3455 = vsel %vm3433, %v3406, %v2606
      %v3456 = vsel %vm3433, %v3407, %v2608
      %v3457 = vsel %vm3433, %v3408, %v2610
      %v3458 = vsel %vm3433, %v3409, %v2612
      %v3459 = vsel %vm3433, %v3410, %v2614
      %v3460 = vsel %vm3433, %v3411, %v2616
      %v3461 = vsel %vm3433, %v3412, %v2618
      %v3462 = vsel %vm3433, %v3413, %v2620
      %v3463 = vsel %vm3433, %v3414, %v2622
      %v3464 = vsel %vm3433, %v3415, %v2624
      %v3465 = vsel %vm3433, %v3416, %v2626
      %v3466 = vsel %vm3433, %v3417, %v2628
      %v3467 = vsel %vm3433, %v3418, %v2630
      %v3468 = vsel %vm3433, %v3419, %v2632
      %v3469 = vsel %vm3433, %v3420, %v2634
      %v3470 = vsel %vm3433, %v3421, %v2636
      %v3471 = vsel %vm3433, %v3422, %v2638
      %v3472 = vsel %vm3433, %v3423, %v2640
      %v3473 = vsel %vm3433, %v3424, %v2642
      %v3474 = vsel %vm3433, %v3425, %v2644
      %v3475 = vsel %vm3433, %v3426, %v2646
      %v3476 = vsel %vm3433, %v3427, %v2648
      %v3477 = vsel %vm3433, %v3428, %v2650
      %v3478 = vsel %vm3433, %v3429, %v2652
      %v3479 = vsel %vm3433, %v3430, %v2654
      %v3480 = vsel %vm3433, %v3431, %v2656
      %v3481 = vsel %vm3433, %v3432, %v2658
      %vm3482 = vcmask 490496
      %v3483 = vsel %vm3482, %v3434, %v2715
      %v3484 = vsel %vm3482, %v3435, %v2717
      %v3485 = vsel %vm3482, %v3436, %v2719
      %v3486 = vsel %vm3482, %v3437, %v2721
      %v3487 = vsel %vm3482, %v3438, %v2723
      %v3488 = vsel %vm3482, %v3439, %v2725
      %v3489 = vsel %vm3482, %v3440, %v2727
      %v3490 = vsel %vm3482, %v3441, %v2729
      %v3491 = vsel %vm3482, %v3442, %v2731
      %v3492 = vsel %vm3482, %v3443, %v2733
      %v3493 = vsel %vm3482, %v3444, %v2735
      %v3494 = vsel %vm3482, %v3445, %v2737
      %v3495 = vsel %vm3482, %v3446, %v2739
      %v3496 = vsel %vm3482, %v3447, %v2741
      %v3497 = vsel %vm3482, %v3448, %v2743
      %v3498 = vsel %vm3482, %v3449, %v2745
      %v3499 = vsel %vm3482, %v3450, %v2747
      %v3500 = vsel %vm3482, %v3451, %v2749
      %v3501 = vsel %vm3482, %v3452, %v2751
      %v3502 = vsel %vm3482, %v3453, %v2753
      %v3503 = vsel %vm3482, %v3454, %v2755
      %v3504 = vsel %vm3482, %v3455, %v2757
      %v3505 = vsel %vm3482, %v3456, %v2759
      %v3506 = vsel %vm3482, %v3457, %v2761
      %v3507 = vsel %vm3482, %v3458, %v2763
      %v3508 = vsel %vm3482, %v3459, %v2765
      %v3509 = vsel %vm3482, %v3460, %v2767
      %v3510 = vsel %vm3482, %v3461, %v2769
      %v3511 = vsel %vm3482, %v3462, %v2771
      %v3512 = vsel %vm3482, %v3463, %v2773
      %v3513 = vsel %vm3482, %v3464, %v2775
      %v3514 = vsel %vm3482, %v3465, %v2777
      %v3515 = vsel %vm3482, %v3466, %v2779
      %v3516 = vsel %vm3482, %v3467, %v2781
      %v3517 = vsel %vm3482, %v3468, %v2783
      %v3518 = vsel %vm3482, %v3469, %v2785
      %v3519 = vsel %vm3482, %v3470, %v2787
      %v3520 = vsel %vm3482, %v3471, %v2789
      %v3521 = vsel %vm3482, %v3472, %v2791
      %v3522 = vsel %vm3482, %v3473, %v2793
      %v3523 = vsel %vm3482, %v3474, %v2795
      %v3524 = vsel %vm3482, %v3475, %v2797
      %v3525 = vsel %vm3482, %v3476, %v2799
      %v3526 = vsel %vm3482, %v3477, %v2801
      %v3527 = vsel %vm3482, %v3478, %v2803
      %v3528 = vsel %vm3482, %v3479, %v2805
      %v3529 = vsel %vm3482, %v3480, %v2807
      %v3530 = vsel %vm3482, %v3481, %v2809
      %vm3531 = vcmask 588800
      %v3532 = vsel %vm3531, %v3483, %v2859
      %v3533 = vsel %vm3531, %v3484, %v2861
      %v3534 = vsel %vm3531, %v3485, %v2863
      %v3535 = vsel %vm3531, %v3486, %v2865
      %v3536 = vsel %vm3531, %v3487, %v2867
      %v3537 = vsel %vm3531, %v3488, %v2869
      %v3538 = vsel %vm3531, %v3489, %v2871
      %v3539 = vsel %vm3531, %v3490, %v2873
      %v3540 = vsel %vm3531, %v3491, %v2875
      %v3541 = vsel %vm3531, %v3492, %v2877
      %v3542 = vsel %vm3531, %v3493, %v2879
      %v3543 = vsel %vm3531, %v3494, %v2881
      %v3544 = vsel %vm3531, %v3495, %v2883
      %v3545 = vsel %vm3531, %v3496, %v2885
      %v3546 = vsel %vm3531, %v3497, %v2887
      %v3547 = vsel %vm3531, %v3498, %v2889
      %v3548 = vsel %vm3531, %v3499, %v2891
      %v3549 = vsel %vm3531, %v3500, %v2893
      %v3550 = vsel %vm3531, %v3501, %v2895
      %v3551 = vsel %vm3531, %v3502, %v2897
      %v3552 = vsel %vm3531, %v3503, %v2899
      %v3553 = vsel %vm3531, %v3504, %v2901
      %v3554 = vsel %vm3531, %v3505, %v2903
      %v3555 = vsel %vm3531, %v3506, %v2905
      %v3556 = vsel %vm3531, %v3507, %v2907
      %v3557 = vsel %vm3531, %v3508, %v2909
      %v3558 = vsel %vm3531, %v3509, %v2911
      %v3559 = vsel %vm3531, %v3510, %v2913
      %v3560 = vsel %vm3531, %v3511, %v2915
      %v3561 = vsel %vm3531, %v3512, %v2917
      %v3562 = vsel %vm3531, %v3513, %v2919
      %v3563 = vsel %vm3531, %v3514, %v2921
      %v3564 = vsel %vm3531, %v3515, %v2923
      %v3565 = vsel %vm3531, %v3516, %v2925
      %v3566 = vsel %vm3531, %v3517, %v2927
      %v3567 = vsel %vm3531, %v3518, %v2929
      %v3568 = vsel %vm3531, %v3519, %v2931
      %v3569 = vsel %vm3531, %v3520, %v2933
      %v3570 = vsel %vm3531, %v3521, %v2935
      %v3571 = vsel %vm3531, %v3522, %v2937
      %v3572 = vsel %vm3531, %v3523, %v2939
      %v3573 = vsel %vm3531, %v3524, %v2941
      %v3574 = vsel %vm3531, %v3525, %v2943
      %v3575 = vsel %vm3531, %v3526, %v2945
      %v3576 = vsel %vm3531, %v3527, %v2947
      %v3577 = vsel %vm3531, %v3528, %v2949
      %v3578 = vsel %vm3531, %v3529, %v2951
      %v3579 = vsel %vm3531, %v3530, %v2951
      %vm3580 = vcmask 687104
      %v3581 = vsel %vm3580, %v3532, %v3000
      %v3582 = vsel %vm3580, %v3533, %v3002
      %v3583 = vsel %vm3580, %v3534, %v3004
      %v3584 = vsel %vm3580, %v3535, %v3006
      %v3585 = vsel %vm3580, %v3536, %v3008
      %v3586 = vsel %vm3580, %v3537, %v3010
      %v3587 = vsel %vm3580, %v3538, %v3012
      %v3588 = vsel %vm3580, %v3539, %v3014
      %v3589 = vsel %vm3580, %v3540, %v3016
      %v3590 = vsel %vm3580, %v3541, %v3018
      %v3591 = vsel %vm3580, %v3542, %v3020
      %v3592 = vsel %vm3580, %v3543, %v3022
      %v3593 = vsel %vm3580, %v3544, %v3024
      %v3594 = vsel %vm3580, %v3545, %v3026
      %v3595 = vsel %vm3580, %v3546, %v3028
      %v3596 = vsel %vm3580, %v3547, %v3030
      %v3597 = vsel %vm3580, %v3548, %v3032
      %v3598 = vsel %vm3580, %v3549, %v3034
      %v3599 = vsel %vm3580, %v3550, %v3036
      %v3600 = vsel %vm3580, %v3551, %v3038
      %v3601 = vsel %vm3580, %v3552, %v3040
      %v3602 = vsel %vm3580, %v3553, %v3042
      %v3603 = vsel %vm3580, %v3554, %v3044
      %v3604 = vsel %vm3580, %v3555, %v3046
      %v3605 = vsel %vm3580, %v3556, %v3048
      %v3606 = vsel %vm3580, %v3557, %v3050
      %v3607 = vsel %vm3580, %v3558, %v3052
      %v3608 = vsel %vm3580, %v3559, %v3054
      %v3609 = vsel %vm3580, %v3560, %v3056
      %v3610 = vsel %vm3580, %v3561, %v3058
      %v3611 = vsel %vm3580, %v3562, %v3060
      %v3612 = vsel %vm3580, %v3563, %v3062
      %v3613 = vsel %vm3580, %v3564, %v3064
      %v3614 = vsel %vm3580, %v3565, %v3066
      %v3615 = vsel %vm3580, %v3566, %v3068
      %v3616 = vsel %vm3580, %v3567, %v3070
      %v3617 = vsel %vm3580, %v3568, %v3072
      %v3618 = vsel %vm3580, %v3569, %v3074
      %v3619 = vsel %vm3580, %v3570, %v3076
      %v3620 = vsel %vm3580, %v3571, %v3078
      %v3621 = vsel %vm3580, %v3572, %v3080
      %v3622 = vsel %vm3580, %v3573, %v3082
      %v3623 = vsel %vm3580, %v3574, %v3084
      %v3624 = vsel %vm3580, %v3575, %v3086
      %v3625 = vsel %vm3580, %v3576, %v3088
      %v3626 = vsel %vm3580, %v3577, %v3090
      %v3627 = vsel %vm3580, %v3578, %v3092
      %v3628 = vsel %vm3580, %v3579, %v3094
      %vm3629 = vcmask 785408
      %v3630 = vsel %vm3629, %v3581, %v3144
      %v3631 = vsel %vm3629, %v3582, %v3146
      %v3632 = vsel %vm3629, %v3583, %v3148
      %v3633 = vsel %vm3629, %v3584, %v3150
      %v3634 = vsel %vm3629, %v3585, %v3152
      %v3635 = vsel %vm3629, %v3586, %v3154
      %v3636 = vsel %vm3629, %v3587, %v3156
      %v3637 = vsel %vm3629, %v3588, %v3158
      %v3638 = vsel %vm3629, %v3589, %v3160
      %v3639 = vsel %vm3629, %v3590, %v3162
      %v3640 = vsel %vm3629, %v3591, %v3164
      %v3641 = vsel %vm3629, %v3592, %v3166
      %v3642 = vsel %vm3629, %v3593, %v3168
      %v3643 = vsel %vm3629, %v3594, %v3170
      %v3644 = vsel %vm3629, %v3595, %v3172
      %v3645 = vsel %vm3629, %v3596, %v3174
      %v3646 = vsel %vm3629, %v3597, %v3176
      %v3647 = vsel %vm3629, %v3598, %v3178
      %v3648 = vsel %vm3629, %v3599, %v3180
      %v3649 = vsel %vm3629, %v3600, %v3182
      %v3650 = vsel %vm3629, %v3601, %v3184
      %v3651 = vsel %vm3629, %v3602, %v3186
      %v3652 = vsel %vm3629, %v3603, %v3188
      %v3653 = vsel %vm3629, %v3604, %v3190
      %v3654 = vsel %vm3629, %v3605, %v3192
      %v3655 = vsel %vm3629, %v3606, %v3194
      %v3656 = vsel %vm3629, %v3607, %v3196
      %v3657 = vsel %vm3629, %v3608, %v3198
      %v3658 = vsel %vm3629, %v3609, %v3200
      %v3659 = vsel %vm3629, %v3610, %v3202
      %v3660 = vsel %vm3629, %v3611, %v3204
      %v3661 = vsel %vm3629, %v3612, %v3206
      %v3662 = vsel %vm3629, %v3613, %v3208
      %v3663 = vsel %vm3629, %v3614, %v3210
      %v3664 = vsel %vm3629, %v3615, %v3212
      %v3665 = vsel %vm3629, %v3616, %v3214
      %v3666 = vsel %vm3629, %v3617, %v3216
      %v3667 = vsel %vm3629, %v3618, %v3218
      %v3668 = vsel %vm3629, %v3619, %v3220
      %v3669 = vsel %vm3629, %v3620, %v3222
      %v3670 = vsel %vm3629, %v3621, %v3224
      %v3671 = vsel %vm3629, %v3622, %v3226
      %v3672 = vsel %vm3629, %v3623, %v3228
      %v3673 = vsel %vm3629, %v3624, %v3230
      %v3674 = vsel %vm3629, %v3625, %v3232
      %v3675 = vsel %vm3629, %v3626, %v3234
      %v3676 = vsel %vm3629, %v3627, %v3236
      %v3677 = vsel %vm3629, %v3628, %v3238
      %v3678 = vld [vmem:[%s4] sm:$0xf]
      %v3679 = vld [vmem:[%s4 + $0x4] sm:$0xf]
      %v3680 = vld [vmem:[%s4 + $0x8] sm:$0xf]
      %v3681 = vld [vmem:[%s4 + $0xc] sm:$0xf]
      %v3682 = vld [vmem:[%s4 + $0x10] sm:$0xf]
      %v3683 = vld [vmem:[%s4 + $0x14] sm:$0xf]
      %v3684 = vld [vmem:[%s4 + $0x18] sm:$0xf]
      %v3685 = vld [vmem:[%s4 + $0x1c] sm:$0xf]
      %v3686 = vld [vmem:[%s4 + $0x20] sm:$0xf]
      %v3687 = vld [vmem:[%s4 + $0x24] sm:$0xf]
      %v3688 = vld [vmem:[%s4 + $0x28] sm:$0xf]
      %v3689 = vld [vmem:[%s4 + $0x2c] sm:$0xf]
      %v3690 = vld [vmem:[%s4 + $0x30] sm:$0xf]
      %v3691 = vld [vmem:[%s4 + $0x34] sm:$0x3]
      %v3692 = vpack.c.bf16 %v3631, %v3630
      %v3693 = vpack.c.bf16 %v3633, %v3632
      %v3694 = vpack.c.bf16 %v3635, %v3634
      %v3695 = vpack.c.bf16 %v3637, %v3636
      %v3696 = vpack.c.bf16 %v3639, %v3638
      %v3697 = vpack.c.bf16 %v3641, %v3640
      %v3698 = vpack.c.bf16 %v3643, %v3642
      %v3699 = vpack.c.bf16 %v3645, %v3644
      %v3700 = vpack.c.bf16 %v3647, %v3646
      %v3701 = vpack.c.bf16 %v3649, %v3648
      %v3702 = vpack.c.bf16 %v3651, %v3650
      %v3703 = vpack.c.bf16 %v3653, %v3652
      %v3704 = vpack.c.bf16 %v3655, %v3654
      %v3705 = vpack.c.bf16 %v3657, %v3656
      %v3706 = vpack.c.bf16 %v3659, %v3658
      %v3707 = vpack.c.bf16 %v3661, %v3660
      %v3708 = vpack.c.bf16 %v3663, %v3662
      %v3709 = vpack.c.bf16 %v3665, %v3664
      %v3710 = vpack.c.bf16 %v3667, %v3666
      %v3711 = vpack.c.bf16 %v3669, %v3668
      %v3712 = vpack.c.bf16 %v3671, %v3670
      %v3713 = vpack.c.bf16 %v3673, %v3672
      %v3714 = vpack.c.bf16 %v3675, %v3674
      %v3715 = vpack.c.bf16 %v3677, %v3676
      %v3716 = vld [vmem:[%s5] sm:$0x1]
      %v3718 = vlaneseq
      %v3719 = vshrl.u32 %v3718, 7
      %v3720 = vsub.s32 0, %v3719
      %v3721 = vrot.slane %v3716, %v3720
      %v3737 = vunpack.c.l.b16 %v3678
      %v3738 = vunpack.c.l.b16 %v3679
      %v3739 = vunpack.c.l.b16 %v3680
      %v3740 = vunpack.c.l.b16 %v3681
      %v3741 = vunpack.c.l.b16 %v3682
      %v3742 = vunpack.c.l.b16 %v3683
      %v3743 = vunpack.c.l.b16 %v3684
      %v3744 = vunpack.c.l.b16 %v3685
      %v3745 = vunpack.c.l.b16 %v3686
      %v3746 = vunpack.c.l.b16 %v3687
      %v3747 = vunpack.c.l.b16 %v3688
      %v3748 = vunpack.c.l.b16 %v3689
      %v3749 = vunpack.c.l.b16 %v3690
      %v3750 = vunpack.c.l.b16 %v3691
      %v3751 = vpack.c.b16 %v3738, %v3737
      %v3752 = vpack.c.b16 %v3740, %v3739
      %v3753 = vpack.c.b16 %v3742, %v3741
      %v3754 = vpack.c.b16 %v3744, %v3743
      %v3755 = vpack.c.b16 %v3746, %v3745
      %v3756 = vpack.c.b16 %v3748, %v3747
      %v3757 = vpack.c.b16 %v3750, %v3749
      %vm3764 = vcmask 883712
      %v3766 = vsel %vm3764, %v3692, 0
      %v3769 = vsel %vm3764, %v3693, 0
      %v3772 = vsel %vm3764, %v3694, 0
      %v3775 = vsel %vm3764, %v3695, 0
      %v3778 = vsel %vm3764, %v3696, 0
      %v3781 = vsel %vm3764, %v3697, 0
      %v3784 = vsel %vm3764, %v3698, 0
      %v3787 = vsel %vm3764, %v3699, 0
      %v3790 = vsel %vm3764, %v3700, 0
      %v3793 = vsel %vm3764, %v3701, 0
      %v3796 = vsel %vm3764, %v3702, 0
      %v3799 = vsel %vm3764, %v3703, 0
      %v3802 = vsel %vm3764, %v3704, 0
      %v3805 = vsel %vm3764, %v3705, 0
      %v3808 = vsel %vm3764, %v3706, 0
      %v3811 = vsel %vm3764, %v3707, 0
      %v3814 = vsel %vm3764, %v3708, 0
      %v3817 = vsel %vm3764, %v3709, 0
      %v3820 = vsel %vm3764, %v3710, 0
      %v3823 = vsel %vm3764, %v3711, 0
      %v3826 = vsel %vm3764, %v3712, 0
      %v3829 = vsel %vm3764, %v3713, 0
      %v3832 = vsel %vm3764, %v3714, 0
      %v3835 = vsel %vm3764, %v3715, 0
      %v3838 = vsel %vm2154, %v3757, 0
      %3840 = vmatprep.subr.bf16.mxu0 0
      %3841 = vmatpush1.bf16.msra.mxu0 0
      %3842 = vmatprep.subr.bf16.mxu0 0
      %3843 = vmatpush1.bf16.msra.mxu0 %v3838
      %3844 = vmatprep.subr.bf16.mxu0 0
      %3845 = vmatpush1.bf16.msra.mxu0 %v3756
      %3846 = vmatprep.subr.bf16.mxu0 0
      %3847 = vmatpush1.bf16.msra.mxu0 %v3755
      %3848 = vmatprep.subr.bf16.mxu0 0
      %3849 = vmatpush1.bf16.msra.mxu0 %v3754
      %3850 = vmatprep.subr.bf16.mxu0 0
      %3851 = vmatpush1.bf16.msra.mxu0 %v3753
      %3852 = vmatprep.subr.bf16.mxu0 0
      %3853 = vmatpush1.bf16.msra.mxu0 %v3752
      %3854 = vmatprep.subr.bf16.mxu0 0
      %3855 = vmatpush1.bf16.msra.mxu0 %v3751
      %3856 = vmatprep.subr.bf16.mxu0 0
      %3857 = vmatpush2.bf16.msra.mxu0 0
      %3858 = vmatprep.subr.bf16.mxu0 0
      %3859 = vmatpush2.bf16.msra.mxu0 0
      %3860 = vmatprep.subr.bf16.mxu0 0
      %3861 = vmatpush2.bf16.msra.mxu0 0
      %3862 = vmatprep.subr.bf16.mxu0 0
      %3863 = vmatpush2.bf16.msra.mxu0 0
      %3864 = vmatprep.subr.bf16.mxu0 0
      %3865 = vmatpush2.bf16.msra.mxu0 0
      %3866 = vmatprep.subr.bf16.mxu0 0
      %3867 = vmatpush2.bf16.msra.mxu0 0
      %3868 = vmatprep.subr.bf16.mxu0 0
      %3869 = vmatpush2.bf16.msra.mxu0 0
      %3870 = vmatprep.subr.bf16.mxu0 0
      %3871 = vmatpush2.bf16.msra.mxu0 0
      %3872 = vmatprep.mubr.bf16.mxu0 0
      %3873 = vmatmul.mubr.bf16.gmra.mxu0 %v3766
      %v3874 = vpop.f32.mrf.mxu0
      %v3875 = vadd.f32 %v3721, %v3874
      %v3876 = vpop.f32.mrf.mxu0
      %v3877 = vpop.f32.mrf.mxu0
      %v3878 = vadd.f32 %v3721, %v3877
      %v3879 = vpop.f32.mrf.mxu0
      %3880 = vmatprep.mubr.bf16.mxu0 0
      %3881 = vmatmul.mubr.bf16.gmra.mxu0 %v3769
      %v3882 = vpop.f32.mrf.mxu0
      %v3883 = vadd.f32 %v3721, %v3882
      %v3884 = vpop.f32.mrf.mxu0
      %v3885 = vpop.f32.mrf.mxu0
      %v3886 = vadd.f32 %v3721, %v3885
      %v3887 = vpop.f32.mrf.mxu0
      %3888 = vmatprep.mubr.bf16.mxu0 0
      %3889 = vmatmul.mubr.bf16.gmra.mxu0 %v3772
      %v3890 = vpop.f32.mrf.mxu0
      %v3891 = vadd.f32 %v3721, %v3890
      %v3892 = vpop.f32.mrf.mxu0
      %v3893 = vpop.f32.mrf.mxu0
      %v3894 = vadd.f32 %v3721, %v3893
      %v3895 = vpop.f32.mrf.mxu0
      %3896 = vmatprep.mubr.bf16.mxu0 0
      %3897 = vmatmul.mubr.bf16.gmra.mxu0 %v3775
      %v3898 = vpop.f32.mrf.mxu0
      %v3899 = vadd.f32 %v3721, %v3898
      %v3900 = vpop.f32.mrf.mxu0
      %v3901 = vpop.f32.mrf.mxu0
      %v3902 = vadd.f32 %v3721, %v3901
      %v3903 = vpop.f32.mrf.mxu0
      %3904 = vmatprep.mubr.bf16.mxu0 0
      %3905 = vmatmul.mubr.bf16.gmra.mxu0 %v3778
      %v3906 = vpop.f32.mrf.mxu0
      %v3907 = vadd.f32 %v3721, %v3906
      %v3908 = vpop.f32.mrf.mxu0
      %v3909 = vpop.f32.mrf.mxu0
      %v3910 = vadd.f32 %v3721, %v3909
      %v3911 = vpop.f32.mrf.mxu0
      %3912 = vmatprep.mubr.bf16.mxu0 0
      %3913 = vmatmul.mubr.bf16.gmra.mxu0 %v3781
      %v3914 = vpop.f32.mrf.mxu0
      %v3915 = vadd.f32 %v3721, %v3914
      %v3916 = vpop.f32.mrf.mxu0
      %v3917 = vpop.f32.mrf.mxu0
      %v3918 = vadd.f32 %v3721, %v3917
      %v3919 = vpop.f32.mrf.mxu0
      %3920 = vmatprep.mubr.bf16.mxu0 0
      %3921 = vmatmul.mubr.bf16.gmra.mxu0 %v3784
      %v3922 = vpop.f32.mrf.mxu0
      %v3923 = vadd.f32 %v3721, %v3922
      %v3924 = vpop.f32.mrf.mxu0
      %v3925 = vpop.f32.mrf.mxu0
      %v3926 = vadd.f32 %v3721, %v3925
      %v3927 = vpop.f32.mrf.mxu0
      %3928 = vmatprep.mubr.bf16.mxu0 0
      %3929 = vmatmul.mubr.bf16.gmra.mxu0 %v3787
      %v3930 = vpop.f32.mrf.mxu0
      %v3931 = vadd.f32 %v3721, %v3930
      %v3932 = vpop.f32.mrf.mxu0
      %v3933 = vpop.f32.mrf.mxu0
      %v3934 = vadd.f32 %v3721, %v3933
      %v3935 = vpop.f32.mrf.mxu0
      %3936 = vmatprep.mubr.bf16.mxu0 0
      %3937 = vmatmul.mubr.bf16.gmra.mxu0 %v3790
      %v3938 = vpop.f32.mrf.mxu0
      %v3939 = vadd.f32 %v3721, %v3938
      %v3940 = vpop.f32.mrf.mxu0
      %v3941 = vpop.f32.mrf.mxu0
      %v3942 = vadd.f32 %v3721, %v3941
      %v3943 = vpop.f32.mrf.mxu0
      %3944 = vmatprep.mubr.bf16.mxu0 0
      %3945 = vmatmul.mubr.bf16.gmra.mxu0 %v3793
      %v3946 = vpop.f32.mrf.mxu0
      %v3947 = vadd.f32 %v3721, %v3946
      %v3948 = vpop.f32.mrf.mxu0
      %v3949 = vpop.f32.mrf.mxu0
      %v3950 = vadd.f32 %v3721, %v3949
      %v3951 = vpop.f32.mrf.mxu0
      %3952 = vmatprep.mubr.bf16.mxu0 0
      %3953 = vmatmul.mubr.bf16.gmra.mxu0 %v3796
      %v3954 = vpop.f32.mrf.mxu0
      %v3955 = vadd.f32 %v3721, %v3954
      %v3956 = vpop.f32.mrf.mxu0
      %v3957 = vpop.f32.mrf.mxu0
      %v3958 = vadd.f32 %v3721, %v3957
      %v3959 = vpop.f32.mrf.mxu0
      %3960 = vmatprep.mubr.bf16.mxu0 0
      %3961 = vmatmul.mubr.bf16.gmra.mxu0 %v3799
      %v3962 = vpop.f32.mrf.mxu0
      %v3963 = vadd.f32 %v3721, %v3962
      %v3964 = vpop.f32.mrf.mxu0
      %v3965 = vpop.f32.mrf.mxu0
      %v3966 = vadd.f32 %v3721, %v3965
      %v3967 = vpop.f32.mrf.mxu0
      %3968 = vmatprep.mubr.bf16.mxu0 0
      %3969 = vmatmul.mubr.bf16.gmra.mxu0 %v3802
      %v3970 = vpop.f32.mrf.mxu0
      %v3971 = vadd.f32 %v3721, %v3970
      %v3972 = vpop.f32.mrf.mxu0
      %v3973 = vpop.f32.mrf.mxu0
      %v3974 = vadd.f32 %v3721, %v3973
      %v3975 = vpop.f32.mrf.mxu0
      %3976 = vmatprep.mubr.bf16.mxu0 0
      %3977 = vmatmul.mubr.bf16.gmra.mxu0 %v3805
      %v3978 = vpop.f32.mrf.mxu0
      %v3979 = vadd.f32 %v3721, %v3978
      %v3980 = vpop.f32.mrf.mxu0
      %v3981 = vpop.f32.mrf.mxu0
      %v3982 = vadd.f32 %v3721, %v3981
      %v3983 = vpop.f32.mrf.mxu0
      %3984 = vmatprep.mubr.bf16.mxu0 0
      %3985 = vmatmul.mubr.bf16.gmra.mxu0 %v3808
      %v3986 = vpop.f32.mrf.mxu0
      %v3987 = vadd.f32 %v3721, %v3986
      %v3988 = vpop.f32.mrf.mxu0
      %v3989 = vpop.f32.mrf.mxu0
      %v3990 = vadd.f32 %v3721, %v3989
      %v3991 = vpop.f32.mrf.mxu0
      %3992 = vmatprep.mubr.bf16.mxu0 0
      %3993 = vmatmul.mubr.bf16.gmra.mxu0 %v3811
      %v3994 = vpop.f32.mrf.mxu0
      %v3995 = vadd.f32 %v3721, %v3994
      %v3996 = vpop.f32.mrf.mxu0
      %v3997 = vpop.f32.mrf.mxu0
      %v3998 = vadd.f32 %v3721, %v3997
      %v3999 = vpop.f32.mrf.mxu0
      %4000 = vmatprep.mubr.bf16.mxu0 0
      %4001 = vmatmul.mubr.bf16.gmra.mxu0 %v3814
      %v4002 = vpop.f32.mrf.mxu0
      %v4003 = vadd.f32 %v3721, %v4002
      %v4004 = vpop.f32.mrf.mxu0
      %v4005 = vpop.f32.mrf.mxu0
      %v4006 = vadd.f32 %v3721, %v4005
      %v4007 = vpop.f32.mrf.mxu0
      %4008 = vmatprep.mubr.bf16.mxu0 0
      %4009 = vmatmul.mubr.bf16.gmra.mxu0 %v3817
      %v4010 = vpop.f32.mrf.mxu0
      %v4011 = vadd.f32 %v3721, %v4010
      %v4012 = vpop.f32.mrf.mxu0
      %v4013 = vpop.f32.mrf.mxu0
      %v4014 = vadd.f32 %v3721, %v4013
      %v4015 = vpop.f32.mrf.mxu0
      %4016 = vmatprep.mubr.bf16.mxu0 0
      %4017 = vmatmul.mubr.bf16.gmra.mxu0 %v3820
      %v4018 = vpop.f32.mrf.mxu0
      %v4019 = vadd.f32 %v3721, %v4018
      %v4020 = vpop.f32.mrf.mxu0
      %v4021 = vpop.f32.mrf.mxu0
      %v4022 = vadd.f32 %v3721, %v4021
      %v4023 = vpop.f32.mrf.mxu0
      %4024 = vmatprep.mubr.bf16.mxu0 0
      %4025 = vmatmul.mubr.bf16.gmra.mxu0 %v3823
      %v4026 = vpop.f32.mrf.mxu0
      %v4027 = vadd.f32 %v3721, %v4026
      %v4028 = vpop.f32.mrf.mxu0
      %v4029 = vpop.f32.mrf.mxu0
      %v4030 = vadd.f32 %v3721, %v4029
      %v4031 = vpop.f32.mrf.mxu0
      %4032 = vmatprep.mubr.bf16.mxu0 0
      %4033 = vmatmul.mubr.bf16.gmra.mxu0 %v3826
      %v4034 = vpop.f32.mrf.mxu0
      %v4035 = vadd.f32 %v3721, %v4034
      %v4036 = vpop.f32.mrf.mxu0
      %v4037 = vpop.f32.mrf.mxu0
      %v4038 = vadd.f32 %v3721, %v4037
      %v4039 = vpop.f32.mrf.mxu0
      %4040 = vmatprep.mubr.bf16.mxu0 0
      %4041 = vmatmul.mubr.bf16.gmra.mxu0 %v3829
      %v4042 = vpop.f32.mrf.mxu0
      %v4043 = vadd.f32 %v3721, %v4042
      %v4044 = vpop.f32.mrf.mxu0
      %v4045 = vpop.f32.mrf.mxu0
      %v4046 = vadd.f32 %v3721, %v4045
      %v4047 = vpop.f32.mrf.mxu0
      %4048 = vmatprep.mubr.bf16.mxu0 0
      %4049 = vmatmul.mubr.bf16.gmra.mxu0 %v3832
      %v4050 = vpop.f32.mrf.mxu0
      %v4051 = vadd.f32 %v3721, %v4050
      %v4052 = vpop.f32.mrf.mxu0
      %v4053 = vpop.f32.mrf.mxu0
      %v4054 = vadd.f32 %v3721, %v4053
      %v4055 = vpop.f32.mrf.mxu0
      %4056 = vmatprep.mubr.bf16.mxu0 0
      %4057 = vmatmul.mubr.bf16.gmra.mxu0 %v3835
      %v4058 = vpop.f32.mrf.mxu0
      %v4059 = vadd.f32 %v3721, %v4058
      %v4060 = vpop.f32.mrf.mxu0
      %v4061 = vpop.f32.mrf.mxu0
      %v4062 = vadd.f32 %v3721, %v4061
      %v4063 = vpop.f32.mrf.mxu0
      %4064 = vdwg.mxu0
      %v4065 = vmax.f32 %v3875, 0.0
      %v4066 = vmax.f32 %v3878, 0.0
      %v4067 = vmax.f32 %v3883, 0.0
      %v4068 = vmax.f32 %v3886, 0.0
      %v4069 = vmax.f32 %v3891, 0.0
      %v4070 = vmax.f32 %v3894, 0.0
      %v4071 = vmax.f32 %v3899, 0.0
      %v4072 = vmax.f32 %v3902, 0.0
      %v4073 = vmax.f32 %v3907, 0.0
      %v4074 = vmax.f32 %v3910, 0.0
      %v4075 = vmax.f32 %v3915, 0.0
      %v4076 = vmax.f32 %v3918, 0.0
      %v4077 = vmax.f32 %v3923, 0.0
      %v4078 = vmax.f32 %v3926, 0.0
      %v4079 = vmax.f32 %v3931, 0.0
      %v4080 = vmax.f32 %v3934, 0.0
      %v4081 = vmax.f32 %v3939, 0.0
      %v4082 = vmax.f32 %v3942, 0.0
      %v4083 = vmax.f32 %v3947, 0.0
      %v4084 = vmax.f32 %v3950, 0.0
      %v4085 = vmax.f32 %v3955, 0.0
      %v4086 = vmax.f32 %v3958, 0.0
      %v4087 = vmax.f32 %v3963, 0.0
      %v4088 = vmax.f32 %v3966, 0.0
      %v4089 = vmax.f32 %v3971, 0.0
      %v4090 = vmax.f32 %v3974, 0.0
      %v4091 = vmax.f32 %v3979, 0.0
      %v4092 = vmax.f32 %v3982, 0.0
      %v4093 = vmax.f32 %v3987, 0.0
      %v4094 = vmax.f32 %v3990, 0.0
      %v4095 = vmax.f32 %v3995, 0.0
      %v4096 = vmax.f32 %v3998, 0.0
      %v4097 = vmax.f32 %v4003, 0.0
      %v4098 = vmax.f32 %v4006, 0.0
      %v4099 = vmax.f32 %v4011, 0.0
      %v4100 = vmax.f32 %v4014, 0.0
      %v4101 = vmax.f32 %v4019, 0.0
      %v4102 = vmax.f32 %v4022, 0.0
      %v4103 = vmax.f32 %v4027, 0.0
      %v4104 = vmax.f32 %v4030, 0.0
      %v4105 = vmax.f32 %v4035, 0.0
      %v4106 = vmax.f32 %v4038, 0.0
      %v4107 = vmax.f32 %v4043, 0.0
      %v4108 = vmax.f32 %v4046, 0.0
      %v4109 = vmax.f32 %v4051, 0.0
      %v4110 = vmax.f32 %v4054, 0.0
      %v4111 = vmax.f32 %v4059, 0.0
      %v4112 = vmax.f32 %v4062, 0.0
      %v4113 = vmul.f32 %v4065, %v4065
      %v4114 = vmul.f32 %v4066, %v4066
      %v4115 = vmul.f32 %v4067, %v4067
      %v4116 = vmul.f32 %v4068, %v4068
      %v4117 = vmul.f32 %v4069, %v4069
      %v4118 = vmul.f32 %v4070, %v4070
      %v4119 = vmul.f32 %v4071, %v4071
      %v4120 = vmul.f32 %v4072, %v4072
      %v4121 = vmul.f32 %v4073, %v4073
      %v4122 = vmul.f32 %v4074, %v4074
      %v4123 = vmul.f32 %v4075, %v4075
      %v4124 = vmul.f32 %v4076, %v4076
      %v4125 = vmul.f32 %v4077, %v4077
      %v4126 = vmul.f32 %v4078, %v4078
      %v4127 = vmul.f32 %v4079, %v4079
      %v4128 = vmul.f32 %v4080, %v4080
      %v4129 = vmul.f32 %v4081, %v4081
      %v4130 = vmul.f32 %v4082, %v4082
      %v4131 = vmul.f32 %v4083, %v4083
      %v4132 = vmul.f32 %v4084, %v4084
      %v4133 = vmul.f32 %v4085, %v4085
      %v4134 = vmul.f32 %v4086, %v4086
      %v4135 = vmul.f32 %v4087, %v4087
      %v4136 = vmul.f32 %v4088, %v4088
      %v4137 = vmul.f32 %v4089, %v4089
      %v4138 = vmul.f32 %v4090, %v4090
      %v4139 = vmul.f32 %v4091, %v4091
      %v4140 = vmul.f32 %v4092, %v4092
      %v4141 = vmul.f32 %v4093, %v4093
      %v4142 = vmul.f32 %v4094, %v4094
      %v4143 = vmul.f32 %v4095, %v4095
      %v4144 = vmul.f32 %v4096, %v4096
      %v4145 = vmul.f32 %v4097, %v4097
      %v4146 = vmul.f32 %v4098, %v4098
      %v4147 = vmul.f32 %v4099, %v4099
      %v4148 = vmul.f32 %v4100, %v4100
      %v4149 = vmul.f32 %v4101, %v4101
      %v4150 = vmul.f32 %v4102, %v4102
      %v4151 = vmul.f32 %v4103, %v4103
      %v4152 = vmul.f32 %v4104, %v4104
      %v4153 = vmul.f32 %v4105, %v4105
      %v4154 = vmul.f32 %v4106, %v4106
      %v4155 = vmul.f32 %v4107, %v4107
      %v4156 = vmul.f32 %v4108, %v4108
      %v4157 = vmul.f32 %v4109, %v4109
      %v4158 = vmul.f32 %v4110, %v4110
      %v4159 = vmul.f32 %v4111, %v4111
      %v4160 = vmul.f32 %v4112, %v4112
      %v4209 = vrot.slane %v4113, 7
      %v4210 = vrot.slane %v4114, 7
      %v4211 = vsel %vm1685, %v4209, %v4210
      %v4212 = vrot.slane %v4115, 7
      %v4213 = vsel %vm1685, %v4210, %v4212
      %v4214 = vrot.slane %v4116, 7
      %v4215 = vrot.slane %v4117, 7
      %v4216 = vsel %vm1685, %v4214, %v4215
      %v4217 = vrot.slane %v4118, 7
      %v4218 = vsel %vm1685, %v4215, %v4217
      %v4219 = vrot.slane %v4119, 7
      %v4220 = vrot.slane %v4120, 7
      %v4221 = vsel %vm1685, %v4219, %v4220
      %v4222 = vrot.slane %v4121, 7
      %v4223 = vsel %vm1685, %v4220, %v4222
      %v4224 = vrot.slane %v4122, 7
      %v4225 = vrot.slane %v4123, 7
      %v4226 = vsel %vm1685, %v4224, %v4225
      %v4227 = vrot.slane %v4124, 7
      %v4228 = vsel %vm1685, %v4225, %v4227
      %v4229 = vrot.slane %v4125, 7
      %v4230 = vrot.slane %v4126, 7
      %v4231 = vsel %vm1685, %v4229, %v4230
      %v4232 = vrot.slane %v4127, 7
      %v4233 = vsel %vm1685, %v4230, %v4232
      %v4234 = vrot.slane %v4128, 7
      %v4235 = vrot.slane %v4129, 7
      %v4236 = vsel %vm1685, %v4234, %v4235
      %v4237 = vrot.slane %v4130, 7
      %v4238 = vsel %vm1685, %v4235, %v4237
      %v4239 = vrot.slane %v4131, 7
      %v4240 = vrot.slane %v4132, 7
      %v4241 = vsel %vm1685, %v4239, %v4240
      %v4242 = vrot.slane %v4133, 7
      %v4243 = vsel %vm1685, %v4240, %v4242
      %v4244 = vrot.slane %v4134, 7
      %v4245 = vrot.slane %v4135, 7
      %v4246 = vsel %vm1685, %v4244, %v4245
      %v4247 = vrot.slane %v4136, 7
      %v4248 = vsel %vm1685, %v4245, %v4247
      %v4249 = vrot.slane %v4137, 7
      %v4250 = vrot.slane %v4138, 7
      %v4251 = vsel %vm1685, %v4249, %v4250
      %v4252 = vrot.slane %v4139, 7
      %v4253 = vsel %vm1685, %v4250, %v4252
      %v4254 = vrot.slane %v4140, 7
      %v4255 = vrot.slane %v4141, 7
      %v4256 = vsel %vm1685, %v4254, %v4255
      %v4257 = vrot.slane %v4142, 7
      %v4258 = vsel %vm1685, %v4255, %v4257
      %v4259 = vrot.slane %v4143, 7
      %v4260 = vrot.slane %v4144, 7
      %v4261 = vsel %vm1685, %v4259, %v4260
      %v4262 = vrot.slane %v4145, 7
      %v4263 = vsel %vm1685, %v4260, %v4262
      %v4264 = vrot.slane %v4146, 7
      %v4265 = vrot.slane %v4147, 7
      %v4266 = vsel %vm1685, %v4264, %v4265
      %v4267 = vrot.slane %v4148, 7
      %v4268 = vsel %vm1685, %v4265, %v4267
      %v4269 = vrot.slane %v4149, 7
      %v4270 = vrot.slane %v4150, 7
      %v4271 = vsel %vm1685, %v4269, %v4270
      %v4272 = vrot.slane %v4151, 7
      %v4273 = vsel %vm1685, %v4270, %v4272
      %v4274 = vrot.slane %v4152, 7
      %v4275 = vrot.slane %v4153, 7
      %v4276 = vsel %vm1685, %v4274, %v4275
      %v4277 = vrot.slane %v4154, 7
      %v4278 = vsel %vm1685, %v4275, %v4277
      %v4279 = vrot.slane %v4155, 7
      %v4280 = vrot.slane %v4156, 7
      %v4281 = vsel %vm1685, %v4279, %v4280
      %v4282 = vrot.slane %v4157, 7
      %v4283 = vsel %vm1685, %v4280, %v4282
      %v4284 = vrot.slane %v4158, 7
      %v4285 = vrot.slane %v4159, 7
      %v4286 = vsel %vm1685, %v4284, %v4285
      %v4287 = vrot.slane %v4160, 7
      %v4288 = vsel %vm1685, %v4285, %v4287
      %v4351 = vsel %vm1685, 0.0, %v4209
      %v4352 = vsel %vm1685, 0.0, %v4214
      %v4353 = vsel %vm1685, 0.0, %v4219
      %v4354 = vsel %vm1685, 0.0, %v4224
      %v4355 = vsel %vm1685, 0.0, %v4229
      %v4356 = vsel %vm1685, 0.0, %v4234
      %v4357 = vsel %vm1685, 0.0, %v4239
      %v4358 = vsel %vm1685, 0.0, %v4244
      %v4359 = vsel %vm1685, 0.0, %v4249
      %v4360 = vsel %vm1685, 0.0, %v4254
      %v4361 = vsel %vm1685, 0.0, %v4259
      %v4362 = vsel %vm1685, 0.0, %v4264
      %v4363 = vsel %vm1685, 0.0, %v4269
      %v4364 = vsel %vm1685, 0.0, %v4274
      %v4365 = vsel %vm1685, 0.0, %v4279
      %v4366 = vsel %vm1685, 0.0, %v4284
      %v4367 = vsel %vm1685, %v4212, 0.0
      %v4368 = vsel %vm1685, %v4217, 0.0
      %v4369 = vsel %vm1685, %v4222, 0.0
      %v4370 = vsel %vm1685, %v4227, 0.0
      %v4371 = vsel %vm1685, %v4232, 0.0
      %v4372 = vsel %vm1685, %v4237, 0.0
      %v4373 = vsel %vm1685, %v4242, 0.0
      %v4374 = vsel %vm1685, %v4247, 0.0
      %v4375 = vsel %vm1685, %v4252, 0.0
      %v4376 = vsel %vm1685, %v4257, 0.0
      %v4377 = vsel %vm1685, %v4262, 0.0
      %v4378 = vsel %vm1685, %v4267, 0.0
      %v4379 = vsel %vm1685, %v4272, 0.0
      %v4380 = vsel %vm1685, %v4277, 0.0
      %v4381 = vsel %vm1685, %v4282, 0.0
      %v4382 = vsel %vm1685, %v4287, 0.0
      %v4413 = vrot.slane %v4351, 1
      %v4414 = vrot.slane %v4211, 1
      %v4415 = vsel %vm1898, %v4413, %v4414
      %v4416 = vrot.slane %v4213, 1
      %v4417 = vsel %vm1898, %v4414, %v4416
      %v4418 = vrot.slane %v4367, 1
      %v4419 = vsel %vm1898, %v4416, %v4418
      %v4420 = vrot.slane %v4352, 1
      %v4421 = vrot.slane %v4216, 1
      %v4422 = vsel %vm1898, %v4420, %v4421
      %v4423 = vrot.slane %v4218, 1
      %v4424 = vsel %vm1898, %v4421, %v4423
      %v4425 = vrot.slane %v4368, 1
      %v4426 = vsel %vm1898, %v4423, %v4425
      %v4427 = vrot.slane %v4353, 1
      %v4428 = vrot.slane %v4221, 1
      %v4429 = vsel %vm1898, %v4427, %v4428
      %v4430 = vrot.slane %v4223, 1
      %v4431 = vsel %vm1898, %v4428, %v4430
      %v4432 = vrot.slane %v4369, 1
      %v4433 = vsel %vm1898, %v4430, %v4432
      %v4434 = vrot.slane %v4354, 1
      %v4435 = vrot.slane %v4226, 1
      %v4436 = vsel %vm1898, %v4434, %v4435
      %v4437 = vrot.slane %v4228, 1
      %v4438 = vsel %vm1898, %v4435, %v4437
      %v4439 = vrot.slane %v4370, 1
      %v4440 = vsel %vm1898, %v4437, %v4439
      %v4441 = vrot.slane %v4355, 1
      %v4442 = vrot.slane %v4231, 1
      %v4443 = vsel %vm1898, %v4441, %v4442
      %v4444 = vrot.slane %v4233, 1
      %v4445 = vsel %vm1898, %v4442, %v4444
      %v4446 = vrot.slane %v4371, 1
      %v4447 = vsel %vm1898, %v4444, %v4446
      %v4448 = vrot.slane %v4356, 1
      %v4449 = vrot.slane %v4236, 1
      %v4450 = vsel %vm1898, %v4448, %v4449
      %v4451 = vrot.slane %v4238, 1
      %v4452 = vsel %vm1898, %v4449, %v4451
      %v4453 = vrot.slane %v4372, 1
      %v4454 = vsel %vm1898, %v4451, %v4453
      %v4455 = vrot.slane %v4357, 1
      %v4456 = vrot.slane %v4241, 1
      %v4457 = vsel %vm1898, %v4455, %v4456
      %v4458 = vrot.slane %v4243, 1
      %v4459 = vsel %vm1898, %v4456, %v4458
      %v4460 = vrot.slane %v4373, 1
      %v4461 = vsel %vm1898, %v4458, %v4460
      %v4462 = vrot.slane %v4358, 1
      %v4463 = vrot.slane %v4246, 1
      %v4464 = vsel %vm1898, %v4462, %v4463
      %v4465 = vrot.slane %v4248, 1
      %v4466 = vsel %vm1898, %v4463, %v4465
      %v4467 = vrot.slane %v4374, 1
      %v4468 = vsel %vm1898, %v4465, %v4467
      %v4469 = vrot.slane %v4359, 1
      %v4470 = vrot.slane %v4251, 1
      %v4471 = vsel %vm1898, %v4469, %v4470
      %v4472 = vrot.slane %v4253, 1
      %v4473 = vsel %vm1898, %v4470, %v4472
      %v4474 = vrot.slane %v4375, 1
      %v4475 = vsel %vm1898, %v4472, %v4474
      %v4476 = vrot.slane %v4360, 1
      %v4477 = vrot.slane %v4256, 1
      %v4478 = vsel %vm1898, %v4476, %v4477
      %v4479 = vrot.slane %v4258, 1
      %v4480 = vsel %vm1898, %v4477, %v4479
      %v4481 = vrot.slane %v4376, 1
      %v4482 = vsel %vm1898, %v4479, %v4481
      %v4483 = vrot.slane %v4361, 1
      %v4484 = vrot.slane %v4261, 1
      %v4485 = vsel %vm1898, %v4483, %v4484
      %v4486 = vrot.slane %v4263, 1
      %v4487 = vsel %vm1898, %v4484, %v4486
      %v4488 = vrot.slane %v4377, 1
      %v4489 = vsel %vm1898, %v4486, %v4488
      %v4490 = vrot.slane %v4362, 1
      %v4491 = vrot.slane %v4266, 1
      %v4492 = vsel %vm1898, %v4490, %v4491
      %v4493 = vrot.slane %v4268, 1
      %v4494 = vsel %vm1898, %v4491, %v4493
      %v4495 = vrot.slane %v4378, 1
      %v4496 = vsel %vm1898, %v4493, %v4495
      %v4497 = vrot.slane %v4363, 1
      %v4498 = vrot.slane %v4271, 1
      %v4499 = vsel %vm1898, %v4497, %v4498
      %v4500 = vrot.slane %v4273, 1
      %v4501 = vsel %vm1898, %v4498, %v4500
      %v4502 = vrot.slane %v4379, 1
      %v4503 = vsel %vm1898, %v4500, %v4502
      %v4504 = vrot.slane %v4364, 1
      %v4505 = vrot.slane %v4276, 1
      %v4506 = vsel %vm1898, %v4504, %v4505
      %v4507 = vrot.slane %v4278, 1
      %v4508 = vsel %vm1898, %v4505, %v4507
      %v4509 = vrot.slane %v4380, 1
      %v4510 = vsel %vm1898, %v4507, %v4509
      %v4511 = vrot.slane %v4365, 1
      %v4512 = vrot.slane %v4281, 1
      %v4513 = vsel %vm1898, %v4511, %v4512
      %v4514 = vrot.slane %v4283, 1
      %v4515 = vsel %vm1898, %v4512, %v4514
      %v4516 = vrot.slane %v4381, 1
      %v4517 = vsel %vm1898, %v4514, %v4516
      %4518 = vrot.lane.b32.xlu0 %v1901, 8
      %v4519 = vpop.permute.xlu0 %4518
      %4520 = vrot.lane.b32.xlu0 %v1902, 8
      %v4521 = vpop.permute.xlu0 %4520
      %4522 = vrot.lane.b32.xlu0 %v1904, 8
      %v4523 = vpop.permute.xlu0 %4522
      %4524 = vrot.lane.b32.xlu0 %v4415, 8
      %v4525 = vpop.permute.xlu0 %4524
      %4526 = vrot.lane.b32.xlu0 %v4417, 8
      %v4527 = vpop.permute.xlu0 %4526
      %4528 = vrot.lane.b32.xlu0 %v4419, 8
      %v4529 = vpop.permute.xlu0 %4528
      %4530 = vrot.lane.b32.xlu0 %v4422, 8
      %v4531 = vpop.permute.xlu0 %4530
      %4532 = vrot.lane.b32.xlu0 %v4424, 8
      %v4533 = vpop.permute.xlu0 %4532
      %4534 = vrot.lane.b32.xlu0 %v4426, 8
      %v4535 = vpop.permute.xlu0 %4534
      %4536 = vrot.lane.b32.xlu0 %v4429, 8
      %v4537 = vpop.permute.xlu0 %4536
      %4538 = vrot.lane.b32.xlu0 %v4431, 8
      %v4539 = vpop.permute.xlu0 %4538
      %4540 = vrot.lane.b32.xlu0 %v4433, 8
      %v4541 = vpop.permute.xlu0 %4540
      %4542 = vrot.lane.b32.xlu0 %v4436, 8
      %v4543 = vpop.permute.xlu0 %4542
      %4544 = vrot.lane.b32.xlu0 %v4438, 8
      %v4545 = vpop.permute.xlu0 %4544
      %4546 = vrot.lane.b32.xlu0 %v4440, 8
      %v4547 = vpop.permute.xlu0 %4546
      %4548 = vrot.lane.b32.xlu0 %v4443, 8
      %v4549 = vpop.permute.xlu0 %4548
      %4550 = vrot.lane.b32.xlu0 %v4445, 8
      %v4551 = vpop.permute.xlu0 %4550
      %4552 = vrot.lane.b32.xlu0 %v4447, 8
      %v4553 = vpop.permute.xlu0 %4552
      %4554 = vrot.lane.b32.xlu0 %v4450, 8
      %v4555 = vpop.permute.xlu0 %4554
      %4556 = vrot.lane.b32.xlu0 %v4452, 8
      %v4557 = vpop.permute.xlu0 %4556
      %4558 = vrot.lane.b32.xlu0 %v4454, 8
      %v4559 = vpop.permute.xlu0 %4558
      %4560 = vrot.lane.b32.xlu0 %v4457, 8
      %v4561 = vpop.permute.xlu0 %4560
      %4562 = vrot.lane.b32.xlu0 %v4459, 8
      %v4563 = vpop.permute.xlu0 %4562
      %4564 = vrot.lane.b32.xlu0 %v4461, 8
      %v4565 = vpop.permute.xlu0 %4564
      %4566 = vrot.lane.b32.xlu0 %v4464, 8
      %v4567 = vpop.permute.xlu0 %4566
      %4568 = vrot.lane.b32.xlu0 %v4466, 8
      %v4569 = vpop.permute.xlu0 %4568
      %4570 = vrot.lane.b32.xlu0 %v4468, 8
      %v4571 = vpop.permute.xlu0 %4570
      %4572 = vrot.lane.b32.xlu0 %v4471, 8
      %v4573 = vpop.permute.xlu0 %4572
      %4574 = vrot.lane.b32.xlu0 %v4473, 8
      %v4575 = vpop.permute.xlu0 %4574
      %4576 = vrot.lane.b32.xlu0 %v4475, 8
      %v4577 = vpop.permute.xlu0 %4576
      %4578 = vrot.lane.b32.xlu0 %v4478, 8
      %v4579 = vpop.permute.xlu0 %4578
      %4580 = vrot.lane.b32.xlu0 %v4480, 8
      %v4581 = vpop.permute.xlu0 %4580
      %4582 = vrot.lane.b32.xlu0 %v4482, 8
      %v4583 = vpop.permute.xlu0 %4582
      %4584 = vrot.lane.b32.xlu0 %v4485, 8
      %v4585 = vpop.permute.xlu0 %4584
      %4586 = vrot.lane.b32.xlu0 %v4487, 8
      %v4587 = vpop.permute.xlu0 %4586
      %4588 = vrot.lane.b32.xlu0 %v4489, 8
      %v4589 = vpop.permute.xlu0 %4588
      %4590 = vrot.lane.b32.xlu0 %v4492, 8
      %v4591 = vpop.permute.xlu0 %4590
      %4592 = vrot.lane.b32.xlu0 %v4494, 8
      %v4593 = vpop.permute.xlu0 %4592
      %4594 = vrot.lane.b32.xlu0 %v4496, 8
      %v4595 = vpop.permute.xlu0 %4594
      %4596 = vrot.lane.b32.xlu0 %v4499, 8
      %v4597 = vpop.permute.xlu0 %4596
      %4598 = vrot.lane.b32.xlu0 %v4501, 8
      %v4599 = vpop.permute.xlu0 %4598
      %4600 = vrot.lane.b32.xlu0 %v4503, 8
      %v4601 = vpop.permute.xlu0 %4600
      %4602 = vrot.lane.b32.xlu0 %v4506, 8
      %v4603 = vpop.permute.xlu0 %4602
      %4604 = vrot.lane.b32.xlu0 %v4508, 8
      %v4605 = vpop.permute.xlu0 %4604
      %4606 = vrot.lane.b32.xlu0 %v4510, 8
      %v4607 = vpop.permute.xlu0 %4606
      %4608 = vrot.lane.b32.xlu0 %v4513, 8
      %v4609 = vpop.permute.xlu0 %4608
      %4610 = vrot.lane.b32.xlu0 %v4515, 8
      %v4611 = vpop.permute.xlu0 %4610
      %4612 = vrot.lane.b32.xlu0 %v4517, 8
      %v4613 = vpop.permute.xlu0 %4612
      %v4662 = vrot.slane %v4351, 2
      %v4663 = vrot.slane %v4211, 2
      %v4664 = vsel %vm2154, %v4662, %v4663
      %v4665 = vrot.slane %v4213, 2
      %v4666 = vsel %vm2154, %v4663, %v4665
      %v4667 = vrot.slane %v4367, 2
      %v4668 = vsel %vm2154, %v4665, %v4667
      %v4669 = vrot.slane %v4352, 2
      %v4670 = vrot.slane %v4216, 2
      %v4671 = vsel %vm2154, %v4669, %v4670
      %v4672 = vrot.slane %v4218, 2
      %v4673 = vsel %vm2154, %v4670, %v4672
      %v4674 = vrot.slane %v4368, 2
      %v4675 = vsel %vm2154, %v4672, %v4674
      %v4676 = vrot.slane %v4353, 2
      %v4677 = vrot.slane %v4221, 2
      %v4678 = vsel %vm2154, %v4676, %v4677
      %v4679 = vrot.slane %v4223, 2
      %v4680 = vsel %vm2154, %v4677, %v4679
      %v4681 = vrot.slane %v4369, 2
      %v4682 = vsel %vm2154, %v4679, %v4681
      %v4683 = vrot.slane %v4354, 2
      %v4684 = vrot.slane %v4226, 2
      %v4685 = vsel %vm2154, %v4683, %v4684
      %v4686 = vrot.slane %v4228, 2
      %v4687 = vsel %vm2154, %v4684, %v4686
      %v4688 = vrot.slane %v4370, 2
      %v4689 = vsel %vm2154, %v4686, %v4688
      %v4690 = vrot.slane %v4355, 2
      %v4691 = vrot.slane %v4231, 2
      %v4692 = vsel %vm2154, %v4690, %v4691
      %v4693 = vrot.slane %v4233, 2
      %v4694 = vsel %vm2154, %v4691, %v4693
      %v4695 = vrot.slane %v4371, 2
      %v4696 = vsel %vm2154, %v4693, %v4695
      %v4697 = vrot.slane %v4356, 2
      %v4698 = vrot.slane %v4236, 2
      %v4699 = vsel %vm2154, %v4697, %v4698
      %v4700 = vrot.slane %v4238, 2
      %v4701 = vsel %vm2154, %v4698, %v4700
      %v4702 = vrot.slane %v4372, 2
      %v4703 = vsel %vm2154, %v4700, %v4702
      %v4704 = vrot.slane %v4357, 2
      %v4705 = vrot.slane %v4241, 2
      %v4706 = vsel %vm2154, %v4704, %v4705
      %v4707 = vrot.slane %v4243, 2
      %v4708 = vsel %vm2154, %v4705, %v4707
      %v4709 = vrot.slane %v4373, 2
      %v4710 = vsel %vm2154, %v4707, %v4709
      %v4711 = vrot.slane %v4358, 2
      %v4712 = vrot.slane %v4246, 2
      %v4713 = vsel %vm2154, %v4711, %v4712
      %v4714 = vrot.slane %v4248, 2
      %v4715 = vsel %vm2154, %v4712, %v4714
      %v4716 = vrot.slane %v4374, 2
      %v4717 = vsel %vm2154, %v4714, %v4716
      %v4718 = vrot.slane %v4359, 2
      %v4719 = vrot.slane %v4251, 2
      %v4720 = vsel %vm2154, %v4718, %v4719
      %v4721 = vrot.slane %v4253, 2
      %v4722 = vsel %vm2154, %v4719, %v4721
      %v4723 = vrot.slane %v4375, 2
      %v4724 = vsel %vm2154, %v4721, %v4723
      %v4725 = vrot.slane %v4360, 2
      %v4726 = vrot.slane %v4256, 2
      %v4727 = vsel %vm2154, %v4725, %v4726
      %v4728 = vrot.slane %v4258, 2
      %v4729 = vsel %vm2154, %v4726, %v4728
      %v4730 = vrot.slane %v4376, 2
      %v4731 = vsel %vm2154, %v4728, %v4730
      %v4732 = vrot.slane %v4361, 2
      %v4733 = vrot.slane %v4261, 2
      %v4734 = vsel %vm2154, %v4732, %v4733
      %v4735 = vrot.slane %v4263, 2
      %v4736 = vsel %vm2154, %v4733, %v4735
      %v4737 = vrot.slane %v4377, 2
      %v4738 = vsel %vm2154, %v4735, %v4737
      %v4739 = vrot.slane %v4362, 2
      %v4740 = vrot.slane %v4266, 2
      %v4741 = vsel %vm2154, %v4739, %v4740
      %v4742 = vrot.slane %v4268, 2
      %v4743 = vsel %vm2154, %v4740, %v4742
      %v4744 = vrot.slane %v4378, 2
      %v4745 = vsel %vm2154, %v4742, %v4744
      %v4746 = vrot.slane %v4363, 2
      %v4747 = vrot.slane %v4271, 2
      %v4748 = vsel %vm2154, %v4746, %v4747
      %v4749 = vrot.slane %v4273, 2
      %v4750 = vsel %vm2154, %v4747, %v4749
      %v4751 = vrot.slane %v4379, 2
      %v4752 = vsel %vm2154, %v4749, %v4751
      %v4753 = vrot.slane %v4364, 2
      %v4754 = vrot.slane %v4276, 2
      %v4755 = vsel %vm2154, %v4753, %v4754
      %v4756 = vrot.slane %v4278, 2
      %v4757 = vsel %vm2154, %v4754, %v4756
      %v4758 = vrot.slane %v4380, 2
      %v4759 = vsel %vm2154, %v4756, %v4758
      %v4760 = vrot.slane %v4365, 2
      %v4761 = vrot.slane %v4281, 2
      %v4762 = vsel %vm2154, %v4760, %v4761
      %v4763 = vrot.slane %v4283, 2
      %v4764 = vsel %vm2154, %v4761, %v4763
      %v4765 = vrot.slane %v4381, 2
      %v4766 = vsel %vm2154, %v4763, %v4765
      %4767 = vrot.lane.b32.xlu0 %v2157, 16
      %v4768 = vpop.permute.xlu0 %4767
      %4769 = vrot.lane.b32.xlu0 %v2158, 16
      %v4770 = vpop.permute.xlu0 %4769
      %4771 = vrot.lane.b32.xlu0 %v2160, 16
      %v4772 = vpop.permute.xlu0 %4771
      %4773 = vrot.lane.b32.xlu0 %v4664, 16
      %v4774 = vpop.permute.xlu0 %4773
      %4775 = vrot.lane.b32.xlu0 %v4666, 16
      %v4776 = vpop.permute.xlu0 %4775
      %4777 = vrot.lane.b32.xlu0 %v4668, 16
      %v4778 = vpop.permute.xlu0 %4777
      %4779 = vrot.lane.b32.xlu0 %v4671, 16
      %v4780 = vpop.permute.xlu0 %4779
      %4781 = vrot.lane.b32.xlu0 %v4673, 16
      %v4782 = vpop.permute.xlu0 %4781
      %4783 = vrot.lane.b32.xlu0 %v4675, 16
      %v4784 = vpop.permute.xlu0 %4783
      %4785 = vrot.lane.b32.xlu0 %v4678, 16
      %v4786 = vpop.permute.xlu0 %4785
      %4787 = vrot.lane.b32.xlu0 %v4680, 16
      %v4788 = vpop.permute.xlu0 %4787
      %4789 = vrot.lane.b32.xlu0 %v4682, 16
      %v4790 = vpop.permute.xlu0 %4789
      %4791 = vrot.lane.b32.xlu0 %v4685, 16
      %v4792 = vpop.permute.xlu0 %4791
      %4793 = vrot.lane.b32.xlu0 %v4687, 16
      %v4794 = vpop.permute.xlu0 %4793
      %4795 = vrot.lane.b32.xlu0 %v4689, 16
      %v4796 = vpop.permute.xlu0 %4795
      %4797 = vrot.lane.b32.xlu0 %v4692, 16
      %v4798 = vpop.permute.xlu0 %4797
      %4799 = vrot.lane.b32.xlu0 %v4694, 16
      %v4800 = vpop.permute.xlu0 %4799
      %4801 = vrot.lane.b32.xlu0 %v4696, 16
      %v4802 = vpop.permute.xlu0 %4801
      %4803 = vrot.lane.b32.xlu0 %v4699, 16
      %v4804 = vpop.permute.xlu0 %4803
      %4805 = vrot.lane.b32.xlu0 %v4701, 16
      %v4806 = vpop.permute.xlu0 %4805
      %4807 = vrot.lane.b32.xlu0 %v4703, 16
      %v4808 = vpop.permute.xlu0 %4807
      %4809 = vrot.lane.b32.xlu0 %v4706, 16
      %v4810 = vpop.permute.xlu0 %4809
      %4811 = vrot.lane.b32.xlu0 %v4708, 16
      %v4812 = vpop.permute.xlu0 %4811
      %4813 = vrot.lane.b32.xlu0 %v4710, 16
      %v4814 = vpop.permute.xlu0 %4813
      %4815 = vrot.lane.b32.xlu0 %v4713, 16
      %v4816 = vpop.permute.xlu0 %4815
      %4817 = vrot.lane.b32.xlu0 %v4715, 16
      %v4818 = vpop.permute.xlu0 %4817
      %4819 = vrot.lane.b32.xlu0 %v4717, 16
      %v4820 = vpop.permute.xlu0 %4819
      %4821 = vrot.lane.b32.xlu0 %v4720, 16
      %v4822 = vpop.permute.xlu0 %4821
      %4823 = vrot.lane.b32.xlu0 %v4722, 16
      %v4824 = vpop.permute.xlu0 %4823
      %4825 = vrot.lane.b32.xlu0 %v4724, 16
      %v4826 = vpop.permute.xlu0 %4825
      %4827 = vrot.lane.b32.xlu0 %v4727, 16
      %v4828 = vpop.permute.xlu0 %4827
      %4829 = vrot.lane.b32.xlu0 %v4729, 16
      %v4830 = vpop.permute.xlu0 %4829
      %4831 = vrot.lane.b32.xlu0 %v4731, 16
      %v4832 = vpop.permute.xlu0 %4831
      %4833 = vrot.lane.b32.xlu0 %v4734, 16
      %v4834 = vpop.permute.xlu0 %4833
      %4835 = vrot.lane.b32.xlu0 %v4736, 16
      %v4836 = vpop.permute.xlu0 %4835
      %4837 = vrot.lane.b32.xlu0 %v4738, 16
      %v4838 = vpop.permute.xlu0 %4837
      %4839 = vrot.lane.b32.xlu0 %v4741, 16
      %v4840 = vpop.permute.xlu0 %4839
      %4841 = vrot.lane.b32.xlu0 %v4743, 16
      %v4842 = vpop.permute.xlu0 %4841
      %4843 = vrot.lane.b32.xlu0 %v4745, 16
      %v4844 = vpop.permute.xlu0 %4843
      %4845 = vrot.lane.b32.xlu0 %v4748, 16
      %v4846 = vpop.permute.xlu0 %4845
      %4847 = vrot.lane.b32.xlu0 %v4750, 16
      %v4848 = vpop.permute.xlu0 %4847
      %4849 = vrot.lane.b32.xlu0 %v4752, 16
      %v4850 = vpop.permute.xlu0 %4849
      %4851 = vrot.lane.b32.xlu0 %v4755, 16
      %v4852 = vpop.permute.xlu0 %4851
      %4853 = vrot.lane.b32.xlu0 %v4757, 16
      %v4854 = vpop.permute.xlu0 %4853
      %4855 = vrot.lane.b32.xlu0 %v4759, 16
      %v4856 = vpop.permute.xlu0 %4855
      %4857 = vrot.lane.b32.xlu0 %v4762, 16
      %v4858 = vpop.permute.xlu0 %4857
      %4859 = vrot.lane.b32.xlu0 %v4764, 16
      %v4860 = vpop.permute.xlu0 %4859
      %4861 = vrot.lane.b32.xlu0 %v4766, 16
      %v4862 = vpop.permute.xlu0 %4861
      %4912 = vrot.lane.b32.xlu0 %v4351, 24
      %v4913 = vpop.permute.xlu0 %4912
      %4914 = vrot.lane.b32.xlu0 %v4211, 24
      %v4915 = vpop.permute.xlu0 %4914
      %4916 = vrot.lane.b32.xlu0 %v4213, 24
      %v4917 = vpop.permute.xlu0 %4916
      %4918 = vrot.lane.b32.xlu0 %v4352, 24
      %v4919 = vpop.permute.xlu0 %4918
      %4920 = vrot.lane.b32.xlu0 %v4216, 24
      %v4921 = vpop.permute.xlu0 %4920
      %4922 = vrot.lane.b32.xlu0 %v4218, 24
      %v4923 = vpop.permute.xlu0 %4922
      %4924 = vrot.lane.b32.xlu0 %v4353, 24
      %v4925 = vpop.permute.xlu0 %4924
      %4926 = vrot.lane.b32.xlu0 %v4221, 24
      %v4927 = vpop.permute.xlu0 %4926
      %4928 = vrot.lane.b32.xlu0 %v4223, 24
      %v4929 = vpop.permute.xlu0 %4928
      %4930 = vrot.lane.b32.xlu0 %v4354, 24
      %v4931 = vpop.permute.xlu0 %4930
      %4932 = vrot.lane.b32.xlu0 %v4226, 24
      %v4933 = vpop.permute.xlu0 %4932
      %4934 = vrot.lane.b32.xlu0 %v4228, 24
      %v4935 = vpop.permute.xlu0 %4934
      %4936 = vrot.lane.b32.xlu0 %v4355, 24
      %v4937 = vpop.permute.xlu0 %4936
      %4938 = vrot.lane.b32.xlu0 %v4231, 24
      %v4939 = vpop.permute.xlu0 %4938
      %4940 = vrot.lane.b32.xlu0 %v4233, 24
      %v4941 = vpop.permute.xlu0 %4940
      %4942 = vrot.lane.b32.xlu0 %v4356, 24
      %v4943 = vpop.permute.xlu0 %4942
      %4944 = vrot.lane.b32.xlu0 %v4236, 24
      %v4945 = vpop.permute.xlu0 %4944
      %4946 = vrot.lane.b32.xlu0 %v4238, 24
      %v4947 = vpop.permute.xlu0 %4946
      %4948 = vrot.lane.b32.xlu0 %v4357, 24
      %v4949 = vpop.permute.xlu0 %4948
      %4950 = vrot.lane.b32.xlu0 %v4241, 24
      %v4951 = vpop.permute.xlu0 %4950
      %4952 = vrot.lane.b32.xlu0 %v4243, 24
      %v4953 = vpop.permute.xlu0 %4952
      %4954 = vrot.lane.b32.xlu0 %v4358, 24
      %v4955 = vpop.permute.xlu0 %4954
      %4956 = vrot.lane.b32.xlu0 %v4246, 24
      %v4957 = vpop.permute.xlu0 %4956
      %4958 = vrot.lane.b32.xlu0 %v4248, 24
      %v4959 = vpop.permute.xlu0 %4958
      %4960 = vrot.lane.b32.xlu0 %v4359, 24
      %v4961 = vpop.permute.xlu0 %4960
      %4962 = vrot.lane.b32.xlu0 %v4251, 24
      %v4963 = vpop.permute.xlu0 %4962
      %4964 = vrot.lane.b32.xlu0 %v4253, 24
      %v4965 = vpop.permute.xlu0 %4964
      %4966 = vrot.lane.b32.xlu0 %v4360, 24
      %v4967 = vpop.permute.xlu0 %4966
      %4968 = vrot.lane.b32.xlu0 %v4256, 24
      %v4969 = vpop.permute.xlu0 %4968
      %4970 = vrot.lane.b32.xlu0 %v4258, 24
      %v4971 = vpop.permute.xlu0 %4970
      %4972 = vrot.lane.b32.xlu0 %v4361, 24
      %v4973 = vpop.permute.xlu0 %4972
      %4974 = vrot.lane.b32.xlu0 %v4261, 24
      %v4975 = vpop.permute.xlu0 %4974
      %4976 = vrot.lane.b32.xlu0 %v4263, 24
      %v4977 = vpop.permute.xlu0 %4976
      %4978 = vrot.lane.b32.xlu0 %v4362, 24
      %v4979 = vpop.permute.xlu0 %4978
      %4980 = vrot.lane.b32.xlu0 %v4266, 24
      %v4981 = vpop.permute.xlu0 %4980
      %4982 = vrot.lane.b32.xlu0 %v4268, 24
      %v4983 = vpop.permute.xlu0 %4982
      %4984 = vrot.lane.b32.xlu0 %v4363, 24
      %v4985 = vpop.permute.xlu0 %4984
      %4986 = vrot.lane.b32.xlu0 %v4271, 24
      %v4987 = vpop.permute.xlu0 %4986
      %4988 = vrot.lane.b32.xlu0 %v4273, 24
      %v4989 = vpop.permute.xlu0 %4988
      %4990 = vrot.lane.b32.xlu0 %v4364, 24
      %v4991 = vpop.permute.xlu0 %4990
      %4992 = vrot.lane.b32.xlu0 %v4276, 24
      %v4993 = vpop.permute.xlu0 %4992
      %4994 = vrot.lane.b32.xlu0 %v4278, 24
      %v4995 = vpop.permute.xlu0 %4994
      %4996 = vrot.lane.b32.xlu0 %v4365, 24
      %v4997 = vpop.permute.xlu0 %4996
      %4998 = vrot.lane.b32.xlu0 %v4281, 24
      %v4999 = vpop.permute.xlu0 %4998
      %5000 = vrot.lane.b32.xlu0 %v4283, 24
      %v5001 = vpop.permute.xlu0 %5000
      %5002 = vrot.lane.b32.xlu0 %v4366, 24
      %v5003 = vpop.permute.xlu0 %5002
      %5004 = vrot.lane.b32.xlu0 %v4286, 24
      %v5005 = vpop.permute.xlu0 %5004
      %5006 = vrot.lane.b32.xlu0 %v4288, 24
      %v5007 = vpop.permute.xlu0 %5006
      %v5057 = vrot.slane %v4366, 1
      %v5058 = vrot.slane %v4286, 1
      %v5059 = vsel %vm1898, %v5057, %v5058
      %v5060 = vrot.slane %v4288, 1
      %v5061 = vsel %vm1898, %v5058, %v5060
      %v5062 = vrot.slane %v4382, 1
      %v5063 = vsel %vm1898, %v5060, %v5062
      %5064 = vrot.lane.b32.xlu0 %v4415, 32
      %v5065 = vpop.permute.xlu0 %5064
      %5066 = vrot.lane.b32.xlu0 %v4417, 32
      %v5067 = vpop.permute.xlu0 %5066
      %5068 = vrot.lane.b32.xlu0 %v4419, 32
      %v5069 = vpop.permute.xlu0 %5068
      %5070 = vrot.lane.b32.xlu0 %v4422, 32
      %v5071 = vpop.permute.xlu0 %5070
      %5072 = vrot.lane.b32.xlu0 %v4424, 32
      %v5073 = vpop.permute.xlu0 %5072
      %5074 = vrot.lane.b32.xlu0 %v4426, 32
      %v5075 = vpop.permute.xlu0 %5074
      %5076 = vrot.lane.b32.xlu0 %v4429, 32
      %v5077 = vpop.permute.xlu0 %5076
      %5078 = vrot.lane.b32.xlu0 %v4431, 32
      %v5079 = vpop.permute.xlu0 %5078
      %5080 = vrot.lane.b32.xlu0 %v4433, 32
      %v5081 = vpop.permute.xlu0 %5080
      %5082 = vrot.lane.b32.xlu0 %v4436, 32
      %v5083 = vpop.permute.xlu0 %5082
      %5084 = vrot.lane.b32.xlu0 %v4438, 32
      %v5085 = vpop.permute.xlu0 %5084
      %5086 = vrot.lane.b32.xlu0 %v4440, 32
      %v5087 = vpop.permute.xlu0 %5086
      %5088 = vrot.lane.b32.xlu0 %v4443, 32
      %v5089 = vpop.permute.xlu0 %5088
      %5090 = vrot.lane.b32.xlu0 %v4445, 32
      %v5091 = vpop.permute.xlu0 %5090
      %5092 = vrot.lane.b32.xlu0 %v4447, 32
      %v5093 = vpop.permute.xlu0 %5092
      %5094 = vrot.lane.b32.xlu0 %v4450, 32
      %v5095 = vpop.permute.xlu0 %5094
      %5096 = vrot.lane.b32.xlu0 %v4452, 32
      %v5097 = vpop.permute.xlu0 %5096
      %5098 = vrot.lane.b32.xlu0 %v4454, 32
      %v5099 = vpop.permute.xlu0 %5098
      %5100 = vrot.lane.b32.xlu0 %v4457, 32
      %v5101 = vpop.permute.xlu0 %5100
      %5102 = vrot.lane.b32.xlu0 %v4459, 32
      %v5103 = vpop.permute.xlu0 %5102
      %5104 = vrot.lane.b32.xlu0 %v4461, 32
      %v5105 = vpop.permute.xlu0 %5104
      %5106 = vrot.lane.b32.xlu0 %v4464, 32
      %v5107 = vpop.permute.xlu0 %5106
      %5108 = vrot.lane.b32.xlu0 %v4466, 32
      %v5109 = vpop.permute.xlu0 %5108
      %5110 = vrot.lane.b32.xlu0 %v4468, 32
      %v5111 = vpop.permute.xlu0 %5110
      %5112 = vrot.lane.b32.xlu0 %v4471, 32
      %v5113 = vpop.permute.xlu0 %5112
      %5114 = vrot.lane.b32.xlu0 %v4473, 32
      %v5115 = vpop.permute.xlu0 %5114
      %5116 = vrot.lane.b32.xlu0 %v4475, 32
      %v5117 = vpop.permute.xlu0 %5116
      %5118 = vrot.lane.b32.xlu0 %v4478, 32
      %v5119 = vpop.permute.xlu0 %5118
      %5120 = vrot.lane.b32.xlu0 %v4480, 32
      %v5121 = vpop.permute.xlu0 %5120
      %5122 = vrot.lane.b32.xlu0 %v4482, 32
      %v5123 = vpop.permute.xlu0 %5122
      %5124 = vrot.lane.b32.xlu0 %v4485, 32
      %v5125 = vpop.permute.xlu0 %5124
      %5126 = vrot.lane.b32.xlu0 %v4487, 32
      %v5127 = vpop.permute.xlu0 %5126
      %5128 = vrot.lane.b32.xlu0 %v4489, 32
      %v5129 = vpop.permute.xlu0 %5128
      %5130 = vrot.lane.b32.xlu0 %v4492, 32
      %v5131 = vpop.permute.xlu0 %5130
      %5132 = vrot.lane.b32.xlu0 %v4494, 32
      %v5133 = vpop.permute.xlu0 %5132
      %5134 = vrot.lane.b32.xlu0 %v4496, 32
      %v5135 = vpop.permute.xlu0 %5134
      %5136 = vrot.lane.b32.xlu0 %v4499, 32
      %v5137 = vpop.permute.xlu0 %5136
      %5138 = vrot.lane.b32.xlu0 %v4501, 32
      %v5139 = vpop.permute.xlu0 %5138
      %5140 = vrot.lane.b32.xlu0 %v4503, 32
      %v5141 = vpop.permute.xlu0 %5140
      %5142 = vrot.lane.b32.xlu0 %v4506, 32
      %v5143 = vpop.permute.xlu0 %5142
      %5144 = vrot.lane.b32.xlu0 %v4508, 32
      %v5145 = vpop.permute.xlu0 %5144
      %5146 = vrot.lane.b32.xlu0 %v4510, 32
      %v5147 = vpop.permute.xlu0 %5146
      %5148 = vrot.lane.b32.xlu0 %v4513, 32
      %v5149 = vpop.permute.xlu0 %5148
      %5150 = vrot.lane.b32.xlu0 %v4515, 32
      %v5151 = vpop.permute.xlu0 %5150
      %5152 = vrot.lane.b32.xlu0 %v4517, 32
      %v5153 = vpop.permute.xlu0 %5152
      %5154 = vrot.lane.b32.xlu0 %v5059, 32
      %v5155 = vpop.permute.xlu0 %5154
      %5156 = vrot.lane.b32.xlu0 %v5061, 32
      %v5157 = vpop.permute.xlu0 %5156
      %5158 = vrot.lane.b32.xlu0 %v5063, 32
      %v5159 = vpop.permute.xlu0 %5158
      %v5208 = vrot.slane %v4366, 2
      %v5209 = vrot.slane %v4286, 2
      %v5210 = vsel %vm2154, %v5208, %v5209
      %v5211 = vrot.slane %v4288, 2
      %v5212 = vsel %vm2154, %v5209, %v5211
      %v5213 = vrot.slane %v4382, 2
      %v5214 = vsel %vm2154, %v5211, %v5213
      %5215 = vrot.lane.b32.xlu0 %v4664, 40
      %v5216 = vpop.permute.xlu0 %5215
      %5217 = vrot.lane.b32.xlu0 %v4666, 40
      %v5218 = vpop.permute.xlu0 %5217
      %5219 = vrot.lane.b32.xlu0 %v4668, 40
      %v5220 = vpop.permute.xlu0 %5219
      %5221 = vrot.lane.b32.xlu0 %v4671, 40
      %v5222 = vpop.permute.xlu0 %5221
      %5223 = vrot.lane.b32.xlu0 %v4673, 40
      %v5224 = vpop.permute.xlu0 %5223
      %5225 = vrot.lane.b32.xlu0 %v4675, 40
      %v5226 = vpop.permute.xlu0 %5225
      %5227 = vrot.lane.b32.xlu0 %v4678, 40
      %v5228 = vpop.permute.xlu0 %5227
      %5229 = vrot.lane.b32.xlu0 %v4680, 40
      %v5230 = vpop.permute.xlu0 %5229
      %5231 = vrot.lane.b32.xlu0 %v4682, 40
      %v5232 = vpop.permute.xlu0 %5231
      %5233 = vrot.lane.b32.xlu0 %v4685, 40
      %v5234 = vpop.permute.xlu0 %5233
      %5235 = vrot.lane.b32.xlu0 %v4687, 40
      %v5236 = vpop.permute.xlu0 %5235
      %5237 = vrot.lane.b32.xlu0 %v4689, 40
      %v5238 = vpop.permute.xlu0 %5237
      %5239 = vrot.lane.b32.xlu0 %v4692, 40
      %v5240 = vpop.permute.xlu0 %5239
      %5241 = vrot.lane.b32.xlu0 %v4694, 40
      %v5242 = vpop.permute.xlu0 %5241
      %5243 = vrot.lane.b32.xlu0 %v4696, 40
      %v5244 = vpop.permute.xlu0 %5243
      %5245 = vrot.lane.b32.xlu0 %v4699, 40
      %v5246 = vpop.permute.xlu0 %5245
      %5247 = vrot.lane.b32.xlu0 %v4701, 40
      %v5248 = vpop.permute.xlu0 %5247
      %5249 = vrot.lane.b32.xlu0 %v4703, 40
      %v5250 = vpop.permute.xlu0 %5249
      %5251 = vrot.lane.b32.xlu0 %v4706, 40
      %v5252 = vpop.permute.xlu0 %5251
      %5253 = vrot.lane.b32.xlu0 %v4708, 40
      %v5254 = vpop.permute.xlu0 %5253
      %5255 = vrot.lane.b32.xlu0 %v4710, 40
      %v5256 = vpop.permute.xlu0 %5255
      %5257 = vrot.lane.b32.xlu0 %v4713, 40
      %v5258 = vpop.permute.xlu0 %5257
      %5259 = vrot.lane.b32.xlu0 %v4715, 40
      %v5260 = vpop.permute.xlu0 %5259
      %5261 = vrot.lane.b32.xlu0 %v4717, 40
      %v5262 = vpop.permute.xlu0 %5261
      %5263 = vrot.lane.b32.xlu0 %v4720, 40
      %v5264 = vpop.permute.xlu0 %5263
      %5265 = vrot.lane.b32.xlu0 %v4722, 40
      %v5266 = vpop.permute.xlu0 %5265
      %5267 = vrot.lane.b32.xlu0 %v4724, 40
      %v5268 = vpop.permute.xlu0 %5267
      %5269 = vrot.lane.b32.xlu0 %v4727, 40
      %v5270 = vpop.permute.xlu0 %5269
      %5271 = vrot.lane.b32.xlu0 %v4729, 40
      %v5272 = vpop.permute.xlu0 %5271
      %5273 = vrot.lane.b32.xlu0 %v4731, 40
      %v5274 = vpop.permute.xlu0 %5273
      %5275 = vrot.lane.b32.xlu0 %v4734, 40
      %v5276 = vpop.permute.xlu0 %5275
      %5277 = vrot.lane.b32.xlu0 %v4736, 40
      %v5278 = vpop.permute.xlu0 %5277
      %5279 = vrot.lane.b32.xlu0 %v4738, 40
      %v5280 = vpop.permute.xlu0 %5279
      %5281 = vrot.lane.b32.xlu0 %v4741, 40
      %v5282 = vpop.permute.xlu0 %5281
      %5283 = vrot.lane.b32.xlu0 %v4743, 40
      %v5284 = vpop.permute.xlu0 %5283
      %5285 = vrot.lane.b32.xlu0 %v4745, 40
      %v5286 = vpop.permute.xlu0 %5285
      %5287 = vrot.lane.b32.xlu0 %v4748, 40
      %v5288 = vpop.permute.xlu0 %5287
      %5289 = vrot.lane.b32.xlu0 %v4750, 40
      %v5290 = vpop.permute.xlu0 %5289
      %5291 = vrot.lane.b32.xlu0 %v4752, 40
      %v5292 = vpop.permute.xlu0 %5291
      %5293 = vrot.lane.b32.xlu0 %v4755, 40
      %v5294 = vpop.permute.xlu0 %5293
      %5295 = vrot.lane.b32.xlu0 %v4757, 40
      %v5296 = vpop.permute.xlu0 %5295
      %5297 = vrot.lane.b32.xlu0 %v4759, 40
      %v5298 = vpop.permute.xlu0 %5297
      %5299 = vrot.lane.b32.xlu0 %v4762, 40
      %v5300 = vpop.permute.xlu0 %5299
      %5301 = vrot.lane.b32.xlu0 %v4764, 40
      %v5302 = vpop.permute.xlu0 %5301
      %5303 = vrot.lane.b32.xlu0 %v4766, 40
      %v5304 = vpop.permute.xlu0 %5303
      %5305 = vrot.lane.b32.xlu0 %v5210, 40
      %v5306 = vpop.permute.xlu0 %5305
      %5307 = vrot.lane.b32.xlu0 %v5212, 40
      %v5308 = vpop.permute.xlu0 %5307
      %5309 = vrot.lane.b32.xlu0 %v5214, 40
      %v5310 = vpop.permute.xlu0 %5309
      %5359 = vrot.lane.b32.xlu0 %v4352, 48
      %v5360 = vpop.permute.xlu0 %5359
      %5361 = vrot.lane.b32.xlu0 %v4216, 48
      %v5362 = vpop.permute.xlu0 %5361
      %5363 = vrot.lane.b32.xlu0 %v4218, 48
      %v5364 = vpop.permute.xlu0 %5363
      %5365 = vrot.lane.b32.xlu0 %v4353, 48
      %v5366 = vpop.permute.xlu0 %5365
      %5367 = vrot.lane.b32.xlu0 %v4221, 48
      %v5368 = vpop.permute.xlu0 %5367
      %5369 = vrot.lane.b32.xlu0 %v4223, 48
      %v5370 = vpop.permute.xlu0 %5369
      %5371 = vrot.lane.b32.xlu0 %v4354, 48
      %v5372 = vpop.permute.xlu0 %5371
      %5373 = vrot.lane.b32.xlu0 %v4226, 48
      %v5374 = vpop.permute.xlu0 %5373
      %5375 = vrot.lane.b32.xlu0 %v4228, 48
      %v5376 = vpop.permute.xlu0 %5375
      %5377 = vrot.lane.b32.xlu0 %v4355, 48
      %v5378 = vpop.permute.xlu0 %5377
      %5379 = vrot.lane.b32.xlu0 %v4231, 48
      %v5380 = vpop.permute.xlu0 %5379
      %5381 = vrot.lane.b32.xlu0 %v4233, 48
      %v5382 = vpop.permute.xlu0 %5381
      %5383 = vrot.lane.b32.xlu0 %v4356, 48
      %v5384 = vpop.permute.xlu0 %5383
      %5385 = vrot.lane.b32.xlu0 %v4236, 48
      %v5386 = vpop.permute.xlu0 %5385
      %5387 = vrot.lane.b32.xlu0 %v4238, 48
      %v5388 = vpop.permute.xlu0 %5387
      %5389 = vrot.lane.b32.xlu0 %v4357, 48
      %v5390 = vpop.permute.xlu0 %5389
      %5391 = vrot.lane.b32.xlu0 %v4241, 48
      %v5392 = vpop.permute.xlu0 %5391
      %5393 = vrot.lane.b32.xlu0 %v4243, 48
      %v5394 = vpop.permute.xlu0 %5393
      %5395 = vrot.lane.b32.xlu0 %v4358, 48
      %v5396 = vpop.permute.xlu0 %5395
      %5397 = vrot.lane.b32.xlu0 %v4246, 48
      %v5398 = vpop.permute.xlu0 %5397
      %5399 = vrot.lane.b32.xlu0 %v4248, 48
      %v5400 = vpop.permute.xlu0 %5399
      %5401 = vrot.lane.b32.xlu0 %v4359, 48
      %v5402 = vpop.permute.xlu0 %5401
      %5403 = vrot.lane.b32.xlu0 %v4251, 48
      %v5404 = vpop.permute.xlu0 %5403
      %5405 = vrot.lane.b32.xlu0 %v4253, 48
      %v5406 = vpop.permute.xlu0 %5405
      %5407 = vrot.lane.b32.xlu0 %v4360, 48
      %v5408 = vpop.permute.xlu0 %5407
      %5409 = vrot.lane.b32.xlu0 %v4256, 48
      %v5410 = vpop.permute.xlu0 %5409
      %5411 = vrot.lane.b32.xlu0 %v4258, 48
      %v5412 = vpop.permute.xlu0 %5411
      %5413 = vrot.lane.b32.xlu0 %v4361, 48
      %v5414 = vpop.permute.xlu0 %5413
      %5415 = vrot.lane.b32.xlu0 %v4261, 48
      %v5416 = vpop.permute.xlu0 %5415
      %5417 = vrot.lane.b32.xlu0 %v4263, 48
      %v5418 = vpop.permute.xlu0 %5417
      %5419 = vrot.lane.b32.xlu0 %v4362, 48
      %v5420 = vpop.permute.xlu0 %5419
      %5421 = vrot.lane.b32.xlu0 %v4266, 48
      %v5422 = vpop.permute.xlu0 %5421
      %5423 = vrot.lane.b32.xlu0 %v4268, 48
      %v5424 = vpop.permute.xlu0 %5423
      %5425 = vrot.lane.b32.xlu0 %v4363, 48
      %v5426 = vpop.permute.xlu0 %5425
      %5427 = vrot.lane.b32.xlu0 %v4271, 48
      %v5428 = vpop.permute.xlu0 %5427
      %5429 = vrot.lane.b32.xlu0 %v4273, 48
      %v5430 = vpop.permute.xlu0 %5429
      %5431 = vrot.lane.b32.xlu0 %v4364, 48
      %v5432 = vpop.permute.xlu0 %5431
      %5433 = vrot.lane.b32.xlu0 %v4276, 48
      %v5434 = vpop.permute.xlu0 %5433
      %5435 = vrot.lane.b32.xlu0 %v4278, 48
      %v5436 = vpop.permute.xlu0 %5435
      %5437 = vrot.lane.b32.xlu0 %v4365, 48
      %v5438 = vpop.permute.xlu0 %5437
      %5439 = vrot.lane.b32.xlu0 %v4281, 48
      %v5440 = vpop.permute.xlu0 %5439
      %5441 = vrot.lane.b32.xlu0 %v4283, 48
      %v5442 = vpop.permute.xlu0 %5441
      %5443 = vrot.lane.b32.xlu0 %v4366, 48
      %v5444 = vpop.permute.xlu0 %5443
      %5445 = vrot.lane.b32.xlu0 %v4286, 48
      %v5446 = vpop.permute.xlu0 %5445
      %5447 = vrot.lane.b32.xlu0 %v4288, 48
      %v5448 = vpop.permute.xlu0 %5447
      %5449 = vrot.lane.b32.xlu0 %v1832, 48
      %v5450 = vpop.permute.xlu0 %5449
      %5451 = vrot.lane.b32.xlu0 %v1687, 48
      %v5452 = vpop.permute.xlu0 %5451
      %5500 = vrot.lane.b32.xlu0 %v4422, 56
      %v5501 = vpop.permute.xlu0 %5500
      %5502 = vrot.lane.b32.xlu0 %v4424, 56
      %v5503 = vpop.permute.xlu0 %5502
      %5504 = vrot.lane.b32.xlu0 %v4426, 56
      %v5505 = vpop.permute.xlu0 %5504
      %5506 = vrot.lane.b32.xlu0 %v4429, 56
      %v5507 = vpop.permute.xlu0 %5506
      %5508 = vrot.lane.b32.xlu0 %v4431, 56
      %v5509 = vpop.permute.xlu0 %5508
      %5510 = vrot.lane.b32.xlu0 %v4433, 56
      %v5511 = vpop.permute.xlu0 %5510
      %5512 = vrot.lane.b32.xlu0 %v4436, 56
      %v5513 = vpop.permute.xlu0 %5512
      %5514 = vrot.lane.b32.xlu0 %v4438, 56
      %v5515 = vpop.permute.xlu0 %5514
      %5516 = vrot.lane.b32.xlu0 %v4440, 56
      %v5517 = vpop.permute.xlu0 %5516
      %5518 = vrot.lane.b32.xlu0 %v4443, 56
      %v5519 = vpop.permute.xlu0 %5518
      %5520 = vrot.lane.b32.xlu0 %v4445, 56
      %v5521 = vpop.permute.xlu0 %5520
      %5522 = vrot.lane.b32.xlu0 %v4447, 56
      %v5523 = vpop.permute.xlu0 %5522
      %5524 = vrot.lane.b32.xlu0 %v4450, 56
      %v5525 = vpop.permute.xlu0 %5524
      %5526 = vrot.lane.b32.xlu0 %v4452, 56
      %v5527 = vpop.permute.xlu0 %5526
      %5528 = vrot.lane.b32.xlu0 %v4454, 56
      %v5529 = vpop.permute.xlu0 %5528
      %5530 = vrot.lane.b32.xlu0 %v4457, 56
      %v5531 = vpop.permute.xlu0 %5530
      %5532 = vrot.lane.b32.xlu0 %v4459, 56
      %v5533 = vpop.permute.xlu0 %5532
      %5534 = vrot.lane.b32.xlu0 %v4461, 56
      %v5535 = vpop.permute.xlu0 %5534
      %5536 = vrot.lane.b32.xlu0 %v4464, 56
      %v5537 = vpop.permute.xlu0 %5536
      %5538 = vrot.lane.b32.xlu0 %v4466, 56
      %v5539 = vpop.permute.xlu0 %5538
      %5540 = vrot.lane.b32.xlu0 %v4468, 56
      %v5541 = vpop.permute.xlu0 %5540
      %5542 = vrot.lane.b32.xlu0 %v4471, 56
      %v5543 = vpop.permute.xlu0 %5542
      %5544 = vrot.lane.b32.xlu0 %v4473, 56
      %v5545 = vpop.permute.xlu0 %5544
      %5546 = vrot.lane.b32.xlu0 %v4475, 56
      %v5547 = vpop.permute.xlu0 %5546
      %5548 = vrot.lane.b32.xlu0 %v4478, 56
      %v5549 = vpop.permute.xlu0 %5548
      %5550 = vrot.lane.b32.xlu0 %v4480, 56
      %v5551 = vpop.permute.xlu0 %5550
      %5552 = vrot.lane.b32.xlu0 %v4482, 56
      %v5553 = vpop.permute.xlu0 %5552
      %5554 = vrot.lane.b32.xlu0 %v4485, 56
      %v5555 = vpop.permute.xlu0 %5554
      %5556 = vrot.lane.b32.xlu0 %v4487, 56
      %v5557 = vpop.permute.xlu0 %5556
      %5558 = vrot.lane.b32.xlu0 %v4489, 56
      %v5559 = vpop.permute.xlu0 %5558
      %5560 = vrot.lane.b32.xlu0 %v4492, 56
      %v5561 = vpop.permute.xlu0 %5560
      %5562 = vrot.lane.b32.xlu0 %v4494, 56
      %v5563 = vpop.permute.xlu0 %5562
      %5564 = vrot.lane.b32.xlu0 %v4496, 56
      %v5565 = vpop.permute.xlu0 %5564
      %5566 = vrot.lane.b32.xlu0 %v4499, 56
      %v5567 = vpop.permute.xlu0 %5566
      %5568 = vrot.lane.b32.xlu0 %v4501, 56
      %v5569 = vpop.permute.xlu0 %5568
      %5570 = vrot.lane.b32.xlu0 %v4503, 56
      %v5571 = vpop.permute.xlu0 %5570
      %5572 = vrot.lane.b32.xlu0 %v4506, 56
      %v5573 = vpop.permute.xlu0 %5572
      %5574 = vrot.lane.b32.xlu0 %v4508, 56
      %v5575 = vpop.permute.xlu0 %5574
      %5576 = vrot.lane.b32.xlu0 %v4510, 56
      %v5577 = vpop.permute.xlu0 %5576
      %5578 = vrot.lane.b32.xlu0 %v4513, 56
      %v5579 = vpop.permute.xlu0 %5578
      %5580 = vrot.lane.b32.xlu0 %v4515, 56
      %v5581 = vpop.permute.xlu0 %5580
      %5582 = vrot.lane.b32.xlu0 %v4517, 56
      %v5583 = vpop.permute.xlu0 %5582
      %5584 = vrot.lane.b32.xlu0 %v5059, 56
      %v5585 = vpop.permute.xlu0 %5584
      %5586 = vrot.lane.b32.xlu0 %v5061, 56
      %v5587 = vpop.permute.xlu0 %5586
      %5588 = vrot.lane.b32.xlu0 %v5063, 56
      %v5589 = vpop.permute.xlu0 %5588
      %5590 = vrot.lane.b32.xlu0 %v1901, 56
      %v5591 = vpop.permute.xlu0 %5590
      %5592 = vrot.lane.b32.xlu0 %v1902, 56
      %v5593 = vpop.permute.xlu0 %5592
      %5594 = vrot.lane.b32.xlu0 %v1904, 56
      %v5595 = vpop.permute.xlu0 %5594
      %5644 = vrot.lane.b32.xlu0 %v4671, 64
      %v5645 = vpop.permute.xlu0 %5644
      %5646 = vrot.lane.b32.xlu0 %v4673, 64
      %v5647 = vpop.permute.xlu0 %5646
      %5648 = vrot.lane.b32.xlu0 %v4675, 64
      %v5649 = vpop.permute.xlu0 %5648
      %5650 = vrot.lane.b32.xlu0 %v4678, 64
      %v5651 = vpop.permute.xlu0 %5650
      %5652 = vrot.lane.b32.xlu0 %v4680, 64
      %v5653 = vpop.permute.xlu0 %5652
      %5654 = vrot.lane.b32.xlu0 %v4682, 64
      %v5655 = vpop.permute.xlu0 %5654
      %5656 = vrot.lane.b32.xlu0 %v4685, 64
      %v5657 = vpop.permute.xlu0 %5656
      %5658 = vrot.lane.b32.xlu0 %v4687, 64
      %v5659 = vpop.permute.xlu0 %5658
      %5660 = vrot.lane.b32.xlu0 %v4689, 64
      %v5661 = vpop.permute.xlu0 %5660
      %5662 = vrot.lane.b32.xlu0 %v4692, 64
      %v5663 = vpop.permute.xlu0 %5662
      %5664 = vrot.lane.b32.xlu0 %v4694, 64
      %v5665 = vpop.permute.xlu0 %5664
      %5666 = vrot.lane.b32.xlu0 %v4696, 64
      %v5667 = vpop.permute.xlu0 %5666
      %5668 = vrot.lane.b32.xlu0 %v4699, 64
      %v5669 = vpop.permute.xlu0 %5668
      %5670 = vrot.lane.b32.xlu0 %v4701, 64
      %v5671 = vpop.permute.xlu0 %5670
      %5672 = vrot.lane.b32.xlu0 %v4703, 64
      %v5673 = vpop.permute.xlu0 %5672
      %5674 = vrot.lane.b32.xlu0 %v4706, 64
      %v5675 = vpop.permute.xlu0 %5674
      %5676 = vrot.lane.b32.xlu0 %v4708, 64
      %v5677 = vpop.permute.xlu0 %5676
      %5678 = vrot.lane.b32.xlu0 %v4710, 64
      %v5679 = vpop.permute.xlu0 %5678
      %5680 = vrot.lane.b32.xlu0 %v4713, 64
      %v5681 = vpop.permute.xlu0 %5680
      %5682 = vrot.lane.b32.xlu0 %v4715, 64
      %v5683 = vpop.permute.xlu0 %5682
      %5684 = vrot.lane.b32.xlu0 %v4717, 64
      %v5685 = vpop.permute.xlu0 %5684
      %5686 = vrot.lane.b32.xlu0 %v4720, 64
      %v5687 = vpop.permute.xlu0 %5686
      %5688 = vrot.lane.b32.xlu0 %v4722, 64
      %v5689 = vpop.permute.xlu0 %5688
      %5690 = vrot.lane.b32.xlu0 %v4724, 64
      %v5691 = vpop.permute.xlu0 %5690
      %5692 = vrot.lane.b32.xlu0 %v4727, 64
      %v5693 = vpop.permute.xlu0 %5692
      %5694 = vrot.lane.b32.xlu0 %v4729, 64
      %v5695 = vpop.permute.xlu0 %5694
      %5696 = vrot.lane.b32.xlu0 %v4731, 64
      %v5697 = vpop.permute.xlu0 %5696
      %5698 = vrot.lane.b32.xlu0 %v4734, 64
      %v5699 = vpop.permute.xlu0 %5698
      %5700 = vrot.lane.b32.xlu0 %v4736, 64
      %v5701 = vpop.permute.xlu0 %5700
      %5702 = vrot.lane.b32.xlu0 %v4738, 64
      %v5703 = vpop.permute.xlu0 %5702
      %5704 = vrot.lane.b32.xlu0 %v4741, 64
      %v5705 = vpop.permute.xlu0 %5704
      %5706 = vrot.lane.b32.xlu0 %v4743, 64
      %v5707 = vpop.permute.xlu0 %5706
      %5708 = vrot.lane.b32.xlu0 %v4745, 64
      %v5709 = vpop.permute.xlu0 %5708
      %5710 = vrot.lane.b32.xlu0 %v4748, 64
      %v5711 = vpop.permute.xlu0 %5710
      %5712 = vrot.lane.b32.xlu0 %v4750, 64
      %v5713 = vpop.permute.xlu0 %5712
      %5714 = vrot.lane.b32.xlu0 %v4752, 64
      %v5715 = vpop.permute.xlu0 %5714
      %5716 = vrot.lane.b32.xlu0 %v4755, 64
      %v5717 = vpop.permute.xlu0 %5716
      %5718 = vrot.lane.b32.xlu0 %v4757, 64
      %v5719 = vpop.permute.xlu0 %5718
      %5720 = vrot.lane.b32.xlu0 %v4759, 64
      %v5721 = vpop.permute.xlu0 %5720
      %5722 = vrot.lane.b32.xlu0 %v4762, 64
      %v5723 = vpop.permute.xlu0 %5722
      %5724 = vrot.lane.b32.xlu0 %v4764, 64
      %v5725 = vpop.permute.xlu0 %5724
      %5726 = vrot.lane.b32.xlu0 %v4766, 64
      %v5727 = vpop.permute.xlu0 %5726
      %5728 = vrot.lane.b32.xlu0 %v5210, 64
      %v5729 = vpop.permute.xlu0 %5728
      %5730 = vrot.lane.b32.xlu0 %v5212, 64
      %v5731 = vpop.permute.xlu0 %5730
      %5732 = vrot.lane.b32.xlu0 %v5214, 64
      %v5733 = vpop.permute.xlu0 %5732
      %5734 = vrot.lane.b32.xlu0 %v2157, 64
      %v5735 = vpop.permute.xlu0 %5734
      %5736 = vrot.lane.b32.xlu0 %v2158, 64
      %v5737 = vpop.permute.xlu0 %5736
      %5738 = vrot.lane.b32.xlu0 %v2160, 64
      %v5739 = vpop.permute.xlu0 %5738
      %vm5788 = vcmask 64512
      %v5789 = vsel %vm5788, %v1832, %v4519
      %v5790 = vsel %vm5788, %v1687, %v4521
      %v5791 = vsel %vm5788, %v1687, %v4523
      %v5792 = vsel %vm5788, %v4351, %v4525
      %v5793 = vsel %vm5788, %v4211, %v4527
      %v5794 = vsel %vm5788, %v4213, %v4529
      %v5795 = vsel %vm5788, %v4352, %v4531
      %v5796 = vsel %vm5788, %v4216, %v4533
      %v5797 = vsel %vm5788, %v4218, %v4535
      %v5798 = vsel %vm5788, %v4353, %v4537
      %v5799 = vsel %vm5788, %v4221, %v4539
      %v5800 = vsel %vm5788, %v4223, %v4541
      %v5801 = vsel %vm5788, %v4354, %v4543
      %v5802 = vsel %vm5788, %v4226, %v4545
      %v5803 = vsel %vm5788, %v4228, %v4547
      %v5804 = vsel %vm5788, %v4355, %v4549
      %v5805 = vsel %vm5788, %v4231, %v4551
      %v5806 = vsel %vm5788, %v4233, %v4553
      %v5807 = vsel %vm5788, %v4356, %v4555
      %v5808 = vsel %vm5788, %v4236, %v4557
      %v5809 = vsel %vm5788, %v4238, %v4559
      %v5810 = vsel %vm5788, %v4357, %v4561
      %v5811 = vsel %vm5788, %v4241, %v4563
      %v5812 = vsel %vm5788, %v4243, %v4565
      %v5813 = vsel %vm5788, %v4358, %v4567
      %v5814 = vsel %vm5788, %v4246, %v4569
      %v5815 = vsel %vm5788, %v4248, %v4571
      %v5816 = vsel %vm5788, %v4359, %v4573
      %v5817 = vsel %vm5788, %v4251, %v4575
      %v5818 = vsel %vm5788, %v4253, %v4577
      %v5819 = vsel %vm5788, %v4360, %v4579
      %v5820 = vsel %vm5788, %v4256, %v4581
      %v5821 = vsel %vm5788, %v4258, %v4583
      %v5822 = vsel %vm5788, %v4361, %v4585
      %v5823 = vsel %vm5788, %v4261, %v4587
      %v5824 = vsel %vm5788, %v4263, %v4589
      %v5825 = vsel %vm5788, %v4362, %v4591
      %v5826 = vsel %vm5788, %v4266, %v4593
      %v5827 = vsel %vm5788, %v4268, %v4595
      %v5828 = vsel %vm5788, %v4363, %v4597
      %v5829 = vsel %vm5788, %v4271, %v4599
      %v5830 = vsel %vm5788, %v4273, %v4601
      %v5831 = vsel %vm5788, %v4364, %v4603
      %v5832 = vsel %vm5788, %v4276, %v4605
      %v5833 = vsel %vm5788, %v4278, %v4607
      %v5834 = vsel %vm5788, %v4365, %v4609
      %v5835 = vsel %vm5788, %v4281, %v4611
      %v5836 = vsel %vm5788, %v4283, %v4613
      %vm5837 = vcmask 130048
      %v5838 = vsel %vm5837, %v5789, %v4768
      %v5839 = vsel %vm5837, %v5790, %v4770
      %v5840 = vsel %vm5837, %v5791, %v4772
      %v5841 = vsel %vm5837, %v5792, %v4774
      %v5842 = vsel %vm5837, %v5793, %v4776
      %v5843 = vsel %vm5837, %v5794, %v4778
      %v5844 = vsel %vm5837, %v5795, %v4780
      %v5845 = vsel %vm5837, %v5796, %v4782
      %v5846 = vsel %vm5837, %v5797, %v4784
      %v5847 = vsel %vm5837, %v5798, %v4786
      %v5848 = vsel %vm5837, %v5799, %v4788
      %v5849 = vsel %vm5837, %v5800, %v4790
      %v5850 = vsel %vm5837, %v5801, %v4792
      %v5851 = vsel %vm5837, %v5802, %v4794
      %v5852 = vsel %vm5837, %v5803, %v4796
      %v5853 = vsel %vm5837, %v5804, %v4798
      %v5854 = vsel %vm5837, %v5805, %v4800
      %v5855 = vsel %vm5837, %v5806, %v4802
      %v5856 = vsel %vm5837, %v5807, %v4804
      %v5857 = vsel %vm5837, %v5808, %v4806
      %v5858 = vsel %vm5837, %v5809, %v4808
      %v5859 = vsel %vm5837, %v5810, %v4810
      %v5860 = vsel %vm5837, %v5811, %v4812
      %v5861 = vsel %vm5837, %v5812, %v4814
      %v5862 = vsel %vm5837, %v5813, %v4816
      %v5863 = vsel %vm5837, %v5814, %v4818
      %v5864 = vsel %vm5837, %v5815, %v4820
      %v5865 = vsel %vm5837, %v5816, %v4822
      %v5866 = vsel %vm5837, %v5817, %v4824
      %v5867 = vsel %vm5837, %v5818, %v4826
      %v5868 = vsel %vm5837, %v5819, %v4828
      %v5869 = vsel %vm5837, %v5820, %v4830
      %v5870 = vsel %vm5837, %v5821, %v4832
      %v5871 = vsel %vm5837, %v5822, %v4834
      %v5872 = vsel %vm5837, %v5823, %v4836
      %v5873 = vsel %vm5837, %v5824, %v4838
      %v5874 = vsel %vm5837, %v5825, %v4840
      %v5875 = vsel %vm5837, %v5826, %v4842
      %v5876 = vsel %vm5837, %v5827, %v4844
      %v5877 = vsel %vm5837, %v5828, %v4846
      %v5878 = vsel %vm5837, %v5829, %v4848
      %v5879 = vsel %vm5837, %v5830, %v4850
      %v5880 = vsel %vm5837, %v5831, %v4852
      %v5881 = vsel %vm5837, %v5832, %v4854
      %v5882 = vsel %vm5837, %v5833, %v4856
      %v5883 = vsel %vm5837, %v5834, %v4858
      %v5884 = vsel %vm5837, %v5835, %v4860
      %v5885 = vsel %vm5837, %v5836, %v4862
      %v5886 = vsel %vm3335, %v5838, %v4913
      %v5887 = vsel %vm3335, %v5839, %v4915
      %v5888 = vsel %vm3335, %v5840, %v4917
      %v5889 = vsel %vm3335, %v5841, %v4919
      %v5890 = vsel %vm3335, %v5842, %v4921
      %v5891 = vsel %vm3335, %v5843, %v4923
      %v5892 = vsel %vm3335, %v5844, %v4925
      %v5893 = vsel %vm3335, %v5845, %v4927
      %v5894 = vsel %vm3335, %v5846, %v4929
      %v5895 = vsel %vm3335, %v5847, %v4931
      %v5896 = vsel %vm3335, %v5848, %v4933
      %v5897 = vsel %vm3335, %v5849, %v4935
      %v5898 = vsel %vm3335, %v5850, %v4937
      %v5899 = vsel %vm3335, %v5851, %v4939
      %v5900 = vsel %vm3335, %v5852, %v4941
      %v5901 = vsel %vm3335, %v5853, %v4943
      %v5902 = vsel %vm3335, %v5854, %v4945
      %v5903 = vsel %vm3335, %v5855, %v4947
      %v5904 = vsel %vm3335, %v5856, %v4949
      %v5905 = vsel %vm3335, %v5857, %v4951
      %v5906 = vsel %vm3335, %v5858, %v4953
      %v5907 = vsel %vm3335, %v5859, %v4955
      %v5908 = vsel %vm3335, %v5860, %v4957
      %v5909 = vsel %vm3335, %v5861, %v4959
      %v5910 = vsel %vm3335, %v5862, %v4961
      %v5911 = vsel %vm3335, %v5863, %v4963
      %v5912 = vsel %vm3335, %v5864, %v4965
      %v5913 = vsel %vm3335, %v5865, %v4967
      %v5914 = vsel %vm3335, %v5866, %v4969
      %v5915 = vsel %vm3335, %v5867, %v4971
      %v5916 = vsel %vm3335, %v5868, %v4973
      %v5917 = vsel %vm3335, %v5869, %v4975
      %v5918 = vsel %vm3335, %v5870, %v4977
      %v5919 = vsel %vm3335, %v5871, %v4979
      %v5920 = vsel %vm3335, %v5872, %v4981
      %v5921 = vsel %vm3335, %v5873, %v4983
      %v5922 = vsel %vm3335, %v5874, %v4985
      %v5923 = vsel %vm3335, %v5875, %v4987
      %v5924 = vsel %vm3335, %v5876, %v4989
      %v5925 = vsel %vm3335, %v5877, %v4991
      %v5926 = vsel %vm3335, %v5878, %v4993
      %v5927 = vsel %vm3335, %v5879, %v4995
      %v5928 = vsel %vm3335, %v5880, %v4997
      %v5929 = vsel %vm3335, %v5881, %v4999
      %v5930 = vsel %vm3335, %v5882, %v5001
      %v5931 = vsel %vm3335, %v5883, %v5003
      %v5932 = vsel %vm3335, %v5884, %v5005
      %v5933 = vsel %vm3335, %v5885, %v5007
      %vm5934 = vcmask 261120
      %v5935 = vsel %vm5934, %v5886, %v5065
      %v5936 = vsel %vm5934, %v5887, %v5067
      %v5937 = vsel %vm5934, %v5888, %v5069
      %v5938 = vsel %vm5934, %v5889, %v5071
      %v5939 = vsel %vm5934, %v5890, %v5073
      %v5940 = vsel %vm5934, %v5891, %v5075
      %v5941 = vsel %vm5934, %v5892, %v5077
      %v5942 = vsel %vm5934, %v5893, %v5079
      %v5943 = vsel %vm5934, %v5894, %v5081
      %v5944 = vsel %vm5934, %v5895, %v5083
      %v5945 = vsel %vm5934, %v5896, %v5085
      %v5946 = vsel %vm5934, %v5897, %v5087
      %v5947 = vsel %vm5934, %v5898, %v5089
      %v5948 = vsel %vm5934, %v5899, %v5091
      %v5949 = vsel %vm5934, %v5900, %v5093
      %v5950 = vsel %vm5934, %v5901, %v5095
      %v5951 = vsel %vm5934, %v5902, %v5097
      %v5952 = vsel %vm5934, %v5903, %v5099
      %v5953 = vsel %vm5934, %v5904, %v5101
      %v5954 = vsel %vm5934, %v5905, %v5103
      %v5955 = vsel %vm5934, %v5906, %v5105
      %v5956 = vsel %vm5934, %v5907, %v5107
      %v5957 = vsel %vm5934, %v5908, %v5109
      %v5958 = vsel %vm5934, %v5909, %v5111
      %v5959 = vsel %vm5934, %v5910, %v5113
      %v5960 = vsel %vm5934, %v5911, %v5115
      %v5961 = vsel %vm5934, %v5912, %v5117
      %v5962 = vsel %vm5934, %v5913, %v5119
      %v5963 = vsel %vm5934, %v5914, %v5121
      %v5964 = vsel %vm5934, %v5915, %v5123
      %v5965 = vsel %vm5934, %v5916, %v5125
      %v5966 = vsel %vm5934, %v5917, %v5127
      %v5967 = vsel %vm5934, %v5918, %v5129
      %v5968 = vsel %vm5934, %v5919, %v5131
      %v5969 = vsel %vm5934, %v5920, %v5133
      %v5970 = vsel %vm5934, %v5921, %v5135
      %v5971 = vsel %vm5934, %v5922, %v5137
      %v5972 = vsel %vm5934, %v5923, %v5139
      %v5973 = vsel %vm5934, %v5924, %v5141
      %v5974 = vsel %vm5934, %v5925, %v5143
      %v5975 = vsel %vm5934, %v5926, %v5145
      %v5976 = vsel %vm5934, %v5927, %v5147
      %v5977 = vsel %vm5934, %v5928, %v5149
      %v5978 = vsel %vm5934, %v5929, %v5151
      %v5979 = vsel %vm5934, %v5930, %v5153
      %v5980 = vsel %vm5934, %v5931, %v5155
      %v5981 = vsel %vm5934, %v5932, %v5157
      %v5982 = vsel %vm5934, %v5933, %v5159
      %vm5983 = vcmask 326656
      %v5984 = vsel %vm5983, %v5935, %v5216
      %v5985 = vsel %vm5983, %v5936, %v5218
      %v5986 = vsel %vm5983, %v5937, %v5220
      %v5987 = vsel %vm5983, %v5938, %v5222
      %v5988 = vsel %vm5983, %v5939, %v5224
      %v5989 = vsel %vm5983, %v5940, %v5226
      %v5990 = vsel %vm5983, %v5941, %v5228
      %v5991 = vsel %vm5983, %v5942, %v5230
      %v5992 = vsel %vm5983, %v5943, %v5232
      %v5993 = vsel %vm5983, %v5944, %v5234
      %v5994 = vsel %vm5983, %v5945, %v5236
      %v5995 = vsel %vm5983, %v5946, %v5238
      %v5996 = vsel %vm5983, %v5947, %v5240
      %v5997 = vsel %vm5983, %v5948, %v5242
      %v5998 = vsel %vm5983, %v5949, %v5244
      %v5999 = vsel %vm5983, %v5950, %v5246
      %v6000 = vsel %vm5983, %v5951, %v5248
      %v6001 = vsel %vm5983, %v5952, %v5250
      %v6002 = vsel %vm5983, %v5953, %v5252
      %v6003 = vsel %vm5983, %v5954, %v5254
      %v6004 = vsel %vm5983, %v5955, %v5256
      %v6005 = vsel %vm5983, %v5956, %v5258
      %v6006 = vsel %vm5983, %v5957, %v5260
      %v6007 = vsel %vm5983, %v5958, %v5262
      %v6008 = vsel %vm5983, %v5959, %v5264
      %v6009 = vsel %vm5983, %v5960, %v5266
      %v6010 = vsel %vm5983, %v5961, %v5268
      %v6011 = vsel %vm5983, %v5962, %v5270
      %v6012 = vsel %vm5983, %v5963, %v5272
      %v6013 = vsel %vm5983, %v5964, %v5274
      %v6014 = vsel %vm5983, %v5965, %v5276
      %v6015 = vsel %vm5983, %v5966, %v5278
      %v6016 = vsel %vm5983, %v5967, %v5280
      %v6017 = vsel %vm5983, %v5968, %v5282
      %v6018 = vsel %vm5983, %v5969, %v5284
      %v6019 = vsel %vm5983, %v5970, %v5286
      %v6020 = vsel %vm5983, %v5971, %v5288
      %v6021 = vsel %vm5983, %v5972, %v5290
      %v6022 = vsel %vm5983, %v5973, %v5292
      %v6023 = vsel %vm5983, %v5974, %v5294
      %v6024 = vsel %vm5983, %v5975, %v5296
      %v6025 = vsel %vm5983, %v5976, %v5298
      %v6026 = vsel %vm5983, %v5977, %v5300
      %v6027 = vsel %vm5983, %v5978, %v5302
      %v6028 = vsel %vm5983, %v5979, %v5304
      %v6029 = vsel %vm5983, %v5980, %v5306
      %v6030 = vsel %vm5983, %v5981, %v5308
      %v6031 = vsel %vm5983, %v5982, %v5310
      %v6032 = vsel %vm3433, %v5984, %v5360
      %v6033 = vsel %vm3433, %v5985, %v5362
      %v6034 = vsel %vm3433, %v5986, %v5364
      %v6035 = vsel %vm3433, %v5987, %v5366
      %v6036 = vsel %vm3433, %v5988, %v5368
      %v6037 = vsel %vm3433, %v5989, %v5370
      %v6038 = vsel %vm3433, %v5990, %v5372
      %v6039 = vsel %vm3433, %v5991, %v5374
      %v6040 = vsel %vm3433, %v5992, %v5376
      %v6041 = vsel %vm3433, %v5993, %v5378
      %v6042 = vsel %vm3433, %v5994, %v5380
      %v6043 = vsel %vm3433, %v5995, %v5382
      %v6044 = vsel %vm3433, %v5996, %v5384
      %v6045 = vsel %vm3433, %v5997, %v5386
      %v6046 = vsel %vm3433, %v5998, %v5388
      %v6047 = vsel %vm3433, %v5999, %v5390
      %v6048 = vsel %vm3433, %v6000, %v5392
      %v6049 = vsel %vm3433, %v6001, %v5394
      %v6050 = vsel %vm3433, %v6002, %v5396
      %v6051 = vsel %vm3433, %v6003, %v5398
      %v6052 = vsel %vm3433, %v6004, %v5400
      %v6053 = vsel %vm3433, %v6005, %v5402
      %v6054 = vsel %vm3433, %v6006, %v5404
      %v6055 = vsel %vm3433, %v6007, %v5406
      %v6056 = vsel %vm3433, %v6008, %v5408
      %v6057 = vsel %vm3433, %v6009, %v5410
      %v6058 = vsel %vm3433, %v6010, %v5412
      %v6059 = vsel %vm3433, %v6011, %v5414
      %v6060 = vsel %vm3433, %v6012, %v5416
      %v6061 = vsel %vm3433, %v6013, %v5418
      %v6062 = vsel %vm3433, %v6014, %v5420
      %v6063 = vsel %vm3433, %v6015, %v5422
      %v6064 = vsel %vm3433, %v6016, %v5424
      %v6065 = vsel %vm3433, %v6017, %v5426
      %v6066 = vsel %vm3433, %v6018, %v5428
      %v6067 = vsel %vm3433, %v6019, %v5430
      %v6068 = vsel %vm3433, %v6020, %v5432
      %v6069 = vsel %vm3433, %v6021, %v5434
      %v6070 = vsel %vm3433, %v6022, %v5436
      %v6071 = vsel %vm3433, %v6023, %v5438
      %v6072 = vsel %vm3433, %v6024, %v5440
      %v6073 = vsel %vm3433, %v6025, %v5442
      %v6074 = vsel %vm3433, %v6026, %v5444
      %v6075 = vsel %vm3433, %v6027, %v5446
      %v6076 = vsel %vm3433, %v6028, %v5448
      %v6077 = vsel %vm3433, %v6029, %v5450
      %v6078 = vsel %vm3433, %v6030, %v5452
      %v6079 = vsel %vm3433, %v6031, %v5452
      %vm6080 = vcmask 457728
      %v6081 = vsel %vm6080, %v6032, %v5501
      %v6082 = vsel %vm6080, %v6033, %v5503
      %v6083 = vsel %vm6080, %v6034, %v5505
      %v6084 = vsel %vm6080, %v6035, %v5507
      %v6085 = vsel %vm6080, %v6036, %v5509
      %v6086 = vsel %vm6080, %v6037, %v5511
      %v6087 = vsel %vm6080, %v6038, %v5513
      %v6088 = vsel %vm6080, %v6039, %v5515
      %v6089 = vsel %vm6080, %v6040, %v5517
      %v6090 = vsel %vm6080, %v6041, %v5519
      %v6091 = vsel %vm6080, %v6042, %v5521
      %v6092 = vsel %vm6080, %v6043, %v5523
      %v6093 = vsel %vm6080, %v6044, %v5525
      %v6094 = vsel %vm6080, %v6045, %v5527
      %v6095 = vsel %vm6080, %v6046, %v5529
      %v6096 = vsel %vm6080, %v6047, %v5531
      %v6097 = vsel %vm6080, %v6048, %v5533
      %v6098 = vsel %vm6080, %v6049, %v5535
      %v6099 = vsel %vm6080, %v6050, %v5537
      %v6100 = vsel %vm6080, %v6051, %v5539
      %v6101 = vsel %vm6080, %v6052, %v5541
      %v6102 = vsel %vm6080, %v6053, %v5543
      %v6103 = vsel %vm6080, %v6054, %v5545
      %v6104 = vsel %vm6080, %v6055, %v5547
      %v6105 = vsel %vm6080, %v6056, %v5549
      %v6106 = vsel %vm6080, %v6057, %v5551
      %v6107 = vsel %vm6080, %v6058, %v5553
      %v6108 = vsel %vm6080, %v6059, %v5555
      %v6109 = vsel %vm6080, %v6060, %v5557
      %v6110 = vsel %vm6080, %v6061, %v5559
      %v6111 = vsel %vm6080, %v6062, %v5561
      %v6112 = vsel %vm6080, %v6063, %v5563
      %v6113 = vsel %vm6080, %v6064, %v5565
      %v6114 = vsel %vm6080, %v6065, %v5567
      %v6115 = vsel %vm6080, %v6066, %v5569
      %v6116 = vsel %vm6080, %v6067, %v5571
      %v6117 = vsel %vm6080, %v6068, %v5573
      %v6118 = vsel %vm6080, %v6069, %v5575
      %v6119 = vsel %vm6080, %v6070, %v5577
      %v6120 = vsel %vm6080, %v6071, %v5579
      %v6121 = vsel %vm6080, %v6072, %v5581
      %v6122 = vsel %vm6080, %v6073, %v5583
      %v6123 = vsel %vm6080, %v6074, %v5585
      %v6124 = vsel %vm6080, %v6075, %v5587
      %v6125 = vsel %vm6080, %v6076, %v5589
      %v6126 = vsel %vm6080, %v6077, %v5591
      %v6127 = vsel %vm6080, %v6078, %v5593
      %v6128 = vsel %vm6080, %v6079, %v5595
      %vm6129 = vcmask 523264
      %v6130 = vsel %vm6129, %v6081, %v5645
      %v6131 = vsel %vm6129, %v6082, %v5647
      %v6132 = vsel %vm6129, %v6083, %v5649
      %v6133 = vsel %vm6129, %v6084, %v5651
      %v6134 = vsel %vm6129, %v6085, %v5653
      %v6135 = vsel %vm6129, %v6086, %v5655
      %v6136 = vsel %vm6129, %v6087, %v5657
      %v6137 = vsel %vm6129, %v6088, %v5659
      %v6138 = vsel %vm6129, %v6089, %v5661
      %v6139 = vsel %vm6129, %v6090, %v5663
      %v6140 = vsel %vm6129, %v6091, %v5665
      %v6141 = vsel %vm6129, %v6092, %v5667
      %v6142 = vsel %vm6129, %v6093, %v5669
      %v6143 = vsel %vm6129, %v6094, %v5671
      %v6144 = vsel %vm6129, %v6095, %v5673
      %v6145 = vsel %vm6129, %v6096, %v5675
      %v6146 = vsel %vm6129, %v6097, %v5677
      %v6147 = vsel %vm6129, %v6098, %v5679
      %v6148 = vsel %vm6129, %v6099, %v5681
      %v6149 = vsel %vm6129, %v6100, %v5683
      %v6150 = vsel %vm6129, %v6101, %v5685
      %v6151 = vsel %vm6129, %v6102, %v5687
      %v6152 = vsel %vm6129, %v6103, %v5689
      %v6153 = vsel %vm6129, %v6104, %v5691
      %v6154 = vsel %vm6129, %v6105, %v5693
      %v6155 = vsel %vm6129, %v6106, %v5695
      %v6156 = vsel %vm6129, %v6107, %v5697
      %v6157 = vsel %vm6129, %v6108, %v5699
      %v6158 = vsel %vm6129, %v6109, %v5701
      %v6159 = vsel %vm6129, %v6110, %v5703
      %v6160 = vsel %vm6129, %v6111, %v5705
      %v6161 = vsel %vm6129, %v6112, %v5707
      %v6162 = vsel %vm6129, %v6113, %v5709
      %v6163 = vsel %vm6129, %v6114, %v5711
      %v6164 = vsel %vm6129, %v6115, %v5713
      %v6165 = vsel %vm6129, %v6116, %v5715
      %v6166 = vsel %vm6129, %v6117, %v5717
      %v6167 = vsel %vm6129, %v6118, %v5719
      %v6168 = vsel %vm6129, %v6119, %v5721
      %v6169 = vsel %vm6129, %v6120, %v5723
      %v6170 = vsel %vm6129, %v6121, %v5725
      %v6171 = vsel %vm6129, %v6122, %v5727
      %v6172 = vsel %vm6129, %v6123, %v5729
      %v6173 = vsel %vm6129, %v6124, %v5731
      %v6174 = vsel %vm6129, %v6125, %v5733
      %v6175 = vsel %vm6129, %v6126, %v5735
      %v6176 = vsel %vm6129, %v6127, %v5737
      %v6177 = vsel %vm6129, %v6128, %v5739
      %v6178 = vld [vmem:[%s6] sm:$0xf]
      %v6179 = vld [vmem:[%s6 + $0x4] sm:$0xf]
      %v6180 = vld [vmem:[%s6 + $0x8] sm:$0xf]
      %v6181 = vld [vmem:[%s6 + $0xc] sm:$0xf]
      %v6182 = vld [vmem:[%s6 + $0x10] sm:$0xf]
      %v6183 = vld [vmem:[%s6 + $0x14] sm:$0xf]
      %v6184 = vld [vmem:[%s6 + $0x18] sm:$0xf]
      %v6185 = vld [vmem:[%s6 + $0x1c] sm:$0xf]
      %v6186 = vld [vmem:[%s6 + $0x20] sm:$0xf]
      %v6187 = vpack.c.bf16 %v6131, %v6130
      %v6188 = vpack.c.bf16 %v6133, %v6132
      %v6189 = vpack.c.bf16 %v6135, %v6134
      %v6190 = vpack.c.bf16 %v6137, %v6136
      %v6191 = vpack.c.bf16 %v6139, %v6138
      %v6192 = vpack.c.bf16 %v6141, %v6140
      %v6193 = vpack.c.bf16 %v6143, %v6142
      %v6194 = vpack.c.bf16 %v6145, %v6144
      %v6195 = vpack.c.bf16 %v6147, %v6146
      %v6196 = vpack.c.bf16 %v6149, %v6148
      %v6197 = vpack.c.bf16 %v6151, %v6150
      %v6198 = vpack.c.bf16 %v6153, %v6152
      %v6199 = vpack.c.bf16 %v6155, %v6154
      %v6200 = vpack.c.bf16 %v6157, %v6156
      %v6201 = vpack.c.bf16 %v6159, %v6158
      %v6202 = vpack.c.bf16 %v6161, %v6160
      %v6203 = vpack.c.bf16 %v6163, %v6162
      %v6204 = vpack.c.bf16 %v6165, %v6164
      %v6205 = vpack.c.bf16 %v6167, %v6166
      %v6206 = vpack.c.bf16 %v6169, %v6168
      %v6207 = vpack.c.bf16 %v6171, %v6170
      %v6208 = vpack.c.bf16 %v6173, %v6172
      %v6209 = vpack.c.bf16 %v6175, %v6174
      %v6210 = vpack.c.bf16 %v6177, %v6176
      %v6211 = vld [vmem:[%s7] sm:$0x1]
      %v6213 = vlaneseq
      %v6214 = vshrl.u32 %v6213, 7
      %v6215 = vsub.s32 0, %v6214
      %v6216 = vrot.slane %v6211, %v6215
      %v6227 = vunpack.c.l.b16 %v6178
      %v6228 = vunpack.c.l.b16 %v6179
      %v6229 = vunpack.c.l.b16 %v6180
      %v6230 = vunpack.c.l.b16 %v6181
      %v6231 = vunpack.c.l.b16 %v6182
      %v6232 = vunpack.c.l.b16 %v6183
      %v6233 = vunpack.c.l.b16 %v6184
      %v6234 = vunpack.c.l.b16 %v6185
      %v6235 = vunpack.c.l.b16 %v6186
      %v6236 = vpack.c.b16 %v6228, %v6227
      %v6237 = vpack.c.b16 %v6230, %v6229
      %v6238 = vpack.c.b16 %v6232, %v6231
      %v6239 = vpack.c.b16 %v6234, %v6233
      %v6240 = vpack.c.b16 %v6235, %v6235
      %v6246 = vsel %vm3531, %v6187, 0
      %v6249 = vsel %vm3531, %v6188, 0
      %v6252 = vsel %vm3531, %v6189, 0
      %v6255 = vsel %vm3531, %v6190, 0
      %v6258 = vsel %vm3531, %v6191, 0
      %v6261 = vsel %vm3531, %v6192, 0
      %v6264 = vsel %vm3531, %v6193, 0
      %v6267 = vsel %vm3531, %v6194, 0
      %v6270 = vsel %vm3531, %v6195, 0
      %v6273 = vsel %vm3531, %v6196, 0
      %v6276 = vsel %vm3531, %v6197, 0
      %v6279 = vsel %vm3531, %v6198, 0
      %v6282 = vsel %vm3531, %v6199, 0
      %v6285 = vsel %vm3531, %v6200, 0
      %v6288 = vsel %vm3531, %v6201, 0
      %v6291 = vsel %vm3531, %v6202, 0
      %v6294 = vsel %vm3531, %v6203, 0
      %v6297 = vsel %vm3531, %v6204, 0
      %v6300 = vsel %vm3531, %v6205, 0
      %v6303 = vsel %vm3531, %v6206, 0
      %v6306 = vsel %vm3531, %v6207, 0
      %v6309 = vsel %vm3531, %v6208, 0
      %v6312 = vsel %vm3531, %v6209, 0
      %v6315 = vsel %vm3531, %v6210, 0
      %vm6317 = vcmask 1043456
      %v6319 = vsel %vm6317, %v6240, 0
      %6321 = vmatprep.subr.bf16.mxu0 0
      %6322 = vmatpush1.bf16.msra.mxu0 0
      %6323 = vmatprep.subr.bf16.mxu0 0
      %6324 = vmatpush1.bf16.msra.mxu0 0
      %6325 = vmatprep.subr.bf16.mxu0 0
      %6326 = vmatpush1.bf16.msra.mxu0 0
      %6327 = vmatprep.subr.bf16.mxu0 0
      %6328 = vmatpush1.bf16.msra.mxu0 %v6319
      %6329 = vmatprep.subr.bf16.mxu0 0
      %6330 = vmatpush1.bf16.msra.mxu0 %v6239
      %6331 = vmatprep.subr.bf16.mxu0 0
      %6332 = vmatpush1.bf16.msra.mxu0 %v6238
      %6333 = vmatprep.subr.bf16.mxu0 0
      %6334 = vmatpush1.bf16.msra.mxu0 %v6237
      %6335 = vmatprep.subr.bf16.mxu0 0
      %6336 = vmatpush1.bf16.msra.mxu0 %v6236
      %6337 = vmatprep.subr.bf16.mxu0 0
      %6338 = vmatpush2.bf16.msra.mxu0 0
      %6339 = vmatprep.subr.bf16.mxu0 0
      %6340 = vmatpush2.bf16.msra.mxu0 0
      %6341 = vmatprep.subr.bf16.mxu0 0
      %6342 = vmatpush2.bf16.msra.mxu0 0
      %6343 = vmatprep.subr.bf16.mxu0 0
      %6344 = vmatpush2.bf16.msra.mxu0 0
      %6345 = vmatprep.subr.bf16.mxu0 0
      %6346 = vmatpush2.bf16.msra.mxu0 0
      %6347 = vmatprep.subr.bf16.mxu0 0
      %6348 = vmatpush2.bf16.msra.mxu0 0
      %6349 = vmatprep.subr.bf16.mxu0 0
      %6350 = vmatpush2.bf16.msra.mxu0 0
      %6351 = vmatprep.subr.bf16.mxu0 0
      %6352 = vmatpush2.bf16.msra.mxu0 0
      %6353 = vmatprep.mubr.bf16.mxu0 0
      %6354 = vmatmul.mubr.bf16.gmra.mxu0 %v6246
      %v6355 = vpop.f32.mrf.mxu0
      %v6356 = vadd.f32 %v6216, %v6355
      %v6357 = vpop.f32.mrf.mxu0
      %v6358 = vpop.f32.mrf.mxu0
      %v6359 = vadd.f32 %v6216, %v6358
      %v6360 = vpop.f32.mrf.mxu0
      %6361 = vmatprep.mubr.bf16.mxu0 0
      %6362 = vmatmul.mubr.bf16.gmra.mxu0 %v6249
      %v6363 = vpop.f32.mrf.mxu0
      %v6364 = vadd.f32 %v6216, %v6363
      %v6365 = vpop.f32.mrf.mxu0
      %v6366 = vpop.f32.mrf.mxu0
      %v6367 = vadd.f32 %v6216, %v6366
      %v6368 = vpop.f32.mrf.mxu0
      %6369 = vmatprep.mubr.bf16.mxu0 0
      %6370 = vmatmul.mubr.bf16.gmra.mxu0 %v6252
      %v6371 = vpop.f32.mrf.mxu0
      %v6372 = vadd.f32 %v6216, %v6371
      %v6373 = vpop.f32.mrf.mxu0
      %v6374 = vpop.f32.mrf.mxu0
      %v6375 = vadd.f32 %v6216, %v6374
      %v6376 = vpop.f32.mrf.mxu0
      %6377 = vmatprep.mubr.bf16.mxu0 0
      %6378 = vmatmul.mubr.bf16.gmra.mxu0 %v6255
      %v6379 = vpop.f32.mrf.mxu0
      %v6380 = vadd.f32 %v6216, %v6379
      %v6381 = vpop.f32.mrf.mxu0
      %v6382 = vpop.f32.mrf.mxu0
      %v6383 = vadd.f32 %v6216, %v6382
      %v6384 = vpop.f32.mrf.mxu0
      %6385 = vmatprep.mubr.bf16.mxu0 0
      %6386 = vmatmul.mubr.bf16.gmra.mxu0 %v6258
      %v6387 = vpop.f32.mrf.mxu0
      %v6388 = vadd.f32 %v6216, %v6387
      %v6389 = vpop.f32.mrf.mxu0
      %v6390 = vpop.f32.mrf.mxu0
      %v6391 = vadd.f32 %v6216, %v6390
      %v6392 = vpop.f32.mrf.mxu0
      %6393 = vmatprep.mubr.bf16.mxu0 0
      %6394 = vmatmul.mubr.bf16.gmra.mxu0 %v6261
      %v6395 = vpop.f32.mrf.mxu0
      %v6396 = vadd.f32 %v6216, %v6395
      %v6397 = vpop.f32.mrf.mxu0
      %v6398 = vpop.f32.mrf.mxu0
      %v6399 = vadd.f32 %v6216, %v6398
      %v6400 = vpop.f32.mrf.mxu0
      %6401 = vmatprep.mubr.bf16.mxu0 0
      %6402 = vmatmul.mubr.bf16.gmra.mxu0 %v6264
      %v6403 = vpop.f32.mrf.mxu0
      %v6404 = vadd.f32 %v6216, %v6403
      %v6405 = vpop.f32.mrf.mxu0
      %v6406 = vpop.f32.mrf.mxu0
      %v6407 = vadd.f32 %v6216, %v6406
      %v6408 = vpop.f32.mrf.mxu0
      %6409 = vmatprep.mubr.bf16.mxu0 0
      %6410 = vmatmul.mubr.bf16.gmra.mxu0 %v6267
      %v6411 = vpop.f32.mrf.mxu0
      %v6412 = vadd.f32 %v6216, %v6411
      %v6413 = vpop.f32.mrf.mxu0
      %v6414 = vpop.f32.mrf.mxu0
      %v6415 = vadd.f32 %v6216, %v6414
      %v6416 = vpop.f32.mrf.mxu0
      %6417 = vmatprep.mubr.bf16.mxu0 0
      %6418 = vmatmul.mubr.bf16.gmra.mxu0 %v6270
      %v6419 = vpop.f32.mrf.mxu0
      %v6420 = vadd.f32 %v6216, %v6419
      %v6421 = vpop.f32.mrf.mxu0
      %v6422 = vpop.f32.mrf.mxu0
      %v6423 = vadd.f32 %v6216, %v6422
      %v6424 = vpop.f32.mrf.mxu0
      %6425 = vmatprep.mubr.bf16.mxu0 0
      %6426 = vmatmul.mubr.bf16.gmra.mxu0 %v6273
      %v6427 = vpop.f32.mrf.mxu0
      %v6428 = vadd.f32 %v6216, %v6427
      %v6429 = vpop.f32.mrf.mxu0
      %v6430 = vpop.f32.mrf.mxu0
      %v6431 = vadd.f32 %v6216, %v6430
      %v6432 = vpop.f32.mrf.mxu0
      %6433 = vmatprep.mubr.bf16.mxu0 0
      %6434 = vmatmul.mubr.bf16.gmra.mxu0 %v6276
      %v6435 = vpop.f32.mrf.mxu0
      %v6436 = vadd.f32 %v6216, %v6435
      %v6437 = vpop.f32.mrf.mxu0
      %v6438 = vpop.f32.mrf.mxu0
      %v6439 = vadd.f32 %v6216, %v6438
      %v6440 = vpop.f32.mrf.mxu0
      %6441 = vmatprep.mubr.bf16.mxu0 0
      %6442 = vmatmul.mubr.bf16.gmra.mxu0 %v6279
      %v6443 = vpop.f32.mrf.mxu0
      %v6444 = vadd.f32 %v6216, %v6443
      %v6445 = vpop.f32.mrf.mxu0
      %v6446 = vpop.f32.mrf.mxu0
      %v6447 = vadd.f32 %v6216, %v6446
      %v6448 = vpop.f32.mrf.mxu0
      %6449 = vmatprep.mubr.bf16.mxu0 0
      %6450 = vmatmul.mubr.bf16.gmra.mxu0 %v6282
      %v6451 = vpop.f32.mrf.mxu0
      %v6452 = vadd.f32 %v6216, %v6451
      %v6453 = vpop.f32.mrf.mxu0
      %v6454 = vpop.f32.mrf.mxu0
      %v6455 = vadd.f32 %v6216, %v6454
      %v6456 = vpop.f32.mrf.mxu0
      %6457 = vmatprep.mubr.bf16.mxu0 0
      %6458 = vmatmul.mubr.bf16.gmra.mxu0 %v6285
      %v6459 = vpop.f32.mrf.mxu0
      %v6460 = vadd.f32 %v6216, %v6459
      %v6461 = vpop.f32.mrf.mxu0
      %v6462 = vpop.f32.mrf.mxu0
      %v6463 = vadd.f32 %v6216, %v6462
      %v6464 = vpop.f32.mrf.mxu0
      %6465 = vmatprep.mubr.bf16.mxu0 0
      %6466 = vmatmul.mubr.bf16.gmra.mxu0 %v6288
      %v6467 = vpop.f32.mrf.mxu0
      %v6468 = vadd.f32 %v6216, %v6467
      %v6469 = vpop.f32.mrf.mxu0
      %v6470 = vpop.f32.mrf.mxu0
      %v6471 = vadd.f32 %v6216, %v6470
      %v6472 = vpop.f32.mrf.mxu0
      %6473 = vmatprep.mubr.bf16.mxu0 0
      %6474 = vmatmul.mubr.bf16.gmra.mxu0 %v6291
      %v6475 = vpop.f32.mrf.mxu0
      %v6476 = vadd.f32 %v6216, %v6475
      %v6477 = vpop.f32.mrf.mxu0
      %v6478 = vpop.f32.mrf.mxu0
      %v6479 = vadd.f32 %v6216, %v6478
      %v6480 = vpop.f32.mrf.mxu0
      %6481 = vmatprep.mubr.bf16.mxu0 0
      %6482 = vmatmul.mubr.bf16.gmra.mxu0 %v6294
      %v6483 = vpop.f32.mrf.mxu0
      %v6484 = vadd.f32 %v6216, %v6483
      %v6485 = vpop.f32.mrf.mxu0
      %v6486 = vpop.f32.mrf.mxu0
      %v6487 = vadd.f32 %v6216, %v6486
      %v6488 = vpop.f32.mrf.mxu0
      %6489 = vmatprep.mubr.bf16.mxu0 0
      %6490 = vmatmul.mubr.bf16.gmra.mxu0 %v6297
      %v6491 = vpop.f32.mrf.mxu0
      %v6492 = vadd.f32 %v6216, %v6491
      %v6493 = vpop.f32.mrf.mxu0
      %v6494 = vpop.f32.mrf.mxu0
      %v6495 = vadd.f32 %v6216, %v6494
      %v6496 = vpop.f32.mrf.mxu0
      %6497 = vmatprep.mubr.bf16.mxu0 0
      %6498 = vmatmul.mubr.bf16.gmra.mxu0 %v6300
      %v6499 = vpop.f32.mrf.mxu0
      %v6500 = vadd.f32 %v6216, %v6499
      %v6501 = vpop.f32.mrf.mxu0
      %v6502 = vpop.f32.mrf.mxu0
      %v6503 = vadd.f32 %v6216, %v6502
      %v6504 = vpop.f32.mrf.mxu0
      %6505 = vmatprep.mubr.bf16.mxu0 0
      %6506 = vmatmul.mubr.bf16.gmra.mxu0 %v6303
      %v6507 = vpop.f32.mrf.mxu0
      %v6508 = vadd.f32 %v6216, %v6507
      %v6509 = vpop.f32.mrf.mxu0
      %v6510 = vpop.f32.mrf.mxu0
      %v6511 = vadd.f32 %v6216, %v6510
      %v6512 = vpop.f32.mrf.mxu0
      %6513 = vmatprep.mubr.bf16.mxu0 0
      %6514 = vmatmul.mubr.bf16.gmra.mxu0 %v6306
      %v6515 = vpop.f32.mrf.mxu0
      %v6516 = vadd.f32 %v6216, %v6515
      %v6517 = vpop.f32.mrf.mxu0
      %v6518 = vpop.f32.mrf.mxu0
      %v6519 = vadd.f32 %v6216, %v6518
      %v6520 = vpop.f32.mrf.mxu0
      %6521 = vmatprep.mubr.bf16.mxu0 0
      %6522 = vmatmul.mubr.bf16.gmra.mxu0 %v6309
      %v6523 = vpop.f32.mrf.mxu0
      %v6524 = vadd.f32 %v6216, %v6523
      %v6525 = vpop.f32.mrf.mxu0
      %v6526 = vpop.f32.mrf.mxu0
      %v6527 = vadd.f32 %v6216, %v6526
      %v6528 = vpop.f32.mrf.mxu0
      %6529 = vmatprep.mubr.bf16.mxu0 0
      %6530 = vmatmul.mubr.bf16.gmra.mxu0 %v6312
      %v6531 = vpop.f32.mrf.mxu0
      %v6532 = vadd.f32 %v6216, %v6531
      %v6533 = vpop.f32.mrf.mxu0
      %v6534 = vpop.f32.mrf.mxu0
      %v6535 = vadd.f32 %v6216, %v6534
      %v6536 = vpop.f32.mrf.mxu0
      %6537 = vmatprep.mubr.bf16.mxu0 0
      %6538 = vmatmul.mubr.bf16.gmra.mxu0 %v6315
      %v6539 = vpop.f32.mrf.mxu0
      %v6540 = vadd.f32 %v6216, %v6539
      %v6541 = vpop.f32.mrf.mxu0
      %v6542 = vpop.f32.mrf.mxu0
      %v6543 = vadd.f32 %v6216, %v6542
      %v6544 = vpop.f32.mrf.mxu0
      %6545 = vdwg.mxu0
      %v6546 = vld [vmem:[%s8] sm:$0xf]
      %v6547 = vld [vmem:[%s8 + $0x4] sm:$0x3]
      %v6548 = vpack.c.bf16 %v785, %v784
      %v6549 = vpack.c.bf16 %v787, %v786
      %v6550 = vpack.c.bf16 %v789, %v788
      %v6551 = vpack.c.bf16 %v791, %v790
      %v6552 = vpack.c.bf16 %v793, %v792
      %v6553 = vpack.c.bf16 %v795, %v794
      %v6554 = vpack.c.bf16 %v797, %v796
      %v6555 = vpack.c.bf16 %v799, %v798
      %v6556 = vpack.c.bf16 %v801, %v800
      %v6557 = vpack.c.bf16 %v803, %v802
      %v6558 = vpack.c.bf16 %v805, %v804
      %v6559 = vpack.c.bf16 %v807, %v806
      %v6560 = vpack.c.bf16 %v809, %v808
      %v6561 = vpack.c.bf16 %v811, %v810
      %v6562 = vpack.c.bf16 %v813, %v812
      %v6563 = vpack.c.bf16 %v815, %v814
      %v6564 = vpack.c.bf16 %v817, %v816
      %v6565 = vpack.c.bf16 %v819, %v818
      %v6566 = vpack.c.bf16 %v821, %v820
      %v6567 = vpack.c.bf16 %v823, %v822
      %v6568 = vpack.c.bf16 %v825, %v824
      %v6569 = vpack.c.bf16 %v827, %v826
      %v6570 = vpack.c.bf16 %v829, %v828
      %v6571 = vpack.c.bf16 %v831, %v830
      %v6572 = vld [vmem:[%s9] sm:$0x1]
      %v6574 = vlaneseq
      %v6575 = vshrl.u32 %v6574, 7
      %v6576 = vsub.s32 0, %v6575
      %v6577 = vrot.slane %v6572, %v6576
      %v6581 = vunpack.c.l.b16 %v6546
      %v6582 = vunpack.c.l.b16 %v6547
      %v6583 = vpack.c.b16 %v6582, %v6581
      %v6585 = vsel %vm832, %v6548, 0
      %v6588 = vsel %vm832, %v6549, 0
      %v6591 = vsel %vm832, %v6550, 0
      %v6594 = vsel %vm832, %v6551, 0
      %v6597 = vsel %vm832, %v6552, 0
      %v6600 = vsel %vm832, %v6553, 0
      %v6603 = vsel %vm832, %v6554, 0
      %v6606 = vsel %vm832, %v6555, 0
      %v6609 = vsel %vm832, %v6556, 0
      %v6612 = vsel %vm832, %v6557, 0
      %v6615 = vsel %vm832, %v6558, 0
      %v6618 = vsel %vm832, %v6559, 0
      %v6621 = vsel %vm832, %v6560, 0
      %v6624 = vsel %vm832, %v6561, 0
      %v6627 = vsel %vm832, %v6562, 0
      %v6630 = vsel %vm832, %v6563, 0
      %v6633 = vsel %vm832, %v6564, 0
      %v6636 = vsel %vm832, %v6565, 0
      %v6639 = vsel %vm832, %v6566, 0
      %v6642 = vsel %vm832, %v6567, 0
      %v6645 = vsel %vm832, %v6568, 0
      %v6648 = vsel %vm832, %v6569, 0
      %v6651 = vsel %vm832, %v6570, 0
      %v6654 = vsel %vm832, %v6571, 0
      %v6657 = vsel %vm2154, %v6583, 0
      %6659 = vmatprep.subr.bf16.mxu0 0
      %6660 = vmatpush1.bf16.msra.mxu0 0
      %6661 = vmatprep.subr.bf16.mxu0 0
      %6662 = vmatpush1.bf16.msra.mxu0 0
      %6663 = vmatprep.subr.bf16.mxu0 0
      %6664 = vmatpush1.bf16.msra.mxu0 0
      %6665 = vmatprep.subr.bf16.mxu0 0
      %6666 = vmatpush1.bf16.msra.mxu0 0
      %6667 = vmatprep.subr.bf16.mxu0 0
      %6668 = vmatpush1.bf16.msra.mxu0 0
      %6669 = vmatprep.subr.bf16.mxu0 0
      %6670 = vmatpush1.bf16.msra.mxu0 0
      %6671 = vmatprep.subr.bf16.mxu0 0
      %6672 = vmatpush1.bf16.msra.mxu0 0
      %6673 = vmatprep.subr.bf16.mxu0 0
      %6674 = vmatpush1.bf16.msra.mxu0 %v6657
      %6675 = vmatprep.subr.bf16.mxu0 0
      %6676 = vmatpush2.bf16.msra.mxu0 0
      %6677 = vmatprep.subr.bf16.mxu0 0
      %6678 = vmatpush2.bf16.msra.mxu0 0
      %6679 = vmatprep.subr.bf16.mxu0 0
      %6680 = vmatpush2.bf16.msra.mxu0 0
      %6681 = vmatprep.subr.bf16.mxu0 0
      %6682 = vmatpush2.bf16.msra.mxu0 0
      %6683 = vmatprep.subr.bf16.mxu0 0
      %6684 = vmatpush2.bf16.msra.mxu0 0
      %6685 = vmatprep.subr.bf16.mxu0 0
      %6686 = vmatpush2.bf16.msra.mxu0 0
      %6687 = vmatprep.subr.bf16.mxu0 0
      %6688 = vmatpush2.bf16.msra.mxu0 0
      %6689 = vmatprep.subr.bf16.mxu0 0
      %6690 = vmatpush2.bf16.msra.mxu0 0
      %6691 = vmatprep.mubr.bf16.mxu0 0
      %6692 = vmatmul.mubr.bf16.gmra.mxu0 %v6585
      %v6693 = vpop.f32.mrf.mxu0
      %v6694 = vadd.f32 %v6577, %v6693
      %v6695 = vpop.f32.mrf.mxu0
      %v6696 = vpop.f32.mrf.mxu0
      %v6697 = vadd.f32 %v6577, %v6696
      %v6698 = vpop.f32.mrf.mxu0
      %6699 = vmatprep.mubr.bf16.mxu0 0
      %6700 = vmatmul.mubr.bf16.gmra.mxu0 %v6588
      %v6701 = vpop.f32.mrf.mxu0
      %v6702 = vadd.f32 %v6577, %v6701
      %v6703 = vpop.f32.mrf.mxu0
      %v6704 = vpop.f32.mrf.mxu0
      %v6705 = vadd.f32 %v6577, %v6704
      %v6706 = vpop.f32.mrf.mxu0
      %6707 = vmatprep.mubr.bf16.mxu0 0
      %6708 = vmatmul.mubr.bf16.gmra.mxu0 %v6591
      %v6709 = vpop.f32.mrf.mxu0
      %v6710 = vadd.f32 %v6577, %v6709
      %v6711 = vpop.f32.mrf.mxu0
      %v6712 = vpop.f32.mrf.mxu0
      %v6713 = vadd.f32 %v6577, %v6712
      %v6714 = vpop.f32.mrf.mxu0
      %6715 = vmatprep.mubr.bf16.mxu0 0
      %6716 = vmatmul.mubr.bf16.gmra.mxu0 %v6594
      %v6717 = vpop.f32.mrf.mxu0
      %v6718 = vadd.f32 %v6577, %v6717
      %v6719 = vpop.f32.mrf.mxu0
      %v6720 = vpop.f32.mrf.mxu0
      %v6721 = vadd.f32 %v6577, %v6720
      %v6722 = vpop.f32.mrf.mxu0
      %6723 = vmatprep.mubr.bf16.mxu0 0
      %6724 = vmatmul.mubr.bf16.gmra.mxu0 %v6597
      %v6725 = vpop.f32.mrf.mxu0
      %v6726 = vadd.f32 %v6577, %v6725
      %v6727 = vpop.f32.mrf.mxu0
      %v6728 = vpop.f32.mrf.mxu0
      %v6729 = vadd.f32 %v6577, %v6728
      %v6730 = vpop.f32.mrf.mxu0
      %6731 = vmatprep.mubr.bf16.mxu0 0
      %6732 = vmatmul.mubr.bf16.gmra.mxu0 %v6600
      %v6733 = vpop.f32.mrf.mxu0
      %v6734 = vadd.f32 %v6577, %v6733
      %v6735 = vpop.f32.mrf.mxu0
      %v6736 = vpop.f32.mrf.mxu0
      %v6737 = vadd.f32 %v6577, %v6736
      %v6738 = vpop.f32.mrf.mxu0
      %6739 = vmatprep.mubr.bf16.mxu0 0
      %6740 = vmatmul.mubr.bf16.gmra.mxu0 %v6603
      %v6741 = vpop.f32.mrf.mxu0
      %v6742 = vadd.f32 %v6577, %v6741
      %v6743 = vpop.f32.mrf.mxu0
      %v6744 = vpop.f32.mrf.mxu0
      %v6745 = vadd.f32 %v6577, %v6744
      %v6746 = vpop.f32.mrf.mxu0
      %6747 = vmatprep.mubr.bf16.mxu0 0
      %6748 = vmatmul.mubr.bf16.gmra.mxu0 %v6606
      %v6749 = vpop.f32.mrf.mxu0
      %v6750 = vadd.f32 %v6577, %v6749
      %v6751 = vpop.f32.mrf.mxu0
      %v6752 = vpop.f32.mrf.mxu0
      %v6753 = vadd.f32 %v6577, %v6752
      %v6754 = vpop.f32.mrf.mxu0
      %6755 = vmatprep.mubr.bf16.mxu0 0
      %6756 = vmatmul.mubr.bf16.gmra.mxu0 %v6609
      %v6757 = vpop.f32.mrf.mxu0
      %v6758 = vadd.f32 %v6577, %v6757
      %v6759 = vpop.f32.mrf.mxu0
      %v6760 = vpop.f32.mrf.mxu0
      %v6761 = vadd.f32 %v6577, %v6760
      %v6762 = vpop.f32.mrf.mxu0
      %6763 = vmatprep.mubr.bf16.mxu0 0
      %6764 = vmatmul.mubr.bf16.gmra.mxu0 %v6612
      %v6765 = vpop.f32.mrf.mxu0
      %v6766 = vadd.f32 %v6577, %v6765
      %v6767 = vpop.f32.mrf.mxu0
      %v6768 = vpop.f32.mrf.mxu0
      %v6769 = vadd.f32 %v6577, %v6768
      %v6770 = vpop.f32.mrf.mxu0
      %6771 = vmatprep.mubr.bf16.mxu0 0
      %6772 = vmatmul.mubr.bf16.gmra.mxu0 %v6615
      %v6773 = vpop.f32.mrf.mxu0
      %v6774 = vadd.f32 %v6577, %v6773
      %v6775 = vpop.f32.mrf.mxu0
      %v6776 = vpop.f32.mrf.mxu0
      %v6777 = vadd.f32 %v6577, %v6776
      %v6778 = vpop.f32.mrf.mxu0
      %6779 = vmatprep.mubr.bf16.mxu0 0
      %6780 = vmatmul.mubr.bf16.gmra.mxu0 %v6618
      %v6781 = vpop.f32.mrf.mxu0
      %v6782 = vadd.f32 %v6577, %v6781
      %v6783 = vpop.f32.mrf.mxu0
      %v6784 = vpop.f32.mrf.mxu0
      %v6785 = vadd.f32 %v6577, %v6784
      %v6786 = vpop.f32.mrf.mxu0
      %6787 = vmatprep.mubr.bf16.mxu0 0
      %6788 = vmatmul.mubr.bf16.gmra.mxu0 %v6621
      %v6789 = vpop.f32.mrf.mxu0
      %v6790 = vadd.f32 %v6577, %v6789
      %v6791 = vpop.f32.mrf.mxu0
      %v6792 = vpop.f32.mrf.mxu0
      %v6793 = vadd.f32 %v6577, %v6792
      %v6794 = vpop.f32.mrf.mxu0
      %6795 = vmatprep.mubr.bf16.mxu0 0
      %6796 = vmatmul.mubr.bf16.gmra.mxu0 %v6624
      %v6797 = vpop.f32.mrf.mxu0
      %v6798 = vadd.f32 %v6577, %v6797
      %v6799 = vpop.f32.mrf.mxu0
      %v6800 = vpop.f32.mrf.mxu0
      %v6801 = vadd.f32 %v6577, %v6800
      %v6802 = vpop.f32.mrf.mxu0
      %6803 = vmatprep.mubr.bf16.mxu0 0
      %6804 = vmatmul.mubr.bf16.gmra.mxu0 %v6627
      %v6805 = vpop.f32.mrf.mxu0
      %v6806 = vadd.f32 %v6577, %v6805
      %v6807 = vpop.f32.mrf.mxu0
      %v6808 = vpop.f32.mrf.mxu0
      %v6809 = vadd.f32 %v6577, %v6808
      %v6810 = vpop.f32.mrf.mxu0
      %6811 = vmatprep.mubr.bf16.mxu0 0
      %6812 = vmatmul.mubr.bf16.gmra.mxu0 %v6630
      %v6813 = vpop.f32.mrf.mxu0
      %v6814 = vadd.f32 %v6577, %v6813
      %v6815 = vpop.f32.mrf.mxu0
      %v6816 = vpop.f32.mrf.mxu0
      %v6817 = vadd.f32 %v6577, %v6816
      %v6818 = vpop.f32.mrf.mxu0
      %6819 = vmatprep.mubr.bf16.mxu0 0
      %6820 = vmatmul.mubr.bf16.gmra.mxu0 %v6633
      %v6821 = vpop.f32.mrf.mxu0
      %v6822 = vadd.f32 %v6577, %v6821
      %v6823 = vpop.f32.mrf.mxu0
      %v6824 = vpop.f32.mrf.mxu0
      %v6825 = vadd.f32 %v6577, %v6824
      %v6826 = vpop.f32.mrf.mxu0
      %6827 = vmatprep.mubr.bf16.mxu0 0
      %6828 = vmatmul.mubr.bf16.gmra.mxu0 %v6636
      %v6829 = vpop.f32.mrf.mxu0
      %v6830 = vadd.f32 %v6577, %v6829
      %v6831 = vpop.f32.mrf.mxu0
      %v6832 = vpop.f32.mrf.mxu0
      %v6833 = vadd.f32 %v6577, %v6832
      %v6834 = vpop.f32.mrf.mxu0
      %6835 = vmatprep.mubr.bf16.mxu0 0
      %6836 = vmatmul.mubr.bf16.gmra.mxu0 %v6639
      %v6837 = vpop.f32.mrf.mxu0
      %v6838 = vadd.f32 %v6577, %v6837
      %v6839 = vpop.f32.mrf.mxu0
      %v6840 = vpop.f32.mrf.mxu0
      %v6841 = vadd.f32 %v6577, %v6840
      %v6842 = vpop.f32.mrf.mxu0
      %6843 = vmatprep.mubr.bf16.mxu0 0
      %6844 = vmatmul.mubr.bf16.gmra.mxu0 %v6642
      %v6845 = vpop.f32.mrf.mxu0
      %v6846 = vadd.f32 %v6577, %v6845
      %v6847 = vpop.f32.mrf.mxu0
      %v6848 = vpop.f32.mrf.mxu0
      %v6849 = vadd.f32 %v6577, %v6848
      %v6850 = vpop.f32.mrf.mxu0
      %6851 = vmatprep.mubr.bf16.mxu0 0
      %6852 = vmatmul.mubr.bf16.gmra.mxu0 %v6645
      %v6853 = vpop.f32.mrf.mxu0
      %v6854 = vadd.f32 %v6577, %v6853
      %v6855 = vpop.f32.mrf.mxu0
      %v6856 = vpop.f32.mrf.mxu0
      %v6857 = vadd.f32 %v6577, %v6856
      %v6858 = vpop.f32.mrf.mxu0
      %6859 = vmatprep.mubr.bf16.mxu0 0
      %6860 = vmatmul.mubr.bf16.gmra.mxu0 %v6648
      %v6861 = vpop.f32.mrf.mxu0
      %v6862 = vadd.f32 %v6577, %v6861
      %v6863 = vpop.f32.mrf.mxu0
      %v6864 = vpop.f32.mrf.mxu0
      %v6865 = vadd.f32 %v6577, %v6864
      %v6866 = vpop.f32.mrf.mxu0
      %6867 = vmatprep.mubr.bf16.mxu0 0
      %6868 = vmatmul.mubr.bf16.gmra.mxu0 %v6651
      %v6869 = vpop.f32.mrf.mxu0
      %v6870 = vadd.f32 %v6577, %v6869
      %v6871 = vpop.f32.mrf.mxu0
      %v6872 = vpop.f32.mrf.mxu0
      %v6873 = vadd.f32 %v6577, %v6872
      %v6874 = vpop.f32.mrf.mxu0
      %6875 = vmatprep.mubr.bf16.mxu0 0
      %6876 = vmatmul.mubr.bf16.gmra.mxu0 %v6654
      %v6877 = vpop.f32.mrf.mxu0
      %v6878 = vadd.f32 %v6577, %v6877
      %v6879 = vpop.f32.mrf.mxu0
      %v6880 = vpop.f32.mrf.mxu0
      %v6881 = vadd.f32 %v6577, %v6880
      %v6882 = vpop.f32.mrf.mxu0
      %6883 = vdwg.mxu0
      %v6884 = vadd.f32 %v6694, %v6356
      %v6885 = vadd.f32 %v6697, %v6359
      %v6886 = vadd.f32 %v6702, %v6364
      %v6887 = vadd.f32 %v6705, %v6367
      %v6888 = vadd.f32 %v6710, %v6372
      %v6889 = vadd.f32 %v6713, %v6375
      %v6890 = vadd.f32 %v6718, %v6380
      %v6891 = vadd.f32 %v6721, %v6383
      %v6892 = vadd.f32 %v6726, %v6388
      %v6893 = vadd.f32 %v6729, %v6391
      %v6894 = vadd.f32 %v6734, %v6396
      %v6895 = vadd.f32 %v6737, %v6399
      %v6896 = vadd.f32 %v6742, %v6404
      %v6897 = vadd.f32 %v6745, %v6407
      %v6898 = vadd.f32 %v6750, %v6412
      %v6899 = vadd.f32 %v6753, %v6415
      %v6900 = vadd.f32 %v6758, %v6420
      %v6901 = vadd.f32 %v6761, %v6423
      %v6902 = vadd.f32 %v6766, %v6428
      %v6903 = vadd.f32 %v6769, %v6431
      %v6904 = vadd.f32 %v6774, %v6436
      %v6905 = vadd.f32 %v6777, %v6439
      %v6906 = vadd.f32 %v6782, %v6444
      %v6907 = vadd.f32 %v6785, %v6447
      %v6908 = vadd.f32 %v6790, %v6452
      %v6909 = vadd.f32 %v6793, %v6455
      %v6910 = vadd.f32 %v6798, %v6460
      %v6911 = vadd.f32 %v6801, %v6463
      %v6912 = vadd.f32 %v6806, %v6468
      %v6913 = vadd.f32 %v6809, %v6471
      %v6914 = vadd.f32 %v6814, %v6476
      %v6915 = vadd.f32 %v6817, %v6479
      %v6916 = vadd.f32 %v6822, %v6484
      %v6917 = vadd.f32 %v6825, %v6487
      %v6918 = vadd.f32 %v6830, %v6492
      %v6919 = vadd.f32 %v6833, %v6495
      %v6920 = vadd.f32 %v6838, %v6500
      %v6921 = vadd.f32 %v6841, %v6503
      %v6922 = vadd.f32 %v6846, %v6508
      %v6923 = vadd.f32 %v6849, %v6511
      %v6924 = vadd.f32 %v6854, %v6516
      %v6925 = vadd.f32 %v6857, %v6519
      %v6926 = vadd.f32 %v6862, %v6524
      %v6927 = vadd.f32 %v6865, %v6527
      %v6928 = vadd.f32 %v6870, %v6532
      %v6929 = vadd.f32 %v6873, %v6535
      %v6930 = vadd.f32 %v6878, %v6540
      %v6931 = vadd.f32 %v6881, %v6543
      %6932 = vxpose.xlu0.b32.start [1/16] %v6884, 128
      %6933 = vxpose.xlu0.b32.cont [2/16] %v6885, 128
      %6934 = vxpose.xlu0.b32.cont [3/16] %v6886, 128
      %6935 = vxpose.xlu0.b32.cont [4/16] %v6887, 128
      %6936 = vxpose.xlu0.b32.cont [5/16] %v6888, 128
      %6937 = vxpose.xlu0.b32.cont [6/16] %v6889, 128
      %6938 = vxpose.xlu0.b32.cont [7/16] %v6890, 128
      %6939 = vxpose.xlu0.b32.cont [8/16] %v6891, 128
      %6940 = vxpose.xlu0.b32.cont [9/16] %v6892, 128
      %6941 = vxpose.xlu0.b32.cont [10/16] %v6893, 128
      %6942 = vxpose.xlu0.b32.cont [11/16] %v6894, 128
      %6943 = vxpose.xlu0.b32.cont [12/16] %v6895, 128
      %6944 = vxpose.xlu0.b32.cont [13/16] %v6896, 128
      %6945 = vxpose.xlu0.b32.cont [14/16] %v6897, 128
      %6946 = vxpose.xlu0.b32.cont [15/16] %v6898, 128
      %6947 = vxpose.xlu0.b32.end [16/16] %v6899, 128
      %v6948 = vpop.trf.xlu0
      %v6949 = vpop.trf.xlu0
      %v6950 = vpop.trf.xlu0
      %v6951 = vpop.trf.xlu0
      %v6952 = vpop.trf.xlu0
      %v6953 = vpop.trf.xlu0
      %v6954 = vpop.trf.xlu0
      %v6955 = vpop.trf.xlu0
      %v6956 = vpop.trf.xlu0
      %v6957 = vpop.trf.xlu0
      %v6958 = vpop.trf.xlu0
      %v6959 = vpop.trf.xlu0
      %v6960 = vpop.trf.xlu0
      %v6961 = vpop.trf.xlu0
      %v6962 = vpop.trf.xlu0
      %v6963 = vpop.trf.xlu0
      %6964 = vxpose.xlu0.b32.start [1/16] %v6900, 128
      %6965 = vxpose.xlu0.b32.cont [2/16] %v6901, 128
      %6966 = vxpose.xlu0.b32.cont [3/16] %v6902, 128
      %6967 = vxpose.xlu0.b32.cont [4/16] %v6903, 128
      %6968 = vxpose.xlu0.b32.cont [5/16] %v6904, 128
      %6969 = vxpose.xlu0.b32.cont [6/16] %v6905, 128
      %6970 = vxpose.xlu0.b32.cont [7/16] %v6906, 128
      %6971 = vxpose.xlu0.b32.cont [8/16] %v6907, 128
      %6972 = vxpose.xlu0.b32.cont [9/16] %v6908, 128
      %6973 = vxpose.xlu0.b32.cont [10/16] %v6909, 128
      %6974 = vxpose.xlu0.b32.cont [11/16] %v6910, 128
      %6975 = vxpose.xlu0.b32.cont [12/16] %v6911, 128
      %6976 = vxpose.xlu0.b32.cont [13/16] %v6912, 128
      %6977 = vxpose.xlu0.b32.cont [14/16] %v6913, 128
      %6978 = vxpose.xlu0.b32.cont [15/16] %v6914, 128
      %6979 = vxpose.xlu0.b32.end [16/16] %v6915, 128
      %v6980 = vpop.trf.xlu0
      %v6981 = vpop.trf.xlu0
      %v6982 = vpop.trf.xlu0
      %v6983 = vpop.trf.xlu0
      %v6984 = vpop.trf.xlu0
      %v6985 = vpop.trf.xlu0
      %v6986 = vpop.trf.xlu0
      %v6987 = vpop.trf.xlu0
      %v6988 = vpop.trf.xlu0
      %v6989 = vpop.trf.xlu0
      %v6990 = vpop.trf.xlu0
      %v6991 = vpop.trf.xlu0
      %v6992 = vpop.trf.xlu0
      %v6993 = vpop.trf.xlu0
      %v6994 = vpop.trf.xlu0
      %v6995 = vpop.trf.xlu0
      %6996 = vxpose.xlu0.b32.start [1/16] %v6916, 128
      %6997 = vxpose.xlu0.b32.cont [2/16] %v6917, 128
      %6998 = vxpose.xlu0.b32.cont [3/16] %v6918, 128
      %6999 = vxpose.xlu0.b32.cont [4/16] %v6919, 128
      %7000 = vxpose.xlu0.b32.cont [5/16] %v6920, 128
      %7001 = vxpose.xlu0.b32.cont [6/16] %v6921, 128
      %7002 = vxpose.xlu0.b32.cont [7/16] %v6922, 128
      %7003 = vxpose.xlu0.b32.cont [8/16] %v6923, 128
      %7004 = vxpose.xlu0.b32.cont [9/16] %v6924, 128
      %7005 = vxpose.xlu0.b32.cont [10/16] %v6925, 128
      %7006 = vxpose.xlu0.b32.cont [11/16] %v6926, 128
      %7007 = vxpose.xlu0.b32.cont [12/16] %v6927, 128
      %7008 = vxpose.xlu0.b32.cont [13/16] %v6928, 128
      %7009 = vxpose.xlu0.b32.cont [14/16] %v6929, 128
      %7010 = vxpose.xlu0.b32.cont [15/16] %v6930, 128
      %7011 = vxpose.xlu0.b32.end [16/16] %v6931, 128
      %v7012 = vpop.trf.xlu0
      %v7013 = vpop.trf.xlu0
      %v7014 = vpop.trf.xlu0
      %v7015 = vpop.trf.xlu0
      %v7016 = vpop.trf.xlu0
      %v7017 = vpop.trf.xlu0
      %v7018 = vpop.trf.xlu0
      %v7019 = vpop.trf.xlu0
      %v7020 = vpop.trf.xlu0
      %v7021 = vpop.trf.xlu0
      %v7022 = vpop.trf.xlu0
      %v7023 = vpop.trf.xlu0
      %v7024 = vpop.trf.xlu0
      %v7025 = vpop.trf.xlu0
      %v7026 = vpop.trf.xlu0
      %v7027 = vpop.trf.xlu0
      %7028 = vst [vmem:[%s379] sm:$0xff] %v6948
      %7029 = vst [vmem:[%s379 + $0x8] sm:$0xff] %v6980
      %7030 = vst [vmem:[%s379 + $0x10] sm:$0xff] %v7012
      %p7031 = scmp.lt.s32.totalorder %s21, 1
      %s7032 = scalar_select %p7031, %s21, 1
      %s7033 = smul.addr %s7032, 3
      %s7034 = smul.addr %s7033, 8
      %s7035 = scalar_lea.vmem %s10, %s7034
      // Predicated region
      $region61: #{frame_decoder_forward.1} parent=59 // pred_check
        %p7036 = pneg %p259
      $region62: #{frame_decoder_forward.1} parent=59 // pred_check_branch
        %7038 = sbr.rel (%p7036) target = $region64
      $region63: #{frame_decoder_forward.1} parent=59 // pred_region
        _
      $region64: #{frame_decoder_forward.1} parent=59 // pred_fallthru
        _
    $region60: #{frame_decoder_forward.1} parent=5 // pred_fallthru
      _
    %p7039 = scmp.le.s32.totalorder 2, %s16
    // Predicated region
    $region65: #{frame_decoder_forward.1} parent=5 // pred_check
      %p7040 = pneg %p7039
    $region66: #{frame_decoder_forward.1} parent=5 // pred_check_branch
      %7042 = sbr.rel (%p7040) target = $region68
    $region67: #{frame_decoder_forward.1} parent=5 // pred_region
      %s7043 = ssub.s32 %s16, 2
      // Predicated region
      $region69: #{frame_decoder_forward.1} parent=67 // pred_check
        %p7044 = pneg %p265
      $region70: #{frame_decoder_forward.1} parent=67 // pred_check_branch
        %7046 = sbr.rel (%p7044) target = $region72
      $region71: #{frame_decoder_forward.1} parent=67 // pred_region
        %p7047 = scmp.lt.s32.totalorder %s22, 1
        %s7048 = scalar_select %p7047, %s22, 1
        %s7049 = smul.addr %s7048, 3
        %s7050 = smul.addr %s7049, 8
        %s7051 = scalar_lea.vmem %s10, %s7050
      $region72: #{frame_decoder_forward.1} parent=67 // pred_fallthru
        _
    $region68: #{frame_decoder_forward.1} parent=5 // pred_fallthru
      _
  $region6: #{frame_decoder_forward.1} parent=0 // loop_footer
    %s20 = sadd.s32 1, %s16
  $region7: #{frame_decoder_forward.1} parent=0 // loop_footer_branch
    %15 = sbr.rel target = $region3
  $region8: #{frame_decoder_forward.1} parent=0 // loop_exit
    _

</llo_original>
